<compile_context>
chip_gen: v7x
topology: tpu7x:2x2x1
jax: 0.10.0
libtpu: 0.0.40
codegen_flags: <defaults>
</compile_context>

<pallas_src>
import functools

import jax
import jax.numpy as jnp
from jax import lax
from jax.experimental import pallas as pl
from jax.experimental.pallas import tpu as pltpu


def _vq_kernel(x_ref, e_aug_ref, q_ref, ind_ref, stats_ref, *, chunk):
    """One (batch, core-split, pixel-tile) block.

    Channels-first layouts (dim on sublanes, pixels on lanes):
      x_ref     : (1, dim, TILE)          input pixels
      e_aug_ref : (dim+1, n_embed)        [embed ; -0.5*||e_j||^2] (grid const)
      q_ref     : (1, dim, TILE)          quantized pixels (lane-dense store)
      ind_ref   : (1, 1, TILE)            chosen code per pixel (lane-dense)
      stats_ref : (1, 1, dim+1, n_embed)  fused [esum ; cnt] accumulator
    """
    t = pl.program_id(2)

    # Zero the per-(batch, split) resident accumulator at the first pixel tile.
    @pl.when(t == 0)
    def _():
        stats_ref[...] = jnp.zeros_like(stats_ref)

    e_aug = e_aug_ref[...]                       # (dim+1, n_embed)
    dim = e_aug.shape[0] - 1
    n_embed = e_aug.shape[1]
    e = e_aug[:dim, :]                           # codebook (dim, n_embed)
    tile = x_ref.shape[2]
    n_chunks = tile // chunk
    dtype = x_ref.dtype

    # Hoisted out of the chunk loop (chunk-shape invariant).
    row = lax.broadcasted_iota(jnp.int32, (n_embed, chunk), 0)
    ones_row = jnp.ones((1, chunk), dtype)

    stats_acc = jnp.zeros((dim + 1, n_embed), jnp.float32)

    # Fully unrolled chunk loop with static, 128-aligned lane offsets: keeps
    # the (n_embed, chunk) intermediates small instead of (n_embed, TILE).
    for c in range(n_chunks):
        off = c * chunk
        x_c = x_ref[0, :, off:off + chunk]                      # (dim, chunk)
        # Extra "+1" channel folds the -0.5||e||^2 bias into the score matmul
        # and doubles as the ones-row for the fused count statistic.
        x_aug = jnp.concatenate([x_c, ones_row], axis=0)        # (dim+1, chunk)

        # neg_score[j, p] = e_j . x_p - 0.5*||e_j||^2 ; nearest code = argmax_j
        # (per-pixel ||x_p||^2 is constant along j, so it is dropped).
        neg_score = lax.dot_general(
            e_aug, x_aug, (((0,), (0,)), ((), ())),
            preferred_element_type=jnp.float32)                 # (n_embed, chunk)

        # argmax over the codebook (sublane) axis; first index wins on ties.
        max_s = jnp.max(neg_score, axis=0, keepdims=True)       # (1, chunk)
        masked = jnp.where(neg_score >= max_s, row, jnp.int32(n_embed))
        ind = jnp.min(masked, axis=0, keepdims=True)            # (1, chunk) int32
        onehot = (row == ind).astype(dtype)                     # (n_embed, chunk)

        # Codebook gather as a matmul; result is already channels-first.
        q_c = jnp.dot(e, onehot, preferred_element_type=jnp.float32)

        q_ref[0, :, off:off + chunk] = q_c.astype(q_ref.dtype)
        ind_ref[0, :, off:off + chunk] = ind

        # Fused statistics in one MXU pass sharing the onehot operand:
        # rows [:dim] = x @ onehot^T (esum), row dim = onehot.sum(pixels) (cnt).
        stats_acc = stats_acc + lax.dot_general(
            x_aug, onehot, (((1,), (1,)), ((), ())),
            preferred_element_type=jnp.float32)

    stats_ref[0, 0] += stats_acc


def _vq_pallas(x_flat, e_aug, *, tile_hw, chunk, core_split):
    """x_flat: (N, dim, HW) channels-first. Returns (q, ind, fused stats)."""
    N, dim, HW = x_flat.shape
    dimp1, n_embed = e_aug.shape
    assert dimp1 == dim + 1
    assert HW % tile_hw == 0
    assert tile_hw % chunk == 0

    num_tiles = HW // tile_hw
    S = core_split if (core_split > 1 and num_tiles >= core_split
                       and num_tiles % core_split == 0) else 1
    T = num_tiles // S

    grid = (N, S, T)
    kernel = functools.partial(_vq_kernel, chunk=chunk)

    out_shapes = (
        jax.ShapeDtypeStruct((N, dim, HW), x_flat.dtype),             # quantize
        jax.ShapeDtypeStruct((N, 1, HW), jnp.int32),                  # indices
        jax.ShapeDtypeStruct((N, S, dim + 1, n_embed), jnp.float32),  # [esum;cnt]
    )

    return pl.pallas_call(
        kernel,
        out_shape=out_shapes,
        grid_spec=pltpu.PrefetchScalarGridSpec(
            num_scalar_prefetch=0,
            grid=grid,
            in_specs=[
                pl.BlockSpec((1, dim, tile_hw), lambda n, s, t: (n, 0, s * T + t)),
                pl.BlockSpec((dim + 1, n_embed), lambda n, s, t: (0, 0)),
            ],
            out_specs=[
                pl.BlockSpec((1, dim, tile_hw), lambda n, s, t: (n, 0, s * T + t)),
                pl.BlockSpec((1, 1, tile_hw), lambda n, s, t: (n, 0, s * T + t)),
                pl.BlockSpec((1, 1, dim + 1, n_embed), lambda n, s, t: (n, s, 0, 0)),
            ],
        ),
        compiler_params=pltpu.CompilerParams(
            dimension_semantics=("parallel", "parallel", "arbitrary"),
            vmem_limit_bytes=32 * 1024 * 1024),
    )(x_flat, e_aug)


def _pick_tile_hw(hw, requested):
    """Largest multiple of 128 that divides hw and is <= requested (fallback: hw)."""
    t = min(requested, hw)
    t = (t // 128) * 128
    while t >= 128:
        if hw % t == 0:
            return t
        t -= 128
    return hw  # tiny / awkward spatial size: single full-extent block


def _pick_chunk(tile, requested):
    """Largest multiple of 128 dividing the tile and <= requested (fallback: tile)."""
    if tile % 128 != 0:
        return tile
    c = max(min((requested // 128) * 128, tile), 128)
    while c > 128 and tile % c != 0:
        c -= 128
    return c if tile % c == 0 else tile


@functools.partial(jax.jit, static_argnames=("eps", "training", "tile_hw",
                                             "chunk", "core_split"))
def quantize_ema_forward(x_nchw, embed, cluster_size, embed_avg, decay,
                         eps=1e-5, training=True, tile_hw=2048, chunk=256,
                         core_split=2):
    """Forward pass of QuantizeEMA.

    Returns (quantize_nchw, diff_nhwc, embed_ind, new_embed,
             new_cluster_size, new_embed_avg).
    Buffer updates are returned functionally instead of mutated in place.
    """
    N, C, H, W = x_nchw.shape
    dim, n_embed = embed.shape
    assert C == dim
    HW = H * W

    tile = _pick_tile_hw(HW, tile_hw)
    chk = _pick_chunk(tile, chunk)

    # Channels-first flatten is free (no transpose): (N, dim, H*W).
    x_flat = x_nchw.reshape(N, dim, HW)

    # Hoisted once: codebook augmented with the -0.5*||e_j||^2 bias row so the
    # distance bias rides inside the score matmul.
    bias_row = (-0.5 * jnp.sum(embed.astype(jnp.float32) ** 2, axis=0))[None, :]
    e_aug = jnp.concatenate([embed, bias_row.astype(embed.dtype)], axis=0)

    q_flat, ind_flat, stats_part = _vq_pallas(
        x_flat, e_aug, tile_hw=tile, chunk=chk, core_split=core_split)

    quantize_nchw = q_flat.reshape(N, dim, H, W)
    embed_ind = ind_flat.reshape(N, H, W)

    # Reduce the tiny per-(batch, core-split) fused statistics.
    stats = jnp.sum(stats_part, axis=(0, 1))       # (dim+1, n_embed)
    embed_sum = stats[:dim]                        # (dim, n_embed)
    onehot_sum = stats[dim]                        # (n_embed,)

    # Reference returns diff = quantize.detach() - input in NHWC layout.
    diff = jnp.transpose(quantize_nchw - x_nchw, (0, 2, 3, 1))
    # TODO(synk): straight-through estimator (input + stop_grad(q - input)) is a
    # gradient-only trick; the forward value of `quantize` is unchanged.

    if training:
        new_cluster_size = cluster_size * decay + onehot_sum * (1.0 - decay)
        new_embed_avg = embed_avg * decay + embed_sum * (1.0 - decay)
        n = jnp.sum(new_cluster_size)
        cs = (new_cluster_size + eps) / (n + n_embed * eps) * n
        new_embed = new_embed_avg / cs[None, :]
    else:
        new_cluster_size, new_embed_avg, new_embed = (
            cluster_size, embed_avg, embed)

    return (quantize_nchw, diff, embed_ind,
            new_embed, new_cluster_size, new_embed_avg)


if __name__ == "__main__":
    key = jax.random.PRNGKey(0)
    k_x, k_e = jax.random.split(key)

    # Module config: dim = channels, n_embed codebook entries, mu=0, sigma=1.
    dim, n_embed = 32, 128
    decay_scalar, eps = 0.99, 1e-5
    N, H, W = 2, 32, 32

    x = jax.random.normal(k_x, (N, dim, H, W), dtype=jnp.float32)       # NCHW
    embed = jax.random.normal(k_e, (dim, n_embed), dtype=jnp.float32)   # mu=0, sigma=1
    cluster_size = jnp.ones((n_embed,), jnp.float32)
    embed_avg = embed.copy()
    decay = jnp.ones((n_embed,), jnp.float32) * decay_scalar

    outs = quantize_ema_forward(x, embed, cluster_size, embed_avg, decay,
                                eps=eps, training=True, tile_hw=2048)
    outs = jax.block_until_ready(outs)
    quantize, diff, embed_ind, new_embed, new_cs, new_ea = outs

    # ---- pure-JAX reference checks (silent) --------------------------------
    x_nhwc = jnp.transpose(x, (0, 2, 3, 1))
    flat = x_nhwc.reshape(-1, dim)
    dist = (jnp.sum(flat ** 2, 1, keepdims=True) - 2.0 * flat @ embed
            + jnp.sum(embed ** 2, 0, keepdims=True))                    # (M, n_embed)
    ref_ind = jnp.argmin(dist, axis=1)
    kern_ind = embed_ind.reshape(-1)

    # (a) nearly all indices match the independent argmin (fp near-ties may flip)
    assert jnp.mean((kern_ind == ref_ind).astype(jnp.float32)) > 0.995
    # (b) the chosen code is distance-optimal up to fp tolerance
    chosen_d = jnp.take_along_axis(dist, kern_ind[:, None], axis=1)[:, 0]
    assert jnp.allclose(chosen_d, jnp.min(dist, axis=1), atol=1e-3, rtol=1e-4)
    # (c) quantize is exactly the codebook vector at the chosen index, NCHW layout
    ref_quant = jnp.transpose(embed.T[kern_ind].reshape(N, H, W, dim), (0, 3, 1, 2))
    assert quantize.shape == (N, dim, H, W)
    assert jnp.allclose(quantize, ref_quant, atol=1e-5, rtol=1e-5)
    # (d) diff is NHWC (quantize - input), as in the reference
    assert diff.shape == (N, H, W, dim)
    assert jnp.allclose(diff, jnp.transpose(ref_quant - x, (0, 2, 3, 1)),
                        atol=1e-5, rtol=1e-5)
    # (e) EMA statistics match the reference update built from the chosen indices
    onehot = jax.nn.one_hot(kern_ind, n_embed, dtype=jnp.float32)
    ref_cs = cluster_size * decay + jnp.sum(onehot, axis=0) * (1.0 - decay)
    ref_ea = embed_avg * decay + (flat.T @ onehot) * (1.0 - decay)
    nsum = jnp.sum(ref_cs)
    ref_embed = ref_ea / (((ref_cs + eps) / (nsum + n_embed * eps) * nsum)[None, :])
    assert jnp.allclose(new_cs, ref_cs, atol=1e-4, rtol=1e-4)
    assert jnp.allclose(new_ea, ref_ea, atol=1e-3, rtol=1e-4)
    assert jnp.allclose(new_embed, ref_embed, atol=1e-3, rtol=1e-4)

    print("KERNEL_OK")
</pallas_src>

<mosaic_0001>
module attributes {stable_mosaic.version = 11 : i64} {
  func.func @_vq_kernel(%arg0: i32, %arg1: i32, %arg2: i32, %arg3: memref<1x32x1024xf32, #tpu.memory_space<vmem>>, %arg4: memref<33x128xf32, #tpu.memory_space<vmem>>, %arg5: memref<1x32x1024xf32, #tpu.memory_space<vmem>>, %arg6: memref<1x1x1024xi32, #tpu.memory_space<vmem>>, %arg7: memref<1x1x33x128xf32, #tpu.memory_space<vmem>>) attributes {dimension_semantics = [#tpu.dimension_semantics<parallel>, #tpu.dimension_semantics<parallel>, #tpu.dimension_semantics<arbitrary>], iteration_bounds = array<i64: 2, 1, 1>, scalar_prefetch = 0 : i64, scratch_operands = 0 : i64, tpu.core_type = #tpu.core_type<tc>, window_params = [{transform_indices = @transform_0, window_bounds = array<i64: 1, 32, 1024>}, {pipeline_mode = #tpu.pipeline_mode<synchronous>, transform_indices = @transform_1, window_bounds = array<i64: 33, 128>}, {transform_indices = @transform_2, window_bounds = array<i64: 1, 32, 1024>}, {transform_indices = @transform_3, window_bounds = array<i64: 1, 1, 1024>}, {transform_indices = @transform_4, window_bounds = array<i64: 1, 1, 33, 128>}]} {
    %c0_i32 = arith.constant 0 : i32
    %0 = arith.cmpi eq, %arg2, %c0_i32 : i32
    %1 = arith.extui %0 : i1 to i32
    %c0_i32_0 = arith.constant 0 : i32
    %2 = arith.cmpi ne, %1, %c0_i32_0 : i32
    scf.if %2 {
      %cst_67 = arith.constant 0.000000e+00 : f32
      %114 = vector.broadcast %cst_67 : f32 to vector<1x1x33x128xf32>
      %c0_68 = arith.constant 0 : index
      %c0_69 = arith.constant 0 : index
      %c0_70 = arith.constant 0 : index
      %c0_71 = arith.constant 0 : index
      %115 = vector.load %arg7[%c0_68, %c0_69, %c0_70, %c0_71] : memref<1x1x33x128xf32, #tpu.memory_space<vmem>>, vector<1x1x33x128xf32>
      tpu.vector_store %arg7[%c0_68, %c0_69, %c0_70, %c0_71], %114 {strides = array<i32>} : memref<1x1x33x128xf32, #tpu.memory_space<vmem>>, vector<1x1x33x128xf32>,
    } else {
    }
    %c0 = arith.constant 0 : index
    %c0_1 = arith.constant 0 : index
    %3 = vector.load %arg4[%c0, %c0_1] : memref<33x128xf32, #tpu.memory_space<vmem>>, vector<33x128xf32>
    %4 = vector.extract_strided_slice %3 {offsets = [0, 0], sizes = [32, 128], strides = [1, 1]} : vector<33x128xf32> to vector<32x128xf32>
    %5 = tpu.iota {dimensions = array<i32: 0>} : vector<128x256xi32>
    %cst = arith.constant 1.000000e+00 : f32
    %6 = vector.broadcast %cst : f32 to vector<1x256xf32>
    %cst_2 = arith.constant 0.000000e+00 : f32
    %7 = vector.broadcast %cst_2 : f32 to vector<33x128xf32>
    %c0_3 = arith.constant 0 : index
    %c0_4 = arith.constant 0 : index
    %c0_5 = arith.constant 0 : index
    %8 = vector.load %arg3[%c0_3, %c0_4, %c0_5] : memref<1x32x1024xf32, #tpu.memory_space<vmem>>, vector<1x32x256xf32>
    %9 = vector.shape_cast %8 : vector<1x32x256xf32> to vector<32x256xf32>
    %10 = tpu.concatenate %9, %6 in 0 : vector<32x256xf32>, vector<1x256xf32> -> vector<33x256xf32>
    %cst_6 = arith.constant dense<0.000000e+00> : vector<128x256xf32>
    %11 = tpu.matmul %3, %10, %cst_6 {dimension_numbers = #tpu.dot_dimension_numbers<[0], [0], [1], [1], [0, 1, 1, 1], [], []>} : vector<33x128xf32>, vector<33x256xf32>, vector<128x256xf32> -> vector<128x256xf32>
    %cst_7 = arith.constant dense<0xFF800000> : vector<256xf32>
    %12 = vector.multi_reduction <maximumf>, %11, %cst_7 [0] : vector<128x256xf32> to vector<256xf32>
    %13 = vector.shape_cast %12 : vector<256xf32> to vector<1x256xf32>
    %14 = vector.broadcast %13 : vector<1x256xf32> to vector<128x256xf32>
    %15 = arith.cmpf oge, %11, %14 : vector<128x256xf32>
    %c128_i32 = arith.constant 128 : i32
    %16 = vector.broadcast %c128_i32 : i32 to vector<128x256xi32>
    %17 = arith.select %15, %5, %16 : vector<128x256xi1>, vector<128x256xi32>
    %cst_8 = arith.constant dense<2147483647> : vector<256xi32>
    %18 = vector.multi_reduction <minsi>, %17, %cst_8 [0] : vector<128x256xi32> to vector<256xi32>
    %19 = vector.shape_cast %18 : vector<256xi32> to vector<1x256xi32>
    %20 = vector.broadcast %19 : vector<1x256xi32> to vector<128x256xi32>
    %21 = arith.cmpi eq, %5, %20 : vector<128x256xi32>
    %22 = arith.extui %21 : vector<128x256xi1> to vector<128x256xi32>
    %23 = arith.sitofp %22 : vector<128x256xi32> to vector<128x256xf32>
    %cst_9 = arith.constant dense<0.000000e+00> : vector<32x256xf32>
    %24 = tpu.matmul %4, %23, %cst_9 {dimension_numbers = #tpu.dot_dimension_numbers<[1], [0], [0], [1], [0, 0, 1, 1], [], []>} : vector<32x128xf32>, vector<128x256xf32>, vector<32x256xf32> -> vector<32x256xf32>
    %c0_10 = arith.constant 0 : index
    %c0_11 = arith.constant 0 : index
    %c0_12 = arith.constant 0 : index
    %25 = vector.load %arg5[%c0_10, %c0_11, %c0_12] : memref<1x32x1024xf32, #tpu.memory_space<vmem>>, vector<1x32x256xf32>
    %26 = vector.shape_cast %25 : vector<1x32x256xf32> to vector<32x256xf32>
    %27 = vector.shape_cast %24 : vector<32x256xf32> to vector<1x32x256xf32>
    tpu.vector_store %arg5[%c0_10, %c0_11, %c0_12], %27 {strides = array<i32>} : memref<1x32x1024xf32, #tpu.memory_space<vmem>>, vector<1x32x256xf32>,
    %c0_13 = arith.constant 0 : index
    %c0_14 = arith.constant 0 : index
    %c0_15 = arith.constant 0 : index
    %28 = vector.load %arg6[%c0_13, %c0_14, %c0_15] : memref<1x1x1024xi32, #tpu.memory_space<vmem>>, vector<1x1x256xi32>
    %29 = vector.shape_cast %28 : vector<1x1x256xi32> to vector<1x256xi32>
    %30 = vector.shape_cast %19 : vector<1x256xi32> to vector<1x1x256xi32>
    tpu.vector_store %arg6[%c0_13, %c0_14, %c0_15], %30 {strides = array<i32>} : memref<1x1x1024xi32, #tpu.memory_space<vmem>>, vector<1x1x256xi32>,
    %cst_16 = arith.constant dense<0.000000e+00> : vector<33x128xf32>
    %31 = tpu.matmul %10, %23, %cst_16 {dimension_numbers = #tpu.dot_dimension_numbers<[1], [1], [0], [0], [0, 0, 1, 0], [], []>} : vector<33x256xf32>, vector<128x256xf32>, vector<33x128xf32> -> vector<33x128xf32>
    %32 = arith.addf %7, %31 : vector<33x128xf32>
    %c0_17 = arith.constant 0 : index
    %c0_18 = arith.constant 0 : index
    %c256 = arith.constant 256 : index
    %33 = vector.load %arg3[%c0_17, %c0_18, %c256] : memref<1x32x1024xf32, #tpu.memory_space<vmem>>, vector<1x32x256xf32>
    %34 = vector.shape_cast %33 : vector<1x32x256xf32> to vector<32x256xf32>
    %35 = tpu.concatenate %34, %6 in 0 : vector<32x256xf32>, vector<1x256xf32> -> vector<33x256xf32>
    %cst_19 = arith.constant dense<0.000000e+00> : vector<128x256xf32>
    %36 = tpu.matmul %3, %35, %cst_19 {dimension_numbers = #tpu.dot_dimension_numbers<[0], [0], [1], [1], [0, 1, 1, 1], [], []>} : vector<33x128xf32>, vector<33x256xf32>, vector<128x256xf32> -> vector<128x256xf32>
    %cst_20 = arith.constant dense<0xFF800000> : vector<256xf32>
    %37 = vector.multi_reduction <maximumf>, %36, %cst_20 [0] : vector<128x256xf32> to vector<256xf32>
    %38 = vector.shape_cast %37 : vector<256xf32> to vector<1x256xf32>
    %39 = vector.broadcast %38 : vector<1x256xf32> to vector<128x256xf32>
    %40 = arith.cmpf oge, %36, %39 : vector<128x256xf32>
    %c128_i32_21 = arith.constant 128 : i32
    %41 = vector.broadcast %c128_i32_21 : i32 to vector<128x256xi32>
    %42 = arith.select %40, %5, %41 : vector<128x256xi1>, vector<128x256xi32>
    %cst_22 = arith.constant dense<2147483647> : vector<256xi32>
    %43 = vector.multi_reduction <minsi>, %42, %cst_22 [0] : vector<128x256xi32> to vector<256xi32>
    %44 = vector.shape_cast %43 : vector<256xi32> to vector<1x256xi32>
    %45 = vector.broadcast %44 : vector<1x256xi32> to vector<128x256xi32>
    %46 = arith.cmpi eq, %5, %45 : vector<128x256xi32>
    %47 = arith.extui %46 : vector<128x256xi1> to vector<128x256xi32>
    %48 = arith.sitofp %47 : vector<128x256xi32> to vector<128x256xf32>
    %cst_23 = arith.constant dense<0.000000e+00> : vector<32x256xf32>
    %49 = tpu.matmul %4, %48, %cst_23 {dimension_numbers = #tpu.dot_dimension_numbers<[1], [0], [0], [1], [0, 0, 1, 1], [], []>} : vector<32x128xf32>, vector<128x256xf32>, vector<32x256xf32> -> vector<32x256xf32>
    %c0_24 = arith.constant 0 : index
    %c0_25 = arith.constant 0 : index
    %c256_26 = arith.constant 256 : index
    %50 = vector.load %arg5[%c0_24, %c0_25, %c256_26] : memref<1x32x1024xf32, #tpu.memory_space<vmem>>, vector<1x32x256xf32>
    %51 = vector.shape_cast %50 : vector<1x32x256xf32> to vector<32x256xf32>
    %52 = vector.shape_cast %49 : vector<32x256xf32> to vector<1x32x256xf32>
    tpu.vector_store %arg5[%c0_24, %c0_25, %c256_26], %52 {strides = array<i32>} : memref<1x32x1024xf32, #tpu.memory_space<vmem>>, vector<1x32x256xf32>,
    %c0_27 = arith.constant 0 : index
    %c0_28 = arith.constant 0 : index
    %c256_29 = arith.constant 256 : index
    %53 = vector.load %arg6[%c0_27, %c0_28, %c256_29] : memref<1x1x1024xi32, #tpu.memory_space<vmem>>, vector<1x1x256xi32>
    %54 = vector.shape_cast %53 : vector<1x1x256xi32> to vector<1x256xi32>
    %55 = vector.shape_cast %44 : vector<1x256xi32> to vector<1x1x256xi32>
    tpu.vector_store %arg6[%c0_27, %c0_28, %c256_29], %55 {strides = array<i32>} : memref<1x1x1024xi32, #tpu.memory_space<vmem>>, vector<1x1x256xi32>,
    %cst_30 = arith.constant dense<0.000000e+00> : vector<33x128xf32>
    %56 = tpu.matmul %35, %48, %cst_30 {dimension_numbers = #tpu.dot_dimension_numbers<[1], [1], [0], [0], [0, 0, 1, 0], [], []>} : vector<33x256xf32>, vector<128x256xf32>, vector<33x128xf32> -> vector<33x128xf32>
    %57 = arith.addf %32, %56 : vector<33x128xf32>
    %c0_31 = arith.constant 0 : index
    %c0_32 = arith.constant 0 : index
    %c512 = arith.constant 512 : index
    %58 = vector.load %arg3[%c0_31, %c0_32, %c512] : memref<1x32x1024xf32, #tpu.memory_space<vmem>>, vector<1x32x256xf32>
    %59 = vector.shape_cast %58 : vector<1x32x256xf32> to vector<32x256xf32>
    %60 = tpu.concatenate %59, %6 in 0 : vector<32x256xf32>, vector<1x256xf32> -> vector<33x256xf32>
    %cst_33 = arith.constant dense<0.000000e+00> : vector<128x256xf32>
    %61 = tpu.matmul %3, %60, %cst_33 {dimension_numbers = #tpu.dot_dimension_numbers<[0], [0], [1], [1], [0, 1, 1, 1], [], []>} : vector<33x128xf32>, vector<33x256xf32>, vector<128x256xf32> -> vector<128x256xf32>
    %cst_34 = arith.constant dense<0xFF800000> : vector<256xf32>
    %62 = vector.multi_reduction <maximumf>, %61, %cst_34 [0] : vector<128x256xf32> to vector<256xf32>
    %63 = vector.shape_cast %62 : vector<256xf32> to vector<1x256xf32>
    %64 = vector.broadcast %63 : vector<1x256xf32> to vector<128x256xf32>
    %65 = arith.cmpf oge, %61, %64 : vector<128x256xf32>
    %c128_i32_35 = arith.constant 128 : i32
    %66 = vector.broadcast %c128_i32_35 : i32 to vector<128x256xi32>
    %67 = arith.select %65, %5, %66 : vector<128x256xi1>, vector<128x256xi32>
    %cst_36 = arith.constant dense<2147483647> : vector<256xi32>
    %68 = vector.multi_reduction <minsi>, %67, %cst_36 [0] : vector<128x256xi32> to vector<256xi32>
    %69 = vector.shape_cast %68 : vector<256xi32> to vector<1x256xi32>
    %70 = vector.broadcast %69 : vector<1x256xi32> to vector<128x256xi32>
    %71 = arith.cmpi eq, %5, %70 : vector<128x256xi32>
    %72 = arith.extui %71 : vector<128x256xi1> to vector<128x256xi32>
    %73 = arith.sitofp %72 : vector<128x256xi32> to vector<128x256xf32>
    %cst_37 = arith.constant dense<0.000000e+00> : vector<32x256xf32>
    %74 = tpu.matmul %4, %73, %cst_37 {dimension_numbers = #tpu.dot_dimension_numbers<[1], [0], [0], [1], [0, 0, 1, 1], [], []>} : vector<32x128xf32>, vector<128x256xf32>, vector<32x256xf32> -> vector<32x256xf32>
    %c0_38 = arith.constant 0 : index
    %c0_39 = arith.constant 0 : index
    %c512_40 = arith.constant 512 : index
    %75 = vector.load %arg5[%c0_38, %c0_39, %c512_40] : memref<1x32x1024xf32, #tpu.memory_space<vmem>>, vector<1x32x256xf32>
    %76 = vector.shape_cast %75 : vector<1x32x256xf32> to vector<32x256xf32>
    %77 = vector.shape_cast %74 : vector<32x256xf32> to vector<1x32x256xf32>
    tpu.vector_store %arg5[%c0_38, %c0_39, %c512_40], %77 {strides = array<i32>} : memref<1x32x1024xf32, #tpu.memory_space<vmem>>, vector<1x32x256xf32>,
    %c0_41 = arith.constant 0 : index
    %c0_42 = arith.constant 0 : index
    %c512_43 = arith.constant 512 : index
    %78 = vector.load %arg6[%c0_41, %c0_42, %c512_43] : memref<1x1x1024xi32, #tpu.memory_space<vmem>>, vector<1x1x256xi32>
    %79 = vector.shape_cast %78 : vector<1x1x256xi32> to vector<1x256xi32>
    %80 = vector.shape_cast %69 : vector<1x256xi32> to vector<1x1x256xi32>
    tpu.vector_store %arg6[%c0_41, %c0_42, %c512_43], %80 {strides = array<i32>} : memref<1x1x1024xi32, #tpu.memory_space<vmem>>, vector<1x1x256xi32>,
    %cst_44 = arith.constant dense<0.000000e+00> : vector<33x128xf32>
    %81 = tpu.matmul %60, %73, %cst_44 {dimension_numbers = #tpu.dot_dimension_numbers<[1], [1], [0], [0], [0, 0, 1, 0], [], []>} : vector<33x256xf32>, vector<128x256xf32>, vector<33x128xf32> -> vector<33x128xf32>
    %82 = arith.addf %57, %81 : vector<33x128xf32>
    %c0_45 = arith.constant 0 : index
    %c0_46 = arith.constant 0 : index
    %c768 = arith.constant 768 : index
    %83 = vector.load %arg3[%c0_45, %c0_46, %c768] : memref<1x32x1024xf32, #tpu.memory_space<vmem>>, vector<1x32x256xf32>
    %84 = vector.shape_cast %83 : vector<1x32x256xf32> to vector<32x256xf32>
    %85 = tpu.concatenate %84, %6 in 0 : vector<32x256xf32>, vector<1x256xf32> -> vector<33x256xf32>
    %cst_47 = arith.constant dense<0.000000e+00> : vector<128x256xf32>
    %86 = tpu.matmul %3, %85, %cst_47 {dimension_numbers = #tpu.dot_dimension_numbers<[0], [0], [1], [1], [0, 1, 1, 1], [], []>} : vector<33x128xf32>, vector<33x256xf32>, vector<128x256xf32> -> vector<128x256xf32>
    %cst_48 = arith.constant dense<0xFF800000> : vector<256xf32>
    %87 = vector.multi_reduction <maximumf>, %86, %cst_48 [0] : vector<128x256xf32> to vector<256xf32>
    %88 = vector.shape_cast %87 : vector<256xf32> to vector<1x256xf32>
    %89 = vector.broadcast %88 : vector<1x256xf32> to vector<128x256xf32>
    %90 = arith.cmpf oge, %86, %89 : vector<128x256xf32>
    %c128_i32_49 = arith.constant 128 : i32
    %91 = vector.broadcast %c128_i32_49 : i32 to vector<128x256xi32>
    %92 = arith.select %90, %5, %91 : vector<128x256xi1>, vector<128x256xi32>
    %cst_50 = arith.constant dense<2147483647> : vector<256xi32>
    %93 = vector.multi_reduction <minsi>, %92, %cst_50 [0] : vector<128x256xi32> to vector<256xi32>
    %94 = vector.shape_cast %93 : vector<256xi32> to vector<1x256xi32>
    %95 = vector.broadcast %94 : vector<1x256xi32> to vector<128x256xi32>
    %96 = arith.cmpi eq, %5, %95 : vector<128x256xi32>
    %97 = arith.extui %96 : vector<128x256xi1> to vector<128x256xi32>
    %98 = arith.sitofp %97 : vector<128x256xi32> to vector<128x256xf32>
    %cst_51 = arith.constant dense<0.000000e+00> : vector<32x256xf32>
    %99 = tpu.matmul %4, %98, %cst_51 {dimension_numbers = #tpu.dot_dimension_numbers<[1], [0], [0], [1], [0, 0, 1, 1], [], []>} : vector<32x128xf32>, vector<128x256xf32>, vector<32x256xf32> -> vector<32x256xf32>
    %c0_52 = arith.constant 0 : index
    %c0_53 = arith.constant 0 : index
    %c768_54 = arith.constant 768 : index
    %100 = vector.load %arg5[%c0_52, %c0_53, %c768_54] : memref<1x32x1024xf32, #tpu.memory_space<vmem>>, vector<1x32x256xf32>
    %101 = vector.shape_cast %100 : vector<1x32x256xf32> to vector<32x256xf32>
    %102 = vector.shape_cast %99 : vector<32x256xf32> to vector<1x32x256xf32>
    tpu.vector_store %arg5[%c0_52, %c0_53, %c768_54], %102 {strides = array<i32>} : memref<1x32x1024xf32, #tpu.memory_space<vmem>>, vector<1x32x256xf32>,
    %c0_55 = arith.constant 0 : index
    %c0_56 = arith.constant 0 : index
    %c768_57 = arith.constant 768 : index
    %103 = vector.load %arg6[%c0_55, %c0_56, %c768_57] : memref<1x1x1024xi32, #tpu.memory_space<vmem>>, vector<1x1x256xi32>
    %104 = vector.shape_cast %103 : vector<1x1x256xi32> to vector<1x256xi32>
    %105 = vector.shape_cast %94 : vector<1x256xi32> to vector<1x1x256xi32>
    tpu.vector_store %arg6[%c0_55, %c0_56, %c768_57], %105 {strides = array<i32>} : memref<1x1x1024xi32, #tpu.memory_space<vmem>>, vector<1x1x256xi32>,
    %cst_58 = arith.constant dense<0.000000e+00> : vector<33x128xf32>
    %106 = tpu.matmul %85, %98, %cst_58 {dimension_numbers = #tpu.dot_dimension_numbers<[1], [1], [0], [0], [0, 0, 1, 0], [], []>} : vector<33x256xf32>, vector<128x256xf32>, vector<33x128xf32> -> vector<33x128xf32>
    %107 = arith.addf %82, %106 : vector<33x128xf32>
    %c0_59 = arith.constant 0 : index
    %c0_60 = arith.constant 0 : index
    %c0_61 = arith.constant 0 : index
    %c0_62 = arith.constant 0 : index
    %108 = vector.load %arg7[%c0_59, %c0_60, %c0_61, %c0_62] : memref<1x1x33x128xf32, #tpu.memory_space<vmem>>, vector<1x1x33x128xf32>
    %109 = vector.shape_cast %108 : vector<1x1x33x128xf32> to vector<33x128xf32>
    %110 = arith.addf %109, %107 : vector<33x128xf32>
    %c0_63 = arith.constant 0 : index
    %c0_64 = arith.constant 0 : index
    %c0_65 = arith.constant 0 : index
    %c0_66 = arith.constant 0 : index
    %111 = vector.load %arg7[%c0_63, %c0_64, %c0_65, %c0_66] : memref<1x1x33x128xf32, #tpu.memory_space<vmem>>, vector<1x1x33x128xf32>
    %112 = vector.shape_cast %111 : vector<1x1x33x128xf32> to vector<33x128xf32>
    %113 = vector.shape_cast %110 : vector<33x128xf32> to vector<1x1x33x128xf32>
    tpu.vector_store %arg7[%c0_63, %c0_64, %c0_65, %c0_66], %113 {strides = array<i32>} : memref<1x1x33x128xf32, #tpu.memory_space<vmem>>, vector<1x1x33x128xf32>,
    return
  }
  func.func @transform_0(%arg0: i32, %arg1: i32, %arg2: i32) -> (i32, i32, i32) {
    %c1_i32 = arith.constant 1 : i32
    %0 = arith.muli %arg1, %c1_i32 : i32
    %1 = arith.addi %0, %arg2 : i32
    %c0_i32 = arith.constant 0 : i32
    %c0_i32_0 = arith.constant 0 : i32
    return %arg0, %c0_i32, %1 : i32, i32, i32
  }
  func.func @transform_1(%arg0: i32, %arg1: i32, %arg2: i32) -> (i32, i32) {
    %c0_i32 = arith.constant 0 : i32
    %c0_i32_0 = arith.constant 0 : i32
    %c0_i32_1 = arith.constant 0 : i32
    return %c0_i32, %c0_i32_0 : i32, i32
  }
  func.func @transform_2(%arg0: i32, %arg1: i32, %arg2: i32) -> (i32, i32, i32) {
    %c1_i32 = arith.constant 1 : i32
    %0 = arith.muli %arg1, %c1_i32 : i32
    %1 = arith.addi %0, %arg2 : i32
    %c0_i32 = arith.constant 0 : i32
    %c0_i32_0 = arith.constant 0 : i32
    return %arg0, %c0_i32, %1 : i32, i32, i32
  }
  func.func @transform_3(%arg0: i32, %arg1: i32, %arg2: i32) -> (i32, i32, i32) {
    %c1_i32 = arith.constant 1 : i32
    %0 = arith.muli %arg1, %c1_i32 : i32
    %1 = arith.addi %0, %arg2 : i32
    %c0_i32 = arith.constant 0 : i32
    %c0_i32_0 = arith.constant 0 : i32
    return %arg0, %c0_i32, %1 : i32, i32, i32
  }
  func.func @transform_4(%arg0: i32, %arg1: i32, %arg2: i32) -> (i32, i32, i32, i32) {
    %c0_i32 = arith.constant 0 : i32
    %c0_i32_0 = arith.constant 0 : i32
    %c0_i32_1 = arith.constant 0 : i32
    return %arg0, %arg1, %c0_i32, %c0_i32_0 : i32, i32, i32, i32
  }
}

</mosaic_0001>

<llo_original>
// kernel: quantize_ema_forward.1
$region0: #{quantize_ema_forward.1}
  #allocation0 [shape = 'u32[]', space=smem, size = 0x4, offset = 0x4, fixed_abs, tag = 'smem constant byte address 0x4 - core index']
  #allocation1 [shape = 'u32[144,128]{1,0:T(1,128)}', space=vmem, size = 0x12000, scoped, tag = 'internal scratch']
  %s0 = inlined_call_operand.vmem [shape: f32[2,32,1024], index: 0, kind: input, shape index: {}]
  %s1 = inlined_call_operand.vmem [shape: f32[33,128], index: 1, kind: input, shape index: {}]
  %s2 = inlined_call_operand.vmem [shape: f32[2,32,1024], index: 2, kind: output, shape index: {0}]
  %s3 = inlined_call_operand.vmem [shape: s32[2,1,1024], index: 3, kind: output, shape index: {1}]
  %s4 = inlined_call_operand.vmem [shape: f32[2,1,33,128], index: 4, kind: output, shape index: {2}]
  %5 = xla_tuple %s2, %s3, %s4
  %s6 = sld [smem:[#allocation0]]
  $region61: #{quantize_ema_forward.1} parent=0
    _
  %s8 = ssub.s32 1, %s6
  %s9 = scalar_select 0, %s8, %s6
  loop: start=0, step=1, limit=4
  $region2: #{quantize_ema_forward.1} parent=0 // loop_pre_header
    _
  $region3: #{quantize_ema_forward.1} parent=0 // loop_header
    %s11 = sphi 0, %s15
    %p12 = scmp.ge.s32.totalorder %s11, 4
    %s18 = sphi 0, %s37
    %s19 = sphi 0, %s33
    %s20 = sphi 0, %s29
    %s21 = sphi 0, %s18
    %s22 = sphi 0, %s19
    %s23 = sphi 0, %s20
    %s24 = sphi 0, %s21
    %s25 = sphi 0, %s22
    %s26 = sphi 0, %s23
    %s44 = sphi 0, %s46
    %s47 = sphi 0, %s44
    %s48 = sphi 0, %s47
    %s64 = sphi 0, %s48
    %s68 = sphi 0, %s68
    %s70 = sphi 0, %s68
    %s71 = sphi 0, %s70
    %s85 = sphi 0, %s71
    %s95 = sphi 0, %s97
    %s98 = sphi 0, %s95
    %s99 = sphi 0, %s98
    %s115 = sphi 0, %s99
    %s125 = sphi 0, %s127
    %s128 = sphi 0, %s125
    %s129 = sphi 0, %s128
    %s145 = sphi 0, %s129
    %s153 = sphi 0, %s155
    %s156 = sphi 0, %s153
    %s157 = sphi 0, %s156
    %s173 = sphi 0, %s157
  $region4: #{quantize_ema_forward.1} parent=0 // loop_header_branch
    %14 = sbr.rel (%p12) target = $region8
  $region5: #{quantize_ema_forward.1} parent=0 // loop_body
    %s16 = ssub.s32 %s11, 1
    %s17 = ssub.s32 %s11, 2
    %s27 = sadd.s32 1, %s20
    %p28 = scmp.ge.s32.totalorder %s27, 1
    %s29 = scalar_select %p28, 0, %s27
    %s30 = sadd.s32 1, %s19
    %s31 = scalar_select %p28, %s30, %s19
    %p32 = scmp.ge.s32.totalorder %s31, 1
    %s33 = scalar_select %p32, 0, %s31
    %s34 = sadd.s32 1, %s18
    %s35 = scalar_select %p32, %s34, %s18
    %p36 = scmp.ge.s32.totalorder %s35, 2
    %s37 = scalar_select %p36, 0, %s35
    %s38 = sadd.s32 %s19, %s20
    %s39 = sadd.s32 %s33, %s29
    %s40 = ssub.s32 %s18, %s37
    %s41 = ssub.s32 %s38, %s39
    %s42 = sor.u32 %s40, %s41
    %p43 = scmp.eq.s32.totalorder %s42, 0
    %s45 = sadd.s32 %s44, 1
    %s46 = scalar_select %p43, %s44, %s45
    %p49 = pneg %p43
    %p50 = scmp.eq.s32.totalorder %s11, 1
    %p51 = por %p49, %p50
    %p52 = scmp.ne.s32.totalorder %s44, %s47
    %p53 = scmp.eq.s32.totalorder %s11, 0
    %p54 = por %p52, %p53
    %p55 = scmp.ne.s32.totalorder %s44, %s47
    %p56 = scmp.eq.s32.totalorder %s16, 1
    %p57 = por %p55, %p56
    %p58 = scmp.ne.s32.totalorder %s47, %s48
    %p59 = scmp.eq.s32.totalorder %s16, 0
    %p60 = por %p58, %p59
    %p61 = scmp.ne.s32.totalorder %s47, %s48
    %p62 = scmp.eq.s32.totalorder %s17, 1
    %p63 = por %p61, %p62
    %p65 = scmp.ne.s32.totalorder %s48, %s64
    %p66 = scmp.eq.s32.totalorder %s17, 0
    %p67 = por %p65, %p66
    %s69 = sadd.s32 %s68, 1
    %p72 = scmp.eq.s32.totalorder %s11, 1
    %p73 = scmp.ne.s32.totalorder %s68, %s70
    %p74 = scmp.eq.s32.totalorder %s11, 0
    %p75 = por %p73, %p74
    %p76 = scmp.ne.s32.totalorder %s68, %s70
    %p77 = scmp.eq.s32.totalorder %s16, 1
    %p78 = por %p76, %p77
    %p79 = scmp.ne.s32.totalorder %s70, %s71
    %p80 = scmp.eq.s32.totalorder %s16, 0
    %p81 = por %p79, %p80
    %p82 = scmp.ne.s32.totalorder %s70, %s71
    %p83 = scmp.eq.s32.totalorder %s17, 1
    %p84 = por %p82, %p83
    %p86 = scmp.ne.s32.totalorder %s71, %s85
    %p87 = scmp.eq.s32.totalorder %s17, 0
    %p88 = por %p86, %p87
    %s89 = sadd.s32 %s19, %s20
    %s90 = sadd.s32 %s33, %s29
    %s91 = ssub.s32 %s18, %s37
    %s92 = ssub.s32 %s89, %s90
    %s93 = sor.u32 %s91, %s92
    %p94 = scmp.eq.s32.totalorder %s93, 0
    %s96 = sadd.s32 %s95, 1
    %s97 = scalar_select %p94, %s95, %s96
    %p100 = pneg %p94
    %p101 = scmp.eq.s32.totalorder %s11, 1
    %p102 = por %p100, %p101
    %p103 = scmp.ne.s32.totalorder %s95, %s98
    %p104 = scmp.eq.s32.totalorder %s11, 0
    %p105 = por %p103, %p104
    %p106 = scmp.ne.s32.totalorder %s95, %s98
    %p107 = scmp.eq.s32.totalorder %s16, 1
    %p108 = por %p106, %p107
    %p109 = scmp.ne.s32.totalorder %s98, %s99
    %p110 = scmp.eq.s32.totalorder %s16, 0
    %p111 = por %p109, %p110
    %p112 = scmp.ne.s32.totalorder %s98, %s99
    %p113 = scmp.eq.s32.totalorder %s17, 1
    %p114 = por %p112, %p113
    %p116 = scmp.ne.s32.totalorder %s99, %s115
    %p117 = scmp.eq.s32.totalorder %s17, 0
    %p118 = por %p116, %p117
    %s119 = sadd.s32 %s19, %s20
    %s120 = sadd.s32 %s33, %s29
    %s121 = ssub.s32 %s18, %s37
    %s122 = ssub.s32 %s119, %s120
    %s123 = sor.u32 %s121, %s122
    %p124 = scmp.eq.s32.totalorder %s123, 0
    %s126 = sadd.s32 %s125, 1
    %s127 = scalar_select %p124, %s125, %s126
    %p130 = pneg %p124
    %p131 = scmp.eq.s32.totalorder %s11, 1
    %p132 = por %p130, %p131
    %p133 = scmp.ne.s32.totalorder %s125, %s128
    %p134 = scmp.eq.s32.totalorder %s11, 0
    %p135 = por %p133, %p134
    %p136 = scmp.ne.s32.totalorder %s125, %s128
    %p137 = scmp.eq.s32.totalorder %s16, 1
    %p138 = por %p136, %p137
    %p139 = scmp.ne.s32.totalorder %s128, %s129
    %p140 = scmp.eq.s32.totalorder %s16, 0
    %p141 = por %p139, %p140
    %p142 = scmp.ne.s32.totalorder %s128, %s129
    %p143 = scmp.eq.s32.totalorder %s17, 1
    %p144 = por %p142, %p143
    %p146 = scmp.ne.s32.totalorder %s129, %s145
    %p147 = scmp.eq.s32.totalorder %s17, 0
    %p148 = por %p146, %p147
    %s149 = ssub.s32 %s18, %s37
    %s150 = ssub.s32 %s19, %s33
    %s151 = sor.u32 %s149, %s150
    %p152 = scmp.eq.s32.totalorder %s151, 0
    %s154 = sadd.s32 %s153, 1
    %s155 = scalar_select %p152, %s153, %s154
    %p158 = pneg %p152
    %p159 = scmp.eq.s32.totalorder %s11, 1
    %p160 = por %p158, %p159
    %p161 = scmp.ne.s32.totalorder %s153, %s156
    %p162 = scmp.eq.s32.totalorder %s11, 0
    %p163 = por %p161, %p162
    %p164 = scmp.ne.s32.totalorder %s153, %s156
    %p165 = scmp.eq.s32.totalorder %s16, 1
    %p166 = por %p164, %p165
    %p167 = scmp.ne.s32.totalorder %s156, %s157
    %p168 = scmp.eq.s32.totalorder %s16, 0
    %p169 = por %p167, %p168
    %p170 = scmp.ne.s32.totalorder %s156, %s157
    %p171 = scmp.eq.s32.totalorder %s17, 1
    %p172 = por %p170, %p171
    %p174 = scmp.ne.s32.totalorder %s157, %s173
    %p175 = scmp.eq.s32.totalorder %s17, 0
    %p176 = por %p174, %p175
    %p177 = scmp.le.s32.totalorder 1, %s11
    %p178 = scmp.lt.s32.totalorder %s11, 3
    %p179 = pnand %p177, %p178
    %p180 = pneg %p179
    // Predicated region
    $region9: #{quantize_ema_forward.1} parent=5 // pred_check
      _
    $region10: #{quantize_ema_forward.1} parent=5 // pred_check_branch
      %182 = sbr.rel (%p179) target = $region12
    $region11: #{quantize_ema_forward.1} parent=5 // pred_region
      %s183 = ssub.s32 %s11, 1
      // Predicated region
      $region13: #{quantize_ema_forward.1} parent=11 // pred_check
        %p184 = pneg %p81
      $region14: #{quantize_ema_forward.1} parent=11 // pred_check_branch
        %186 = sbr.rel (%p184) target = $region16
      $region15: #{quantize_ema_forward.1} parent=11 // pred_region
        _
      $region16: #{quantize_ema_forward.1} parent=11 // pred_fallthru
        _
    $region12: #{quantize_ema_forward.1} parent=5 // pred_fallthru
      _
    %p187 = scmp.lt.s32.totalorder %s11, 2
    // Predicated region
    $region17: #{quantize_ema_forward.1} parent=5 // pred_check
      %p188 = pneg %p187
    $region18: #{quantize_ema_forward.1} parent=5 // pred_check_branch
      %190 = sbr.rel (%p188) target = $region20
    $region19: #{quantize_ema_forward.1} parent=5 // pred_region
      // Predicated region
      $region21: #{quantize_ema_forward.1} parent=19 // pred_check
        %p191 = pneg %p54
      $region22: #{quantize_ema_forward.1} parent=19 // pred_check_branch
        %193 = sbr.rel (%p191) target = $region24
      $region23: #{quantize_ema_forward.1} parent=19 // pred_region
        %s194 = sadd.s32 %s19, %s20
        %s195 = smul.u32 8, %s194
        %p196 = scmp.lt.s32.totalorder %s18, 1
        %s197 = scalar_select %p196, %s18, 1
        %p198 = scmp.lt.s32.totalorder %s195, 7
        %s199 = scalar_select %p198, %s195, 7
        %s200 = smul.addr %s197, 32
        %s201 = sadd.s32 %s199, %s200
        %s202 = smul.addr %s201, 8
        %s203 = scalar_lea.vmem %s0, %s202
        %s204 = sadd.s32 %s19, %s20
        %s205 = smul.u32 8, %s204
      $region24: #{quantize_ema_forward.1} parent=19 // pred_fallthru
        _
    $region20: #{quantize_ema_forward.1} parent=5 // pred_fallthru
      _
    %p206 = scmp.le.s32.totalorder 1, %s11
    %p207 = scmp.lt.s32.totalorder %s11, 3
    %p208 = pnand %p206, %p207
    %p209 = pneg %p208
    // Predicated region
    $region25: #{quantize_ema_forward.1} parent=5 // pred_check
      _
    $region26: #{quantize_ema_forward.1} parent=5 // pred_check_branch
      %211 = sbr.rel (%p208) target = $region28
    $region27: #{quantize_ema_forward.1} parent=5 // pred_region
      %s212 = ssub.s32 %s11, 1
      %s213 = sadd.s32 %s22, %s23
      %s214 = smul.u32 8, %s213
      %p215 = scmp.lt.s32.totalorder %s21, 1
      %s216 = scalar_select %p215, %s21, 1
      %p217 = scmp.lt.s32.totalorder %s214, 7
      %s218 = scalar_select %p217, %s214, 7
      %s219 = smul.addr %s216, 32
      %s220 = sadd.s32 %s218, %s219
      %s221 = smul.addr %s220, 8
      %s222 = scalar_lea.vmem %s0, %s221
      %p223 = pneg %p60
      %p224 = pneg %p57
      %p225 = pneg %p81
      %p226 = pneg %p78
      %p227 = pneg %p111
      %p228 = pneg %p108
      %s229 = sadd.s32 %s22, %s23
      %s230 = smul.u32 8, %s229
      %p231 = scmp.lt.s32.totalorder %s21, 1
      %s232 = scalar_select %p231, %s21, 1
      %p233 = scmp.lt.s32.totalorder %s230, 7
      %s234 = scalar_select %p233, %s230, 7
      %s235 = smul.addr %s232, 32
      %s236 = sadd.s32 %s234, %s235
      %s237 = smul.addr %s236, 8
      %s238 = scalar_lea.vmem %s2, %s237
      %p239 = pneg %p141
      %p240 = pneg %p138
      %s241 = sadd.s32 %s22, %s23
      %s242 = smul.u32 8, %s241
      %p243 = scmp.lt.s32.totalorder %s21, 1
      %s244 = scalar_select %p243, %s21, 1
      %p245 = scmp.lt.s32.totalorder %s242, 7
      %s246 = scalar_select %p245, %s242, 7
      %s247 = smul.addr %s244, 8
      %s248 = sadd.s32 %s246, %s247
      %s249 = scalar_lea.vmem %s3, %s248
      %p250 = pneg %p169
      %p251 = pneg %p166
      %p252 = scmp.lt.s32.totalorder %s21, 1
      %s253 = scalar_select %p252, %s21, 1
      %p254 = scmp.lt.s32.totalorder %s22, 0
      %s255 = scalar_select %p254, %s22, 0
      %s256 = smul.addr %s255, 5
      %s257 = smul.addr %s253, 5
      %s258 = sadd.s32 %s256, %s257
      %s259 = smul.addr %s258, 8
      %s260 = scalar_lea.vmem %s4, %s259
      %s261 = sadd.s32 %s22, %s23
      %s262 = smul.u32 8, %s261
      %p263 = scmp.lt.s32.totalorder %s21, 1
      %s264 = scalar_select %p263, %s21, 1
      %p265 = scmp.lt.s32.totalorder %s262, 7
      %s266 = scalar_select %p265, %s262, 7
      %s267 = smul.addr %s264, 32
      %s268 = sadd.s32 %s266, %s267
      %s269 = smul.addr %s268, 8
      %s270 = scalar_lea.vmem %s0, %s269
      %s271 = sadd.s32 %s22, %s23
      %s272 = smul.u32 8, %s271
      %s273 = sadd.s32 %s22, %s23
      %s274 = smul.u32 8, %s273
      %p275 = scmp.lt.s32.totalorder %s21, 1
      %s276 = scalar_select %p275, %s21, 1
      %p277 = scmp.lt.s32.totalorder %s274, 7
      %s278 = scalar_select %p277, %s274, 7
      %s279 = smul.addr %s276, 32
      %s280 = sadd.s32 %s278, %s279
      %s281 = smul.addr %s280, 8
      %s282 = scalar_lea.vmem %s2, %s281
      %s283 = sadd.s32 %s22, %s23
      %s284 = smul.u32 8, %s283
      %s285 = sadd.s32 %s22, %s23
      %s286 = smul.u32 8, %s285
      %p287 = scmp.lt.s32.totalorder %s21, 1
      %s288 = scalar_select %p287, %s21, 1
      %p289 = scmp.lt.s32.totalorder %s286, 7
      %s290 = scalar_select %p289, %s286, 7
      %s291 = smul.addr %s288, 8
      %s292 = sadd.s32 %s290, %s291
      %s293 = scalar_lea.vmem %s3, %s292
      %s294 = sadd.s32 %s22, %s23
      %s295 = smul.u32 8, %s294
      %p296 = scmp.lt.s32.totalorder %s21, 1
      %s297 = scalar_select %p296, %s21, 1
      %p298 = scmp.lt.s32.totalorder %s22, 0
      %s299 = scalar_select %p298, %s22, 0
      %s300 = smul.addr %s299, 5
      %s301 = smul.addr %s297, 5
      %s302 = sadd.s32 %s300, %s301
      %s303 = smul.addr %s302, 8
      %s304 = scalar_lea.vmem %s4, %s303
      %p305 = scmp.eq.s32.totalorder %s23, 0
      // Predicated region
      $region29: #{quantize_ema_forward.1} parent=27 // pred_check
        %p306 = pneg %p305
      $region30: #{quantize_ema_forward.1} parent=27 // pred_check_branch
        %308 = sbr.rel (%p306) target = $region32
      $region31: #{quantize_ema_forward.1} parent=27 // pred_region
        %309 = vst [vmem:[%s304] sm:$0xff] 0.0
        %310 = vst [vmem:[%s304 + $0x8] sm:$0xff] 0.0
        %311 = vst [vmem:[%s304 + $0x10] sm:$0xff] 0.0
        %312 = vst [vmem:[%s304 + $0x18] sm:$0xff] 0.0
        %313 = vst [vmem:[%s304 + $0x20] sm:$0x1] 0.0
      $region32: #{quantize_ema_forward.1} parent=27 // pred_fallthru
        _
      %v314 = vld [vmem:[%s1] sm:$0xff]
      %v315 = vld [vmem:[%s1 + $0x8] sm:$0xff]
      %v316 = vld [vmem:[%s1 + $0x10] sm:$0xff]
      %v317 = vld [vmem:[%s1 + $0x18] sm:$0xff]
      %v318 = vld [vmem:[%s1 + $0x20] sm:$0x1]
      %v319 = vlaneseq
      %v320 = vshrl.u32 %v319, 7
      %v321 = vadd.s32 %v320, 8
      %v322 = vadd.s32 %v320, 16
      %v323 = vadd.s32 %v320, 24
      %v324 = vadd.s32 %v320, 32
      %v325 = vadd.s32 %v320, 40
      %v326 = vadd.s32 %v320, 48
      %v327 = vadd.s32 %v320, 56
      %v328 = vadd.s32 %v320, 64
      %v329 = vadd.s32 %v320, 72
      %v330 = vadd.s32 %v320, 80
      %v331 = vadd.s32 %v320, 88
      %v332 = vadd.s32 %v320, 96
      %v333 = vadd.s32 %v320, 104
      %v334 = vadd.s32 %v320, 112
      %v335 = vadd.s32 %v320, 120
      %v336 = vld [vmem:[%s270] sm:$0xff]
      %v337 = vld [vmem:[%s270 + $0x8] sm:$0xff]
      %v338 = vld [vmem:[%s270 + $0x40] sm:$0xff]
      %v339 = vld [vmem:[%s270 + $0x48] sm:$0xff]
      %v340 = vld [vmem:[%s270 + $0x80] sm:$0xff]
      %v341 = vld [vmem:[%s270 + $0x88] sm:$0xff]
      %v342 = vld [vmem:[%s270 + $0xc0] sm:$0xff]
      %v343 = vld [vmem:[%s270 + $0xc8] sm:$0xff]
      %344 = vxpose.xlu0.b32.start [1/16] %v314, 128
      %345 = vxpose.xlu0.b32.cont [2/16] %v315, 128
      %346 = vxpose.xlu0.b32.cont [3/16] %v316, 128
      %347 = vxpose.xlu0.b32.cont [4/16] %v317, 128
      %348 = vxpose.xlu0.b32.cont [5/16] %v318, 128
      %349 = vxpose.xlu0.b32.cont [6/16] 0.0, 128
      %350 = vxpose.xlu0.b32.cont [7/16] 0.0, 128
      %351 = vxpose.xlu0.b32.cont [8/16] 0.0, 128
      %352 = vxpose.xlu0.b32.cont [9/16] 0.0, 128
      %353 = vxpose.xlu0.b32.cont [10/16] 0.0, 128
      %354 = vxpose.xlu0.b32.cont [11/16] 0.0, 128
      %355 = vxpose.xlu0.b32.cont [12/16] 0.0, 128
      %356 = vxpose.xlu0.b32.cont [13/16] 0.0, 128
      %357 = vxpose.xlu0.b32.cont [14/16] 0.0, 128
      %358 = vxpose.xlu0.b32.cont [15/16] 0.0, 128
      %359 = vxpose.xlu0.b32.end [16/16] 0.0, 128
      %v360 = vpop.trf.xlu0
      %v361 = vpop.trf.xlu0
      %v362 = vpop.trf.xlu0
      %v363 = vpop.trf.xlu0
      %v364 = vpop.trf.xlu0
      %v365 = vpop.trf.xlu0
      %v366 = vpop.trf.xlu0
      %v367 = vpop.trf.xlu0
      %v368 = vpop.trf.xlu0
      %v369 = vpop.trf.xlu0
      %v370 = vpop.trf.xlu0
      %v371 = vpop.trf.xlu0
      %v372 = vpop.trf.xlu0
      %v373 = vpop.trf.xlu0
      %v374 = vpop.trf.xlu0
      %v375 = vpop.trf.xlu0
      %vm376 = vcmask 269312
      %v378 = vsel %vm376, %v360, 0
      %v381 = vsel %vm376, %v361, 0
      %v384 = vsel %vm376, %v362, 0
      %v387 = vsel %vm376, %v363, 0
      %v390 = vsel %vm376, %v364, 0
      %v393 = vsel %vm376, %v365, 0
      %v396 = vsel %vm376, %v366, 0
      %v399 = vsel %vm376, %v367, 0
      %v402 = vsel %vm376, %v368, 0
      %v405 = vsel %vm376, %v369, 0
      %v408 = vsel %vm376, %v370, 0
      %v411 = vsel %vm376, %v371, 0
      %v414 = vsel %vm376, %v372, 0
      %v417 = vsel %vm376, %v373, 0
      %v420 = vsel %vm376, %v374, 0
      %v423 = vsel %vm376, %v375, 0
      %vm425 = vcmask 1040384
      %v427 = vsel %vm425, 1.0, 0
      %429 = vmatprep.subr.mxu0 %v337
      %430 = vmatpush1.msra.mxu0 %v336
      %431 = vmatprep.subr.mxu0 %v339
      %432 = vmatpush1.msra.mxu0 %v338
      %433 = vmatprep.subr.mxu0 %v341
      %434 = vmatpush1.msra.mxu0 %v340
      %435 = vmatprep.subr.mxu0 %v343
      %436 = vmatpush1.msra.mxu0 %v342
      %437 = vmatprep.subr.mxu0 %v427
      %438 = vmatpush1.msra.mxu0 %v427
      %439 = vmatprep.subr.mxu0 0.0
      %440 = vmatpush1.msra.mxu0 0.0
      %441 = vmatprep.subr.mxu0 0.0
      %442 = vmatpush1.msra.mxu0 0.0
      %443 = vmatprep.subr.mxu0 0.0
      %444 = vmatpush1.msra.mxu0 0.0
      %445 = vmatprep.subr.mxu0 0.0
      %446 = vmatpush1.msra.mxu0 0.0
      %447 = vmatprep.subr.mxu0 0.0
      %448 = vmatpush1.msra.mxu0 0.0
      %449 = vmatprep.subr.mxu0 0.0
      %450 = vmatpush1.msra.mxu0 0.0
      %451 = vmatprep.subr.mxu0 0.0
      %452 = vmatpush1.msra.mxu0 0.0
      %453 = vmatprep.subr.mxu0 0.0
      %454 = vmatpush1.msra.mxu0 0.0
      %455 = vmatprep.subr.mxu0 0.0
      %456 = vmatpush1.msra.mxu0 0.0
      %457 = vmatprep.subr.mxu0 0.0
      %458 = vmatpush1.msra.mxu0 0.0
      %459 = vmatprep.subr.mxu0 0.0
      %460 = vmatpush1.msra.mxu0 0.0
      %461 = vmatprep.subr.mxu0 0.0
      %462 = vmatpush1.msra.mxu0 0.0
      %463 = vmatprep.subr.mxu0 0.0
      %464 = vmatpush1.msra.mxu0 0.0
      %465 = vmatprep.subr.mxu0 0.0
      %466 = vmatpush1.msra.mxu0 0.0
      %467 = vmatprep.subr.mxu0 0.0
      %468 = vmatpush1.msra.mxu0 0.0
      %469 = vmatprep.subr.mxu0 0.0
      %470 = vmatpush1.msra.mxu0 0.0
      %471 = vmatprep.subr.mxu0 0.0
      %472 = vmatpush1.msra.mxu0 0.0
      %473 = vmatprep.subr.mxu0 0.0
      %474 = vmatpush1.msra.mxu0 0.0
      %475 = vmatprep.subr.mxu0 0.0
      %476 = vmatpush1.msra.mxu0 0.0
      %477 = vmatprep.subr.mxu0 0.0
      %478 = vmatpush1.msra.mxu0 0.0
      %479 = vmatprep.subr.mxu0 0.0
      %480 = vmatpush1.msra.mxu0 0.0
      %481 = vmatprep.subr.mxu0 0.0
      %482 = vmatpush1.msra.mxu0 0.0
      %483 = vmatprep.subr.mxu0 0.0
      %484 = vmatpush1.msra.mxu0 0.0
      %485 = vmatprep.subr.mxu0 0.0
      %486 = vmatpush1.msra.mxu0 0.0
      %487 = vmatprep.subr.mxu0 0.0
      %488 = vmatpush1.msra.mxu0 0.0
      %489 = vmatprep.subr.mxu0 0.0
      %490 = vmatpush1.msra.mxu0 0.0
      %491 = vmatprep.subr.mxu0 0.0
      %492 = vmatpush1.msra.mxu0 0.0
      %493 = vmatprep.mubr.f32.mxu0 0.0
      %494 = vmatmul.mubr.f32.gmra.mrb[0].mxu0 %v378
      %v495 = vpop.f32.mrb[0].mxu0
      %v496 = vadd.f32 0.0, %v495
      %v497 = vpop.f32.mrb[0].mxu0
      %v498 = vadd.f32 0.0, %v497
      %499 = vmatprep.mubr.f32.mxu0 0.0
      %500 = vmatmul.mubr.f32.gmra.mrb[0].mxu0 %v381
      %v501 = vpop.f32.mrb[0].mxu0
      %v502 = vadd.f32 0.0, %v501
      %v503 = vpop.f32.mrb[0].mxu0
      %v504 = vadd.f32 0.0, %v503
      %505 = vmatprep.mubr.f32.mxu0 0.0
      %506 = vmatmul.mubr.f32.gmra.mrb[0].mxu0 %v384
      %v507 = vpop.f32.mrb[0].mxu0
      %v508 = vadd.f32 0.0, %v507
      %v509 = vpop.f32.mrb[0].mxu0
      %v510 = vadd.f32 0.0, %v509
      %511 = vmatprep.mubr.f32.mxu0 0.0
      %512 = vmatmul.mubr.f32.gmra.mrb[0].mxu0 %v387
      %v513 = vpop.f32.mrb[0].mxu0
      %v514 = vadd.f32 0.0, %v513
      %v515 = vpop.f32.mrb[0].mxu0
      %v516 = vadd.f32 0.0, %v515
      %517 = vmatprep.mubr.f32.mxu0 0.0
      %518 = vmatmul.mubr.f32.gmra.mrb[0].mxu0 %v390
      %v519 = vpop.f32.mrb[0].mxu0
      %v520 = vadd.f32 0.0, %v519
      %v521 = vpop.f32.mrb[0].mxu0
      %v522 = vadd.f32 0.0, %v521
      %523 = vmatprep.mubr.f32.mxu0 0.0
      %524 = vmatmul.mubr.f32.gmra.mrb[0].mxu0 %v393
      %v525 = vpop.f32.mrb[0].mxu0
      %v526 = vadd.f32 0.0, %v525
      %v527 = vpop.f32.mrb[0].mxu0
      %v528 = vadd.f32 0.0, %v527
      %529 = vmatprep.mubr.f32.mxu0 0.0
      %530 = vmatmul.mubr.f32.gmra.mrb[0].mxu0 %v396
      %v531 = vpop.f32.mrb[0].mxu0
      %v532 = vadd.f32 0.0, %v531
      %v533 = vpop.f32.mrb[0].mxu0
      %v534 = vadd.f32 0.0, %v533
      %535 = vmatprep.mubr.f32.mxu0 0.0
      %536 = vmatmul.mubr.f32.gmra.mrb[0].mxu0 %v399
      %v537 = vpop.f32.mrb[0].mxu0
      %v538 = vadd.f32 0.0, %v537
      %v539 = vpop.f32.mrb[0].mxu0
      %v540 = vadd.f32 0.0, %v539
      %541 = vmatprep.mubr.f32.mxu0 0.0
      %542 = vmatmul.mubr.f32.gmra.mrb[0].mxu0 %v402
      %v543 = vpop.f32.mrb[0].mxu0
      %v544 = vadd.f32 0.0, %v543
      %v545 = vpop.f32.mrb[0].mxu0
      %v546 = vadd.f32 0.0, %v545
      %547 = vmatprep.mubr.f32.mxu0 0.0
      %548 = vmatmul.mubr.f32.gmra.mrb[0].mxu0 %v405
      %v549 = vpop.f32.mrb[0].mxu0
      %v550 = vadd.f32 0.0, %v549
      %v551 = vpop.f32.mrb[0].mxu0
      %v552 = vadd.f32 0.0, %v551
      %553 = vmatprep.mubr.f32.mxu0 0.0
      %554 = vmatmul.mubr.f32.gmra.mrb[0].mxu0 %v408
      %v555 = vpop.f32.mrb[0].mxu0
      %v556 = vadd.f32 0.0, %v555
      %v557 = vpop.f32.mrb[0].mxu0
      %v558 = vadd.f32 0.0, %v557
      %559 = vmatprep.mubr.f32.mxu0 0.0
      %560 = vmatmul.mubr.f32.gmra.mrb[0].mxu0 %v411
      %v561 = vpop.f32.mrb[0].mxu0
      %v562 = vadd.f32 0.0, %v561
      %v563 = vpop.f32.mrb[0].mxu0
      %v564 = vadd.f32 0.0, %v563
      %565 = vmatprep.mubr.f32.mxu0 0.0
      %566 = vmatmul.mubr.f32.gmra.mrb[0].mxu0 %v414
      %v567 = vpop.f32.mrb[0].mxu0
      %v568 = vadd.f32 0.0, %v567
      %v569 = vpop.f32.mrb[0].mxu0
      %v570 = vadd.f32 0.0, %v569
      %571 = vmatprep.mubr.f32.mxu0 0.0
      %572 = vmatmul.mubr.f32.gmra.mrb[0].mxu0 %v417
      %v573 = vpop.f32.mrb[0].mxu0
      %v574 = vadd.f32 0.0, %v573
      %v575 = vpop.f32.mrb[0].mxu0
      %v576 = vadd.f32 0.0, %v575
      %577 = vmatprep.mubr.f32.mxu0 0.0
      %578 = vmatmul.mubr.f32.gmra.mrb[0].mxu0 %v420
      %v579 = vpop.f32.mrb[0].mxu0
      %v580 = vadd.f32 0.0, %v579
      %v581 = vpop.f32.mrb[0].mxu0
      %v582 = vadd.f32 0.0, %v581
      %583 = vmatprep.mubr.f32.mxu0 0.0
      %584 = vmatmul.mubr.f32.gmra.mrb[0].mxu0 %v423
      %v585 = vpop.f32.mrb[0].mxu0
      %v586 = vadd.f32 0.0, %v585
      %v587 = vpop.f32.mrb[0].mxu0
      %v588 = vadd.f32 0.0, %v587
      %589 = vdwg.mxu0
      %v590 = vmax.f32 %v496, %v508
      %v591 = vmax.f32 %v502, %v514
      %v592 = vmax.f32 %v590, %v520
      %v593 = vmax.f32 %v591, %v526
      %v594 = vmax.f32 %v592, %v532
      %v595 = vmax.f32 %v593, %v538
      %v596 = vmax.f32 %v594, %v544
      %v597 = vmax.f32 %v595, %v550
      %v598 = vmax.f32 %v596, %v556
      %v599 = vmax.f32 %v597, %v562
      %v600 = vmax.f32 %v598, %v568
      %v601 = vmax.f32 %v599, %v574
      %v602 = vmax.f32 %v600, %v580
      %v603 = vmax.f32 %v601, %v586
      %v604 = vmax.f32 %v602, %v603
      %v605 = vrot.slane %v604, 4
      %v606 = vmax.f32 %v604, %v605
      %v607 = vrot.slane %v606, 2
      %v608 = vmax.f32 %v606, %v607
      %v609 = vrot.slane %v608, 1
      %v610 = vmax.f32 %v608, %v609
      %v611 = vmax.f32 %v498, %v510
      %v612 = vmax.f32 %v504, %v516
      %v613 = vmax.f32 %v611, %v522
      %v614 = vmax.f32 %v612, %v528
      %v615 = vmax.f32 %v613, %v534
      %v616 = vmax.f32 %v614, %v540
      %v617 = vmax.f32 %v615, %v546
      %v618 = vmax.f32 %v616, %v552
      %v619 = vmax.f32 %v617, %v558
      %v620 = vmax.f32 %v618, %v564
      %v621 = vmax.f32 %v619, %v570
      %v622 = vmax.f32 %v620, %v576
      %v623 = vmax.f32 %v621, %v582
      %v624 = vmax.f32 %v622, %v588
      %v625 = vmax.f32 %v623, %v624
      %v626 = vrot.slane %v625, 4
      %v627 = vmax.f32 %v625, %v626
      %v628 = vrot.slane %v627, 2
      %v629 = vmax.f32 %v627, %v628
      %v630 = vrot.slane %v629, 1
      %v631 = vmax.f32 %v629, %v630
      %vm632 = vcmp.ge.f32.partialorder %v496, %v610
      %vm633 = vcmp.ge.f32.partialorder %v498, %v631
      %vm634 = vcmp.ge.f32.partialorder %v502, %v610
      %vm635 = vcmp.ge.f32.partialorder %v504, %v631
      %vm636 = vcmp.ge.f32.partialorder %v508, %v610
      %vm637 = vcmp.ge.f32.partialorder %v510, %v631
      %vm638 = vcmp.ge.f32.partialorder %v514, %v610
      %vm639 = vcmp.ge.f32.partialorder %v516, %v631
      %vm640 = vcmp.ge.f32.partialorder %v520, %v610
      %vm641 = vcmp.ge.f32.partialorder %v522, %v631
      %vm642 = vcmp.ge.f32.partialorder %v526, %v610
      %vm643 = vcmp.ge.f32.partialorder %v528, %v631
      %vm644 = vcmp.ge.f32.partialorder %v532, %v610
      %vm645 = vcmp.ge.f32.partialorder %v534, %v631
      %vm646 = vcmp.ge.f32.partialorder %v538, %v610
      %vm647 = vcmp.ge.f32.partialorder %v540, %v631
      %vm648 = vcmp.ge.f32.partialorder %v544, %v610
      %vm649 = vcmp.ge.f32.partialorder %v546, %v631
      %vm650 = vcmp.ge.f32.partialorder %v550, %v610
      %vm651 = vcmp.ge.f32.partialorder %v552, %v631
      %vm652 = vcmp.ge.f32.partialorder %v556, %v610
      %vm653 = vcmp.ge.f32.partialorder %v558, %v631
      %vm654 = vcmp.ge.f32.partialorder %v562, %v610
      %vm655 = vcmp.ge.f32.partialorder %v564, %v631
      %vm656 = vcmp.ge.f32.partialorder %v568, %v610
      %vm657 = vcmp.ge.f32.partialorder %v570, %v631
      %vm658 = vcmp.ge.f32.partialorder %v574, %v610
      %vm659 = vcmp.ge.f32.partialorder %v576, %v631
      %vm660 = vcmp.ge.f32.partialorder %v580, %v610
      %vm661 = vcmp.ge.f32.partialorder %v582, %v631
      %vm662 = vcmp.ge.f32.partialorder %v586, %v610
      %vm663 = vcmp.ge.f32.partialorder %v588, %v631
      %v664 = vsel %vm632, %v320, 128
      %v665 = vsel %vm633, %v320, 128
      %v666 = vsel %vm634, %v321, 128
      %v667 = vsel %vm635, %v321, 128
      %v668 = vsel %vm636, %v322, 128
      %v669 = vsel %vm637, %v322, 128
      %v670 = vsel %vm638, %v323, 128
      %v671 = vsel %vm639, %v323, 128
      %v672 = vsel %vm640, %v324, 128
      %v673 = vsel %vm641, %v324, 128
      %v674 = vsel %vm642, %v325, 128
      %v675 = vsel %vm643, %v325, 128
      %v676 = vsel %vm644, %v326, 128
      %v677 = vsel %vm645, %v326, 128
      %v678 = vsel %vm646, %v327, 128
      %v679 = vsel %vm647, %v327, 128
      %v680 = vsel %vm648, %v328, 128
      %v681 = vsel %vm649, %v328, 128
      %v682 = vsel %vm650, %v329, 128
      %v683 = vsel %vm651, %v329, 128
      %v684 = vsel %vm652, %v330, 128
      %v685 = vsel %vm653, %v330, 128
      %v686 = vsel %vm654, %v331, 128
      %v687 = vsel %vm655, %v331, 128
      %v688 = vsel %vm656, %v332, 128
      %v689 = vsel %vm657, %v332, 128
      %v690 = vsel %vm658, %v333, 128
      %v691 = vsel %vm659, %v333, 128
      %v692 = vsel %vm660, %v334, 128
      %v693 = vsel %vm661, %v334, 128
      %v694 = vsel %vm662, %v335, 128
      %v695 = vsel %vm663, %v335, 128
      %vm696 = vcmp.lt.s32.totalorder %v664, %v668
      %v697 = vsel %vm696, %v664, %v668
      %vm698 = vcmp.lt.s32.totalorder %v666, %v670
      %v699 = vsel %vm698, %v666, %v670
      %vm700 = vcmp.lt.s32.totalorder %v697, %v672
      %v701 = vsel %vm700, %v697, %v672
      %vm702 = vcmp.lt.s32.totalorder %v699, %v674
      %v703 = vsel %vm702, %v699, %v674
      %vm704 = vcmp.lt.s32.totalorder %v701, %v676
      %v705 = vsel %vm704, %v701, %v676
      %vm706 = vcmp.lt.s32.totalorder %v703, %v678
      %v707 = vsel %vm706, %v703, %v678
      %vm708 = vcmp.lt.s32.totalorder %v705, %v680
      %v709 = vsel %vm708, %v705, %v680
      %vm710 = vcmp.lt.s32.totalorder %v707, %v682
      %v711 = vsel %vm710, %v707, %v682
      %vm712 = vcmp.lt.s32.totalorder %v709, %v684
      %v713 = vsel %vm712, %v709, %v684
      %vm714 = vcmp.lt.s32.totalorder %v711, %v686
      %v715 = vsel %vm714, %v711, %v686
      %vm716 = vcmp.lt.s32.totalorder %v713, %v688
      %v717 = vsel %vm716, %v713, %v688
      %vm718 = vcmp.lt.s32.totalorder %v715, %v690
      %v719 = vsel %vm718, %v715, %v690
      %vm720 = vcmp.lt.s32.totalorder %v717, %v692
      %v721 = vsel %vm720, %v717, %v692
      %vm722 = vcmp.lt.s32.totalorder %v719, %v694
      %v723 = vsel %vm722, %v719, %v694
      %vm724 = vcmp.lt.s32.totalorder %v721, %v723
      %v725 = vsel %vm724, %v721, %v723
      %v726 = vrot.slane %v725, 4
      %vm727 = vcmp.lt.s32.totalorder %v725, %v726
      %v728 = vsel %vm727, %v725, %v726
      %v729 = vrot.slane %v728, 2
      %vm730 = vcmp.lt.s32.totalorder %v728, %v729
      %v731 = vsel %vm730, %v728, %v729
      %v732 = vrot.slane %v731, 1
      %vm733 = vcmp.lt.s32.totalorder %v731, %v732
      %v734 = vsel %vm733, %v731, %v732
      %vm735 = vcmp.lt.s32.totalorder %v665, %v669
      %v736 = vsel %vm735, %v665, %v669
      %vm737 = vcmp.lt.s32.totalorder %v667, %v671
      %v738 = vsel %vm737, %v667, %v671
      %vm739 = vcmp.lt.s32.totalorder %v736, %v673
      %v740 = vsel %vm739, %v736, %v673
      %vm741 = vcmp.lt.s32.totalorder %v738, %v675
      %v742 = vsel %vm741, %v738, %v675
      %vm743 = vcmp.lt.s32.totalorder %v740, %v677
      %v744 = vsel %vm743, %v740, %v677
      %vm745 = vcmp.lt.s32.totalorder %v742, %v679
      %v746 = vsel %vm745, %v742, %v679
      %vm747 = vcmp.lt.s32.totalorder %v744, %v681
      %v748 = vsel %vm747, %v744, %v681
      %vm749 = vcmp.lt.s32.totalorder %v746, %v683
      %v750 = vsel %vm749, %v746, %v683
      %vm751 = vcmp.lt.s32.totalorder %v748, %v685
      %v752 = vsel %vm751, %v748, %v685
      %vm753 = vcmp.lt.s32.totalorder %v750, %v687
      %v754 = vsel %vm753, %v750, %v687
      %vm755 = vcmp.lt.s32.totalorder %v752, %v689
      %v756 = vsel %vm755, %v752, %v689
      %vm757 = vcmp.lt.s32.totalorder %v754, %v691
      %v758 = vsel %vm757, %v754, %v691
      %vm759 = vcmp.lt.s32.totalorder %v756, %v693
      %v760 = vsel %vm759, %v756, %v693
      %vm761 = vcmp.lt.s32.totalorder %v758, %v695
      %v762 = vsel %vm761, %v758, %v695
      %vm763 = vcmp.lt.s32.totalorder %v760, %v762
      %v764 = vsel %vm763, %v760, %v762
      %v765 = vrot.slane %v764, 4
      %vm766 = vcmp.lt.s32.totalorder %v764, %v765
      %v767 = vsel %vm766, %v764, %v765
      %v768 = vrot.slane %v767, 2
      %vm769 = vcmp.lt.s32.totalorder %v767, %v768
      %v770 = vsel %vm769, %v767, %v768
      %v771 = vrot.slane %v770, 1
      %vm772 = vcmp.lt.s32.totalorder %v770, %v771
      %v773 = vsel %vm772, %v770, %v771
      %vm774 = vcmp.eq.s32.totalorder %v320, %v734
      %vm775 = vcmp.eq.s32.totalorder %v320, %v773
      %vm776 = vcmp.eq.s32.totalorder %v321, %v734
      %vm777 = vcmp.eq.s32.totalorder %v321, %v773
      %vm778 = vcmp.eq.s32.totalorder %v322, %v734
      %vm779 = vcmp.eq.s32.totalorder %v322, %v773
      %vm780 = vcmp.eq.s32.totalorder %v323, %v734
      %vm781 = vcmp.eq.s32.totalorder %v323, %v773
      %vm782 = vcmp.eq.s32.totalorder %v324, %v734
      %vm783 = vcmp.eq.s32.totalorder %v324, %v773
      %vm784 = vcmp.eq.s32.totalorder %v325, %v734
      %vm785 = vcmp.eq.s32.totalorder %v325, %v773
      %vm786 = vcmp.eq.s32.totalorder %v326, %v734
      %vm787 = vcmp.eq.s32.totalorder %v326, %v773
      %vm788 = vcmp.eq.s32.totalorder %v327, %v734
      %vm789 = vcmp.eq.s32.totalorder %v327, %v773
      %vm790 = vcmp.eq.s32.totalorder %v328, %v734
      %vm791 = vcmp.eq.s32.totalorder %v328, %v773
      %vm792 = vcmp.eq.s32.totalorder %v329, %v734
      %vm793 = vcmp.eq.s32.totalorder %v329, %v773
      %vm794 = vcmp.eq.s32.totalorder %v330, %v734
      %vm795 = vcmp.eq.s32.totalorder %v330, %v773
      %vm796 = vcmp.eq.s32.totalorder %v331, %v734
      %vm797 = vcmp.eq.s32.totalorder %v331, %v773
      %vm798 = vcmp.eq.s32.totalorder %v332, %v734
      %vm799 = vcmp.eq.s32.totalorder %v332, %v773
      %vm800 = vcmp.eq.s32.totalorder %v333, %v734
      %vm801 = vcmp.eq.s32.totalorder %v333, %v773
      %vm802 = vcmp.eq.s32.totalorder %v334, %v734
      %vm803 = vcmp.eq.s32.totalorder %v334, %v773
      %vm804 = vcmp.eq.s32.totalorder %v335, %v734
      %vm805 = vcmp.eq.s32.totalorder %v335, %v773
      %v806 = vsel %vm774, 1, 0
      %v807 = vsel %vm775, 1, 0
      %v808 = vsel %vm776, 1, 0
      %v809 = vsel %vm777, 1, 0
      %v810 = vsel %vm778, 1, 0
      %v811 = vsel %vm779, 1, 0
      %v812 = vsel %vm780, 1, 0
      %v813 = vsel %vm781, 1, 0
      %v814 = vsel %vm782, 1, 0
      %v815 = vsel %vm783, 1, 0
      %v816 = vsel %vm784, 1, 0
      %v817 = vsel %vm785, 1, 0
      %v818 = vsel %vm786, 1, 0
      %v819 = vsel %vm787, 1, 0
      %v820 = vsel %vm788, 1, 0
      %v821 = vsel %vm789, 1, 0
      %v822 = vsel %vm790, 1, 0
      %v823 = vsel %vm791, 1, 0
      %v824 = vsel %vm792, 1, 0
      %v825 = vsel %vm793, 1, 0
      %v826 = vsel %vm794, 1, 0
      %v827 = vsel %vm795, 1, 0
      %v828 = vsel %vm796, 1, 0
      %v829 = vsel %vm797, 1, 0
      %v830 = vsel %vm798, 1, 0
      %v831 = vsel %vm799, 1, 0
      %v832 = vsel %vm800, 1, 0
      %v833 = vsel %vm801, 1, 0
      %v834 = vsel %vm802, 1, 0
      %v835 = vsel %vm803, 1, 0
      %v836 = vsel %vm804, 1, 0
      %v837 = vsel %vm805, 1, 0
      %v838 = vcvt.s32.f32 %v806
      %v839 = vcvt.s32.f32 %v807
      %v840 = vcvt.s32.f32 %v808
      %v841 = vcvt.s32.f32 %v809
      %v842 = vcvt.s32.f32 %v810
      %v843 = vcvt.s32.f32 %v811
      %v844 = vcvt.s32.f32 %v812
      %v845 = vcvt.s32.f32 %v813
      %v846 = vcvt.s32.f32 %v814
      %v847 = vcvt.s32.f32 %v815
      %v848 = vcvt.s32.f32 %v816
      %v849 = vcvt.s32.f32 %v817
      %v850 = vcvt.s32.f32 %v818
      %v851 = vcvt.s32.f32 %v819
      %v852 = vcvt.s32.f32 %v820
      %v853 = vcvt.s32.f32 %v821
      %v854 = vcvt.s32.f32 %v822
      %v855 = vcvt.s32.f32 %v823
      %v856 = vcvt.s32.f32 %v824
      %v857 = vcvt.s32.f32 %v825
      %v858 = vcvt.s32.f32 %v826
      %v859 = vcvt.s32.f32 %v827
      %v860 = vcvt.s32.f32 %v828
      %v861 = vcvt.s32.f32 %v829
      %v862 = vcvt.s32.f32 %v830
      %v863 = vcvt.s32.f32 %v831
      %v864 = vcvt.s32.f32 %v832
      %v865 = vcvt.s32.f32 %v833
      %v866 = vcvt.s32.f32 %v834
      %v867 = vcvt.s32.f32 %v835
      %v868 = vcvt.s32.f32 %v836
      %v869 = vcvt.s32.f32 %v837
      %870 = vmatprep.subr.mxu0 %v839
      %871 = vmatpush1.msra.mxu0 %v838
      %872 = vmatprep.subr.mxu0 %v841
      %873 = vmatpush1.msra.mxu0 %v840
      %874 = vmatprep.subr.mxu0 %v843
      %875 = vmatpush1.msra.mxu0 %v842
      %876 = vmatprep.subr.mxu0 %v845
      %877 = vmatpush1.msra.mxu0 %v844
      %878 = vmatprep.subr.mxu0 %v847
      %879 = vmatpush1.msra.mxu0 %v846
      %880 = vmatprep.subr.mxu0 %v849
      %881 = vmatpush1.msra.mxu0 %v848
      %882 = vmatprep.subr.mxu0 %v851
      %883 = vmatpush1.msra.mxu0 %v850
      %884 = vmatprep.subr.mxu0 %v853
      %885 = vmatpush1.msra.mxu0 %v852
      %886 = vmatprep.subr.mxu0 %v855
      %887 = vmatpush1.msra.mxu0 %v854
      %888 = vmatprep.subr.mxu0 %v857
      %889 = vmatpush1.msra.mxu0 %v856
      %890 = vmatprep.subr.mxu0 %v859
      %891 = vmatpush1.msra.mxu0 %v858
      %892 = vmatprep.subr.mxu0 %v861
      %893 = vmatpush1.msra.mxu0 %v860
      %894 = vmatprep.subr.mxu0 %v863
      %895 = vmatpush1.msra.mxu0 %v862
      %896 = vmatprep.subr.mxu0 %v865
      %897 = vmatpush1.msra.mxu0 %v864
      %898 = vmatprep.subr.mxu0 %v867
      %899 = vmatpush1.msra.mxu0 %v866
      %900 = vmatprep.subr.mxu0 %v869
      %901 = vmatpush1.msra.mxu0 %v868
      %902 = vmatprep.subr.mxu0 0.0
      %903 = vmatpush1.msra.mxu0 0.0
      %904 = vmatprep.subr.mxu0 0.0
      %905 = vmatpush1.msra.mxu0 0.0
      %906 = vmatprep.subr.mxu0 0.0
      %907 = vmatpush1.msra.mxu0 0.0
      %908 = vmatprep.subr.mxu0 0.0
      %909 = vmatpush1.msra.mxu0 0.0
      %910 = vmatprep.subr.mxu0 0.0
      %911 = vmatpush1.msra.mxu0 0.0
      %912 = vmatprep.subr.mxu0 0.0
      %913 = vmatpush1.msra.mxu0 0.0
      %914 = vmatprep.subr.mxu0 0.0
      %915 = vmatpush1.msra.mxu0 0.0
      %916 = vmatprep.subr.mxu0 0.0
      %917 = vmatpush1.msra.mxu0 0.0
      %918 = vmatprep.subr.mxu0 0.0
      %919 = vmatpush1.msra.mxu0 0.0
      %920 = vmatprep.subr.mxu0 0.0
      %921 = vmatpush1.msra.mxu0 0.0
      %922 = vmatprep.subr.mxu0 0.0
      %923 = vmatpush1.msra.mxu0 0.0
      %924 = vmatprep.subr.mxu0 0.0
      %925 = vmatpush1.msra.mxu0 0.0
      %926 = vmatprep.subr.mxu0 0.0
      %927 = vmatpush1.msra.mxu0 0.0
      %928 = vmatprep.subr.mxu0 0.0
      %929 = vmatpush1.msra.mxu0 0.0
      %930 = vmatprep.subr.mxu0 0.0
      %931 = vmatpush1.msra.mxu0 0.0
      %932 = vmatprep.subr.mxu0 0.0
      %933 = vmatpush1.msra.mxu0 0.0
      %934 = vmatprep.mubr.f32.mxu0 0.0
      %935 = vmatmul.mubr.f32.gmra.mrb[0].mxu0 %v314
      %v936 = vpop.f32.mrb[0].mxu0
      %v937 = vadd.f32 0.0, %v936
      %v938 = vpop.f32.mrb[0].mxu0
      %v939 = vadd.f32 0.0, %v938
      %940 = vmatprep.mubr.f32.mxu0 0.0
      %941 = vmatmul.mubr.f32.gmra.mrb[0].mxu0 %v315
      %v942 = vpop.f32.mrb[0].mxu0
      %v943 = vadd.f32 0.0, %v942
      %v944 = vpop.f32.mrb[0].mxu0
      %v945 = vadd.f32 0.0, %v944
      %946 = vmatprep.mubr.f32.mxu0 0.0
      %947 = vmatmul.mubr.f32.gmra.mrb[0].mxu0 %v316
      %v948 = vpop.f32.mrb[0].mxu0
      %v949 = vadd.f32 0.0, %v948
      %v950 = vpop.f32.mrb[0].mxu0
      %v951 = vadd.f32 0.0, %v950
      %952 = vmatprep.mubr.f32.mxu0 0.0
      %953 = vmatmul.mubr.f32.gmra.mrb[0].mxu0 %v317
      %v954 = vpop.f32.mrb[0].mxu0
      %v955 = vadd.f32 0.0, %v954
      %v956 = vpop.f32.mrb[0].mxu0
      %v957 = vadd.f32 0.0, %v956
      %958 = vdwg.mxu0
      %959 = vst [vmem:[%s282] sm:$0xff] %v937
      %960 = vst [vmem:[%s282 + $0x8] sm:$0xff] %v939
      %961 = vst [vmem:[%s282 + $0x40] sm:$0xff] %v943
      %962 = vst [vmem:[%s282 + $0x48] sm:$0xff] %v945
      %963 = vst [vmem:[%s282 + $0x80] sm:$0xff] %v949
      %964 = vst [vmem:[%s282 + $0x88] sm:$0xff] %v951
      %965 = vst [vmem:[%s282 + $0xc0] sm:$0xff] %v955
      %966 = vst [vmem:[%s282 + $0xc8] sm:$0xff] %v957
      %v967 = vcombine.low %v734, %v773
      %v969 = vunpack.c.l.s4 1966171168
      %v970 = vunpack.c.0.s8 %v969
      %v971 = vlaneseq
      %v972 = vshrl.u32 %v971, 7
      %v973 = vsub.s32 %v970, %v972
      %v974 = vrot.slane %v967, %v973
      %v976 = vunpack.c.l.s4 1966171168
      %v977 = vunpack.c.0.s8 %v976
      %v978 = vlaneseq
      %v979 = vshrl.u32 %v978, 7
      %v980 = vsub.s32 %v977, %v979
      %v981 = vrot.slane %v974, %v980
      %v982 = vlaneseq
      %vm983 = vcmp.ge.s32.totalorder %v982, 0
      %vm984 = vcmp.lt.s32.totalorder %v982, 256
      %vm985 = vmand %vm983, %vm984
      %986 = vst.msk [vmem:[%s293] sm:$0x3] %vm985, %v981
      %v987 = vld [vmem:[%s270 + $0x10] sm:$0xff]
      %v988 = vld [vmem:[%s270 + $0x18] sm:$0xff]
      %v989 = vld [vmem:[%s270 + $0x50] sm:$0xff]
      %v990 = vld [vmem:[%s270 + $0x58] sm:$0xff]
      %v991 = vld [vmem:[%s270 + $0x90] sm:$0xff]
      %v992 = vld [vmem:[%s270 + $0x98] sm:$0xff]
      %v993 = vld [vmem:[%s270 + $0xd0] sm:$0xff]
      %v994 = vld [vmem:[%s270 + $0xd8] sm:$0xff]
      %995 = vmatprep.subr.mxu0 %v988
      %996 = vmatpush1.msra.mxu0 %v987
      %997 = vmatprep.subr.mxu0 %v990
      %998 = vmatpush1.msra.mxu0 %v989
      %999 = vmatprep.subr.mxu0 %v992
      %1000 = vmatpush1.msra.mxu0 %v991
      %1001 = vmatprep.subr.mxu0 %v994
      %1002 = vmatpush1.msra.mxu0 %v993
      %1003 = vmatprep.subr.mxu0 %v427
      %1004 = vmatpush1.msra.mxu0 %v427
      %1005 = vmatprep.subr.mxu0 0.0
      %1006 = vmatpush1.msra.mxu0 0.0
      %1007 = vmatprep.subr.mxu0 0.0
      %1008 = vmatpush1.msra.mxu0 0.0
      %1009 = vmatprep.subr.mxu0 0.0
      %1010 = vmatpush1.msra.mxu0 0.0
      %1011 = vmatprep.subr.mxu0 0.0
      %1012 = vmatpush1.msra.mxu0 0.0
      %1013 = vmatprep.subr.mxu0 0.0
      %1014 = vmatpush1.msra.mxu0 0.0
      %1015 = vmatprep.subr.mxu0 0.0
      %1016 = vmatpush1.msra.mxu0 0.0
      %1017 = vmatprep.subr.mxu0 0.0
      %1018 = vmatpush1.msra.mxu0 0.0
      %1019 = vmatprep.subr.mxu0 0.0
      %1020 = vmatpush1.msra.mxu0 0.0
      %1021 = vmatprep.subr.mxu0 0.0
      %1022 = vmatpush1.msra.mxu0 0.0
      %1023 = vmatprep.subr.mxu0 0.0
      %1024 = vmatpush1.msra.mxu0 0.0
      %1025 = vmatprep.subr.mxu0 0.0
      %1026 = vmatpush1.msra.mxu0 0.0
      %1027 = vmatprep.subr.mxu0 0.0
      %1028 = vmatpush1.msra.mxu0 0.0
      %1029 = vmatprep.subr.mxu0 0.0
      %1030 = vmatpush1.msra.mxu0 0.0
      %1031 = vmatprep.subr.mxu0 0.0
      %1032 = vmatpush1.msra.mxu0 0.0
      %1033 = vmatprep.subr.mxu0 0.0
      %1034 = vmatpush1.msra.mxu0 0.0
      %1035 = vmatprep.subr.mxu0 0.0
      %1036 = vmatpush1.msra.mxu0 0.0
      %1037 = vmatprep.subr.mxu0 0.0
      %1038 = vmatpush1.msra.mxu0 0.0
      %1039 = vmatprep.subr.mxu0 0.0
      %1040 = vmatpush1.msra.mxu0 0.0
      %1041 = vmatprep.subr.mxu0 0.0
      %1042 = vmatpush1.msra.mxu0 0.0
      %1043 = vmatprep.subr.mxu0 0.0
      %1044 = vmatpush1.msra.mxu0 0.0
      %1045 = vmatprep.subr.mxu0 0.0
      %1046 = vmatpush1.msra.mxu0 0.0
      %1047 = vmatprep.subr.mxu0 0.0
      %1048 = vmatpush1.msra.mxu0 0.0
      %1049 = vmatprep.subr.mxu0 0.0
      %1050 = vmatpush1.msra.mxu0 0.0
      %1051 = vmatprep.subr.mxu0 0.0
      %1052 = vmatpush1.msra.mxu0 0.0
      %1053 = vmatprep.subr.mxu0 0.0
      %1054 = vmatpush1.msra.mxu0 0.0
      %1055 = vmatprep.subr.mxu0 0.0
      %1056 = vmatpush1.msra.mxu0 0.0
      %1057 = vmatprep.subr.mxu0 0.0
      %1058 = vmatpush1.msra.mxu0 0.0
      %1059 = vmatprep.mubr.f32.mxu0 0.0
      %1060 = vmatmul.mubr.f32.gmra.mrb[0].mxu0 %v378
      %v1061 = vpop.f32.mrb[0].mxu0
      %v1062 = vadd.f32 0.0, %v1061
      %v1063 = vpop.f32.mrb[0].mxu0
      %v1064 = vadd.f32 0.0, %v1063
      %1065 = vmatprep.mubr.f32.mxu0 0.0
      %1066 = vmatmul.mubr.f32.gmra.mrb[0].mxu0 %v381
      %v1067 = vpop.f32.mrb[0].mxu0
      %v1068 = vadd.f32 0.0, %v1067
      %v1069 = vpop.f32.mrb[0].mxu0
      %v1070 = vadd.f32 0.0, %v1069
      %1071 = vmatprep.mubr.f32.mxu0 0.0
      %1072 = vmatmul.mubr.f32.gmra.mrb[0].mxu0 %v384
      %v1073 = vpop.f32.mrb[0].mxu0
      %v1074 = vadd.f32 0.0, %v1073
      %v1075 = vpop.f32.mrb[0].mxu0
      %v1076 = vadd.f32 0.0, %v1075
      %1077 = vmatprep.mubr.f32.mxu0 0.0
      %1078 = vmatmul.mubr.f32.gmra.mrb[0].mxu0 %v387
      %v1079 = vpop.f32.mrb[0].mxu0
      %v1080 = vadd.f32 0.0, %v1079
      %v1081 = vpop.f32.mrb[0].mxu0
      %v1082 = vadd.f32 0.0, %v1081
      %1083 = vmatprep.mubr.f32.mxu0 0.0
      %1084 = vmatmul.mubr.f32.gmra.mrb[0].mxu0 %v390
      %v1085 = vpop.f32.mrb[0].mxu0
      %v1086 = vadd.f32 0.0, %v1085
      %v1087 = vpop.f32.mrb[0].mxu0
      %v1088 = vadd.f32 0.0, %v1087
      %1089 = vmatprep.mubr.f32.mxu0 0.0
      %1090 = vmatmul.mubr.f32.gmra.mrb[0].mxu0 %v393
      %v1091 = vpop.f32.mrb[0].mxu0
      %v1092 = vadd.f32 0.0, %v1091
      %v1093 = vpop.f32.mrb[0].mxu0
      %v1094 = vadd.f32 0.0, %v1093
      %1095 = vmatprep.mubr.f32.mxu0 0.0
      %1096 = vmatmul.mubr.f32.gmra.mrb[0].mxu0 %v396
      %v1097 = vpop.f32.mrb[0].mxu0
      %v1098 = vadd.f32 0.0, %v1097
      %v1099 = vpop.f32.mrb[0].mxu0
      %v1100 = vadd.f32 0.0, %v1099
      %1101 = vmatprep.mubr.f32.mxu0 0.0
      %1102 = vmatmul.mubr.f32.gmra.mrb[0].mxu0 %v399
      %v1103 = vpop.f32.mrb[0].mxu0
      %v1104 = vadd.f32 0.0, %v1103
      %v1105 = vpop.f32.mrb[0].mxu0
      %v1106 = vadd.f32 0.0, %v1105
      %1107 = vmatprep.mubr.f32.mxu0 0.0
      %1108 = vmatmul.mubr.f32.gmra.mrb[0].mxu0 %v402
      %v1109 = vpop.f32.mrb[0].mxu0
      %v1110 = vadd.f32 0.0, %v1109
      %v1111 = vpop.f32.mrb[0].mxu0
      %v1112 = vadd.f32 0.0, %v1111
      %1113 = vmatprep.mubr.f32.mxu0 0.0
      %1114 = vmatmul.mubr.f32.gmra.mrb[0].mxu0 %v405
      %v1115 = vpop.f32.mrb[0].mxu0
      %v1116 = vadd.f32 0.0, %v1115
      %v1117 = vpop.f32.mrb[0].mxu0
      %v1118 = vadd.f32 0.0, %v1117
      %1119 = vmatprep.mubr.f32.mxu0 0.0
      %1120 = vmatmul.mubr.f32.gmra.mrb[0].mxu0 %v408
      %v1121 = vpop.f32.mrb[0].mxu0
      %v1122 = vadd.f32 0.0, %v1121
      %v1123 = vpop.f32.mrb[0].mxu0
      %v1124 = vadd.f32 0.0, %v1123
      %1125 = vmatprep.mubr.f32.mxu0 0.0
      %1126 = vmatmul.mubr.f32.gmra.mrb[0].mxu0 %v411
      %v1127 = vpop.f32.mrb[0].mxu0
      %v1128 = vadd.f32 0.0, %v1127
      %v1129 = vpop.f32.mrb[0].mxu0
      %v1130 = vadd.f32 0.0, %v1129
      %1131 = vmatprep.mubr.f32.mxu0 0.0
      %1132 = vmatmul.mubr.f32.gmra.mrb[0].mxu0 %v414
      %v1133 = vpop.f32.mrb[0].mxu0
      %v1134 = vadd.f32 0.0, %v1133
      %v1135 = vpop.f32.mrb[0].mxu0
      %v1136 = vadd.f32 0.0, %v1135
      %1137 = vmatprep.mubr.f32.mxu0 0.0
      %1138 = vmatmul.mubr.f32.gmra.mrb[0].mxu0 %v417
      %v1139 = vpop.f32.mrb[0].mxu0
      %v1140 = vadd.f32 0.0, %v1139
      %v1141 = vpop.f32.mrb[0].mxu0
      %v1142 = vadd.f32 0.0, %v1141
      %1143 = vmatprep.mubr.f32.mxu0 0.0
      %1144 = vmatmul.mubr.f32.gmra.mrb[0].mxu0 %v420
      %v1145 = vpop.f32.mrb[0].mxu0
      %v1146 = vadd.f32 0.0, %v1145
      %v1147 = vpop.f32.mrb[0].mxu0
      %v1148 = vadd.f32 0.0, %v1147
      %1149 = vmatprep.mubr.f32.mxu0 0.0
      %1150 = vmatmul.mubr.f32.gmra.mrb[0].mxu0 %v423
      %v1151 = vpop.f32.mrb[0].mxu0
      %v1152 = vadd.f32 0.0, %v1151
      %v1153 = vpop.f32.mrb[0].mxu0
      %v1154 = vadd.f32 0.0, %v1153
      %1155 = vdwg.mxu0
      %v1156 = vmax.f32 %v1062, %v1074
      %v1157 = vmax.f32 %v1068, %v1080
      %v1158 = vmax.f32 %v1156, %v1086
      %v1159 = vmax.f32 %v1157, %v1092
      %v1160 = vmax.f32 %v1158, %v1098
      %v1161 = vmax.f32 %v1159, %v1104
      %v1162 = vmax.f32 %v1160, %v1110
      %v1163 = vmax.f32 %v1161, %v1116
      %v1164 = vmax.f32 %v1162, %v1122
      %v1165 = vmax.f32 %v1163, %v1128
      %v1166 = vmax.f32 %v1164, %v1134
      %v1167 = vmax.f32 %v1165, %v1140
      %v1168 = vmax.f32 %v1166, %v1146
      %v1169 = vmax.f32 %v1167, %v1152
      %v1170 = vmax.f32 %v1168, %v1169
      %v1171 = vrot.slane %v1170, 4
      %v1172 = vmax.f32 %v1170, %v1171
      %v1173 = vrot.slane %v1172, 2
      %v1174 = vmax.f32 %v1172, %v1173
      %v1175 = vrot.slane %v1174, 1
      %v1176 = vmax.f32 %v1174, %v1175
      %v1177 = vmax.f32 %v1064, %v1076
      %v1178 = vmax.f32 %v1070, %v1082
      %v1179 = vmax.f32 %v1177, %v1088
      %v1180 = vmax.f32 %v1178, %v1094
      %v1181 = vmax.f32 %v1179, %v1100
      %v1182 = vmax.f32 %v1180, %v1106
      %v1183 = vmax.f32 %v1181, %v1112
      %v1184 = vmax.f32 %v1182, %v1118
      %v1185 = vmax.f32 %v1183, %v1124
      %v1186 = vmax.f32 %v1184, %v1130
      %v1187 = vmax.f32 %v1185, %v1136
      %v1188 = vmax.f32 %v1186, %v1142
      %v1189 = vmax.f32 %v1187, %v1148
      %v1190 = vmax.f32 %v1188, %v1154
      %v1191 = vmax.f32 %v1189, %v1190
      %v1192 = vrot.slane %v1191, 4
      %v1193 = vmax.f32 %v1191, %v1192
      %v1194 = vrot.slane %v1193, 2
      %v1195 = vmax.f32 %v1193, %v1194
      %v1196 = vrot.slane %v1195, 1
      %v1197 = vmax.f32 %v1195, %v1196
      %vm1198 = vcmp.ge.f32.partialorder %v1062, %v1176
      %vm1199 = vcmp.ge.f32.partialorder %v1064, %v1197
      %vm1200 = vcmp.ge.f32.partialorder %v1068, %v1176
      %vm1201 = vcmp.ge.f32.partialorder %v1070, %v1197
      %vm1202 = vcmp.ge.f32.partialorder %v1074, %v1176
      %vm1203 = vcmp.ge.f32.partialorder %v1076, %v1197
      %vm1204 = vcmp.ge.f32.partialorder %v1080, %v1176
      %vm1205 = vcmp.ge.f32.partialorder %v1082, %v1197
      %vm1206 = vcmp.ge.f32.partialorder %v1086, %v1176
      %vm1207 = vcmp.ge.f32.partialorder %v1088, %v1197
      %vm1208 = vcmp.ge.f32.partialorder %v1092, %v1176
      %vm1209 = vcmp.ge.f32.partialorder %v1094, %v1197
      %vm1210 = vcmp.ge.f32.partialorder %v1098, %v1176
      %vm1211 = vcmp.ge.f32.partialorder %v1100, %v1197
      %vm1212 = vcmp.ge.f32.partialorder %v1104, %v1176
      %vm1213 = vcmp.ge.f32.partialorder %v1106, %v1197
      %vm1214 = vcmp.ge.f32.partialorder %v1110, %v1176
      %vm1215 = vcmp.ge.f32.partialorder %v1112, %v1197
      %vm1216 = vcmp.ge.f32.partialorder %v1116, %v1176
      %vm1217 = vcmp.ge.f32.partialorder %v1118, %v1197
      %vm1218 = vcmp.ge.f32.partialorder %v1122, %v1176
      %vm1219 = vcmp.ge.f32.partialorder %v1124, %v1197
      %vm1220 = vcmp.ge.f32.partialorder %v1128, %v1176
      %vm1221 = vcmp.ge.f32.partialorder %v1130, %v1197
      %vm1222 = vcmp.ge.f32.partialorder %v1134, %v1176
      %vm1223 = vcmp.ge.f32.partialorder %v1136, %v1197
      %vm1224 = vcmp.ge.f32.partialorder %v1140, %v1176
      %vm1225 = vcmp.ge.f32.partialorder %v1142, %v1197
      %vm1226 = vcmp.ge.f32.partialorder %v1146, %v1176
      %vm1227 = vcmp.ge.f32.partialorder %v1148, %v1197
      %vm1228 = vcmp.ge.f32.partialorder %v1152, %v1176
      %vm1229 = vcmp.ge.f32.partialorder %v1154, %v1197
      %v1230 = vsel %vm1198, %v320, 128
      %v1231 = vsel %vm1199, %v320, 128
      %v1232 = vsel %vm1200, %v321, 128
      %v1233 = vsel %vm1201, %v321, 128
      %v1234 = vsel %vm1202, %v322, 128
      %v1235 = vsel %vm1203, %v322, 128
      %v1236 = vsel %vm1204, %v323, 128
      %v1237 = vsel %vm1205, %v323, 128
      %v1238 = vsel %vm1206, %v324, 128
      %v1239 = vsel %vm1207, %v324, 128
      %v1240 = vsel %vm1208, %v325, 128
      %v1241 = vsel %vm1209, %v325, 128
      %v1242 = vsel %vm1210, %v326, 128
      %v1243 = vsel %vm1211, %v326, 128
      %v1244 = vsel %vm1212, %v327, 128
      %v1245 = vsel %vm1213, %v327, 128
      %v1246 = vsel %vm1214, %v328, 128
      %v1247 = vsel %vm1215, %v328, 128
      %v1248 = vsel %vm1216, %v329, 128
      %v1249 = vsel %vm1217, %v329, 128
      %v1250 = vsel %vm1218, %v330, 128
      %v1251 = vsel %vm1219, %v330, 128
      %v1252 = vsel %vm1220, %v331, 128
      %v1253 = vsel %vm1221, %v331, 128
      %v1254 = vsel %vm1222, %v332, 128
      %v1255 = vsel %vm1223, %v332, 128
      %v1256 = vsel %vm1224, %v333, 128
      %v1257 = vsel %vm1225, %v333, 128
      %v1258 = vsel %vm1226, %v334, 128
      %v1259 = vsel %vm1227, %v334, 128
      %v1260 = vsel %vm1228, %v335, 128
      %v1261 = vsel %vm1229, %v335, 128
      %vm1262 = vcmp.lt.s32.totalorder %v1230, %v1234
      %v1263 = vsel %vm1262, %v1230, %v1234
      %vm1264 = vcmp.lt.s32.totalorder %v1232, %v1236
      %v1265 = vsel %vm1264, %v1232, %v1236
      %vm1266 = vcmp.lt.s32.totalorder %v1263, %v1238
      %v1267 = vsel %vm1266, %v1263, %v1238
      %vm1268 = vcmp.lt.s32.totalorder %v1265, %v1240
      %v1269 = vsel %vm1268, %v1265, %v1240
      %vm1270 = vcmp.lt.s32.totalorder %v1267, %v1242
      %v1271 = vsel %vm1270, %v1267, %v1242
      %vm1272 = vcmp.lt.s32.totalorder %v1269, %v1244
      %v1273 = vsel %vm1272, %v1269, %v1244
      %vm1274 = vcmp.lt.s32.totalorder %v1271, %v1246
      %v1275 = vsel %vm1274, %v1271, %v1246
      %vm1276 = vcmp.lt.s32.totalorder %v1273, %v1248
      %v1277 = vsel %vm1276, %v1273, %v1248
      %vm1278 = vcmp.lt.s32.totalorder %v1275, %v1250
      %v1279 = vsel %vm1278, %v1275, %v1250
      %vm1280 = vcmp.lt.s32.totalorder %v1277, %v1252
      %v1281 = vsel %vm1280, %v1277, %v1252
      %vm1282 = vcmp.lt.s32.totalorder %v1279, %v1254
      %v1283 = vsel %vm1282, %v1279, %v1254
      %vm1284 = vcmp.lt.s32.totalorder %v1281, %v1256
      %v1285 = vsel %vm1284, %v1281, %v1256
      %vm1286 = vcmp.lt.s32.totalorder %v1283, %v1258
      %v1287 = vsel %vm1286, %v1283, %v1258
      %vm1288 = vcmp.lt.s32.totalorder %v1285, %v1260
      %v1289 = vsel %vm1288, %v1285, %v1260
      %vm1290 = vcmp.lt.s32.totalorder %v1287, %v1289
      %v1291 = vsel %vm1290, %v1287, %v1289
      %v1292 = vrot.slane %v1291, 4
      %vm1293 = vcmp.lt.s32.totalorder %v1291, %v1292
      %v1294 = vsel %vm1293, %v1291, %v1292
      %v1295 = vrot.slane %v1294, 2
      %vm1296 = vcmp.lt.s32.totalorder %v1294, %v1295
      %v1297 = vsel %vm1296, %v1294, %v1295
      %v1298 = vrot.slane %v1297, 1
      %vm1299 = vcmp.lt.s32.totalorder %v1297, %v1298
      %v1300 = vsel %vm1299, %v1297, %v1298
      %vm1301 = vcmp.lt.s32.totalorder %v1231, %v1235
      %v1302 = vsel %vm1301, %v1231, %v1235
      %vm1303 = vcmp.lt.s32.totalorder %v1233, %v1237
      %v1304 = vsel %vm1303, %v1233, %v1237
      %vm1305 = vcmp.lt.s32.totalorder %v1302, %v1239
      %v1306 = vsel %vm1305, %v1302, %v1239
      %vm1307 = vcmp.lt.s32.totalorder %v1304, %v1241
      %v1308 = vsel %vm1307, %v1304, %v1241
      %vm1309 = vcmp.lt.s32.totalorder %v1306, %v1243
      %v1310 = vsel %vm1309, %v1306, %v1243
      %vm1311 = vcmp.lt.s32.totalorder %v1308, %v1245
      %v1312 = vsel %vm1311, %v1308, %v1245
      %vm1313 = vcmp.lt.s32.totalorder %v1310, %v1247
      %v1314 = vsel %vm1313, %v1310, %v1247
      %vm1315 = vcmp.lt.s32.totalorder %v1312, %v1249
      %v1316 = vsel %vm1315, %v1312, %v1249
      %vm1317 = vcmp.lt.s32.totalorder %v1314, %v1251
      %v1318 = vsel %vm1317, %v1314, %v1251
      %vm1319 = vcmp.lt.s32.totalorder %v1316, %v1253
      %v1320 = vsel %vm1319, %v1316, %v1253
      %vm1321 = vcmp.lt.s32.totalorder %v1318, %v1255
      %v1322 = vsel %vm1321, %v1318, %v1255
      %vm1323 = vcmp.lt.s32.totalorder %v1320, %v1257
      %v1324 = vsel %vm1323, %v1320, %v1257
      %vm1325 = vcmp.lt.s32.totalorder %v1322, %v1259
      %v1326 = vsel %vm1325, %v1322, %v1259
      %vm1327 = vcmp.lt.s32.totalorder %v1324, %v1261
      %v1328 = vsel %vm1327, %v1324, %v1261
      %vm1329 = vcmp.lt.s32.totalorder %v1326, %v1328
      %v1330 = vsel %vm1329, %v1326, %v1328
      %v1331 = vrot.slane %v1330, 4
      %vm1332 = vcmp.lt.s32.totalorder %v1330, %v1331
      %v1333 = vsel %vm1332, %v1330, %v1331
      %v1334 = vrot.slane %v1333, 2
      %vm1335 = vcmp.lt.s32.totalorder %v1333, %v1334
      %v1336 = vsel %vm1335, %v1333, %v1334
      %v1337 = vrot.slane %v1336, 1
      %vm1338 = vcmp.lt.s32.totalorder %v1336, %v1337
      %v1339 = vsel %vm1338, %v1336, %v1337
      %vm1340 = vcmp.eq.s32.totalorder %v320, %v1300
      %vm1341 = vcmp.eq.s32.totalorder %v320, %v1339
      %vm1342 = vcmp.eq.s32.totalorder %v321, %v1300
      %vm1343 = vcmp.eq.s32.totalorder %v321, %v1339
      %vm1344 = vcmp.eq.s32.totalorder %v322, %v1300
      %vm1345 = vcmp.eq.s32.totalorder %v322, %v1339
      %vm1346 = vcmp.eq.s32.totalorder %v323, %v1300
      %vm1347 = vcmp.eq.s32.totalorder %v323, %v1339
      %vm1348 = vcmp.eq.s32.totalorder %v324, %v1300
      %vm1349 = vcmp.eq.s32.totalorder %v324, %v1339
      %vm1350 = vcmp.eq.s32.totalorder %v325, %v1300
      %vm1351 = vcmp.eq.s32.totalorder %v325, %v1339
      %vm1352 = vcmp.eq.s32.totalorder %v326, %v1300
      %vm1353 = vcmp.eq.s32.totalorder %v326, %v1339
      %vm1354 = vcmp.eq.s32.totalorder %v327, %v1300
      %vm1355 = vcmp.eq.s32.totalorder %v327, %v1339
      %vm1356 = vcmp.eq.s32.totalorder %v328, %v1300
      %vm1357 = vcmp.eq.s32.totalorder %v328, %v1339
      %vm1358 = vcmp.eq.s32.totalorder %v329, %v1300
      %vm1359 = vcmp.eq.s32.totalorder %v329, %v1339
      %vm1360 = vcmp.eq.s32.totalorder %v330, %v1300
      %vm1361 = vcmp.eq.s32.totalorder %v330, %v1339
      %vm1362 = vcmp.eq.s32.totalorder %v331, %v1300
      %vm1363 = vcmp.eq.s32.totalorder %v331, %v1339
      %vm1364 = vcmp.eq.s32.totalorder %v332, %v1300
      %vm1365 = vcmp.eq.s32.totalorder %v332, %v1339
      %vm1366 = vcmp.eq.s32.totalorder %v333, %v1300
      %vm1367 = vcmp.eq.s32.totalorder %v333, %v1339
      %vm1368 = vcmp.eq.s32.totalorder %v334, %v1300
      %vm1369 = vcmp.eq.s32.totalorder %v334, %v1339
      %vm1370 = vcmp.eq.s32.totalorder %v335, %v1300
      %vm1371 = vcmp.eq.s32.totalorder %v335, %v1339
      %v1372 = vsel %vm1340, 1, 0
      %v1373 = vsel %vm1341, 1, 0
      %v1374 = vsel %vm1342, 1, 0
      %v1375 = vsel %vm1343, 1, 0
      %v1376 = vsel %vm1344, 1, 0
      %v1377 = vsel %vm1345, 1, 0
      %v1378 = vsel %vm1346, 1, 0
      %v1379 = vsel %vm1347, 1, 0
      %v1380 = vsel %vm1348, 1, 0
      %v1381 = vsel %vm1349, 1, 0
      %v1382 = vsel %vm1350, 1, 0
      %v1383 = vsel %vm1351, 1, 0
      %v1384 = vsel %vm1352, 1, 0
      %v1385 = vsel %vm1353, 1, 0
      %v1386 = vsel %vm1354, 1, 0
      %v1387 = vsel %vm1355, 1, 0
      %v1388 = vsel %vm1356, 1, 0
      %v1389 = vsel %vm1357, 1, 0
      %v1390 = vsel %vm1358, 1, 0
      %v1391 = vsel %vm1359, 1, 0
      %v1392 = vsel %vm1360, 1, 0
      %v1393 = vsel %vm1361, 1, 0
      %v1394 = vsel %vm1362, 1, 0
      %v1395 = vsel %vm1363, 1, 0
      %v1396 = vsel %vm1364, 1, 0
      %v1397 = vsel %vm1365, 1, 0
      %v1398 = vsel %vm1366, 1, 0
      %v1399 = vsel %vm1367, 1, 0
      %v1400 = vsel %vm1368, 1, 0
      %v1401 = vsel %vm1369, 1, 0
      %v1402 = vsel %vm1370, 1, 0
      %v1403 = vsel %vm1371, 1, 0
      %v1404 = vcvt.s32.f32 %v1372
      %v1405 = vcvt.s32.f32 %v1373
      %v1406 = vcvt.s32.f32 %v1374
      %v1407 = vcvt.s32.f32 %v1375
      %v1408 = vcvt.s32.f32 %v1376
      %v1409 = vcvt.s32.f32 %v1377
      %v1410 = vcvt.s32.f32 %v1378
      %v1411 = vcvt.s32.f32 %v1379
      %v1412 = vcvt.s32.f32 %v1380
      %v1413 = vcvt.s32.f32 %v1381
      %v1414 = vcvt.s32.f32 %v1382
      %v1415 = vcvt.s32.f32 %v1383
      %v1416 = vcvt.s32.f32 %v1384
      %v1417 = vcvt.s32.f32 %v1385
      %v1418 = vcvt.s32.f32 %v1386
      %v1419 = vcvt.s32.f32 %v1387
      %v1420 = vcvt.s32.f32 %v1388
      %v1421 = vcvt.s32.f32 %v1389
      %v1422 = vcvt.s32.f32 %v1390
      %v1423 = vcvt.s32.f32 %v1391
      %v1424 = vcvt.s32.f32 %v1392
      %v1425 = vcvt.s32.f32 %v1393
      %v1426 = vcvt.s32.f32 %v1394
      %v1427 = vcvt.s32.f32 %v1395
      %v1428 = vcvt.s32.f32 %v1396
      %v1429 = vcvt.s32.f32 %v1397
      %v1430 = vcvt.s32.f32 %v1398
      %v1431 = vcvt.s32.f32 %v1399
      %v1432 = vcvt.s32.f32 %v1400
      %v1433 = vcvt.s32.f32 %v1401
      %v1434 = vcvt.s32.f32 %v1402
      %v1435 = vcvt.s32.f32 %v1403
      %1436 = vmatprep.subr.mxu0 %v1405
      %1437 = vmatpush1.msra.mxu0 %v1404
      %1438 = vmatprep.subr.mxu0 %v1407
      %1439 = vmatpush1.msra.mxu0 %v1406
      %1440 = vmatprep.subr.mxu0 %v1409
      %1441 = vmatpush1.msra.mxu0 %v1408
      %1442 = vmatprep.subr.mxu0 %v1411
      %1443 = vmatpush1.msra.mxu0 %v1410
      %1444 = vmatprep.subr.mxu0 %v1413
      %1445 = vmatpush1.msra.mxu0 %v1412
      %1446 = vmatprep.subr.mxu0 %v1415
      %1447 = vmatpush1.msra.mxu0 %v1414
      %1448 = vmatprep.subr.mxu0 %v1417
      %1449 = vmatpush1.msra.mxu0 %v1416
      %1450 = vmatprep.subr.mxu0 %v1419
      %1451 = vmatpush1.msra.mxu0 %v1418
      %1452 = vmatprep.subr.mxu0 %v1421
      %1453 = vmatpush1.msra.mxu0 %v1420
      %1454 = vmatprep.subr.mxu0 %v1423
      %1455 = vmatpush1.msra.mxu0 %v1422
      %1456 = vmatprep.subr.mxu0 %v1425
      %1457 = vmatpush1.msra.mxu0 %v1424
      %1458 = vmatprep.subr.mxu0 %v1427
      %1459 = vmatpush1.msra.mxu0 %v1426
      %1460 = vmatprep.subr.mxu0 %v1429
      %1461 = vmatpush1.msra.mxu0 %v1428
      %1462 = vmatprep.subr.mxu0 %v1431
      %1463 = vmatpush1.msra.mxu0 %v1430
      %1464 = vmatprep.subr.mxu0 %v1433
      %1465 = vmatpush1.msra.mxu0 %v1432
      %1466 = vmatprep.subr.mxu0 %v1435
      %1467 = vmatpush1.msra.mxu0 %v1434
      %1468 = vmatprep.subr.mxu0 0.0
      %1469 = vmatpush1.msra.mxu0 0.0
      %1470 = vmatprep.subr.mxu0 0.0
      %1471 = vmatpush1.msra.mxu0 0.0
      %1472 = vmatprep.subr.mxu0 0.0
      %1473 = vmatpush1.msra.mxu0 0.0
      %1474 = vmatprep.subr.mxu0 0.0
      %1475 = vmatpush1.msra.mxu0 0.0
      %1476 = vmatprep.subr.mxu0 0.0
      %1477 = vmatpush1.msra.mxu0 0.0
      %1478 = vmatprep.subr.mxu0 0.0
      %1479 = vmatpush1.msra.mxu0 0.0
      %1480 = vmatprep.subr.mxu0 0.0
      %1481 = vmatpush1.msra.mxu0 0.0
      %1482 = vmatprep.subr.mxu0 0.0
      %1483 = vmatpush1.msra.mxu0 0.0
      %1484 = vmatprep.subr.mxu0 0.0
      %1485 = vmatpush1.msra.mxu0 0.0
      %1486 = vmatprep.subr.mxu0 0.0
      %1487 = vmatpush1.msra.mxu0 0.0
      %1488 = vmatprep.subr.mxu0 0.0
      %1489 = vmatpush1.msra.mxu0 0.0
      %1490 = vmatprep.subr.mxu0 0.0
      %1491 = vmatpush1.msra.mxu0 0.0
      %1492 = vmatprep.subr.mxu0 0.0
      %1493 = vmatpush1.msra.mxu0 0.0
      %1494 = vmatprep.subr.mxu0 0.0
      %1495 = vmatpush1.msra.mxu0 0.0
      %1496 = vmatprep.subr.mxu0 0.0
      %1497 = vmatpush1.msra.mxu0 0.0
      %1498 = vmatprep.subr.mxu0 0.0
      %1499 = vmatpush1.msra.mxu0 0.0
      %1500 = vmatprep.mubr.f32.mxu0 0.0
      %1501 = vmatmul.mubr.f32.gmra.mrb[0].mxu0 %v314
      %v1502 = vpop.f32.mrb[0].mxu0
      %v1503 = vadd.f32 0.0, %v1502
      %v1504 = vpop.f32.mrb[0].mxu0
      %v1505 = vadd.f32 0.0, %v1504
      %1506 = vmatprep.mubr.f32.mxu0 0.0
      %1507 = vmatmul.mubr.f32.gmra.mrb[0].mxu0 %v315
      %v1508 = vpop.f32.mrb[0].mxu0
      %v1509 = vadd.f32 0.0, %v1508
      %v1510 = vpop.f32.mrb[0].mxu0
      %v1511 = vadd.f32 0.0, %v1510
      %1512 = vmatprep.mubr.f32.mxu0 0.0
      %1513 = vmatmul.mubr.f32.gmra.mrb[0].mxu0 %v316
      %v1514 = vpop.f32.mrb[0].mxu0
      %v1515 = vadd.f32 0.0, %v1514
      %v1516 = vpop.f32.mrb[0].mxu0
      %v1517 = vadd.f32 0.0, %v1516
      %1518 = vmatprep.mubr.f32.mxu0 0.0
      %1519 = vmatmul.mubr.f32.gmra.mrb[0].mxu0 %v317
      %v1520 = vpop.f32.mrb[0].mxu0
      %v1521 = vadd.f32 0.0, %v1520
      %v1522 = vpop.f32.mrb[0].mxu0
      %v1523 = vadd.f32 0.0, %v1522
      %1524 = vdwg.mxu0
      %1525 = vst [vmem:[%s282 + $0x10] sm:$0xff] %v1503
      %1526 = vst [vmem:[%s282 + $0x18] sm:$0xff] %v1505
      %1527 = vst [vmem:[%s282 + $0x50] sm:$0xff] %v1509
      %1528 = vst [vmem:[%s282 + $0x58] sm:$0xff] %v1511
      %1529 = vst [vmem:[%s282 + $0x90] sm:$0xff] %v1515
      %1530 = vst [vmem:[%s282 + $0x98] sm:$0xff] %v1517
      %1531 = vst [vmem:[%s282 + $0xd0] sm:$0xff] %v1521
      %1532 = vst [vmem:[%s282 + $0xd8] sm:$0xff] %v1523
      %v1533 = vcombine.low %v1300, %v1339
      %v1535 = vunpack.c.l.s4 1966171168
      %v1536 = vunpack.c.0.s8 %v1535
      %v1537 = vlaneseq
      %v1538 = vshrl.u32 %v1537, 7
      %v1539 = vsub.s32 %v1536, %v1538
      %v1540 = vrot.slane %v1533, %v1539
      %v1542 = vunpack.c.l.s4 1966171168
      %v1543 = vunpack.c.0.s8 %v1542
      %v1544 = vlaneseq
      %v1545 = vshrl.u32 %v1544, 7
      %v1546 = vsub.s32 %v1543, %v1545
      %v1547 = vrot.slane %v1540, %v1546
      %1548 = vst.msk [vmem:[%s293 + $0x2] sm:$0x3] %vm985, %v1547
      %1549 = vmatprep.subr.mxu0 %v1405
      %1550 = vmatpush1.xpose.msra.mxu0 %v1404
      %1551 = vmatprep.subr.mxu0 %v1407
      %1552 = vmatpush1.xpose.msra.mxu0 %v1406
      %1553 = vmatprep.subr.mxu0 %v1409
      %1554 = vmatpush1.xpose.msra.mxu0 %v1408
      %1555 = vmatprep.subr.mxu0 %v1411
      %1556 = vmatpush1.xpose.msra.mxu0 %v1410
      %1557 = vmatprep.subr.mxu0 %v1413
      %1558 = vmatpush1.xpose.msra.mxu0 %v1412
      %1559 = vmatprep.subr.mxu0 %v1415
      %1560 = vmatpush1.xpose.msra.mxu0 %v1414
      %1561 = vmatprep.subr.mxu0 %v1417
      %1562 = vmatpush1.xpose.msra.mxu0 %v1416
      %1563 = vmatprep.subr.mxu0 %v1419
      %1564 = vmatpush1.xpose.msra.mxu0 %v1418
      %1565 = vmatprep.subr.mxu0 %v1421
      %1566 = vmatpush1.xpose.msra.mxu0 %v1420
      %1567 = vmatprep.subr.mxu0 %v1423
      %1568 = vmatpush1.xpose.msra.mxu0 %v1422
      %1569 = vmatprep.subr.mxu0 %v1425
      %1570 = vmatpush1.xpose.msra.mxu0 %v1424
      %1571 = vmatprep.subr.mxu0 %v1427
      %1572 = vmatpush1.xpose.msra.mxu0 %v1426
      %1573 = vmatprep.subr.mxu0 %v1429
      %1574 = vmatpush1.xpose.msra.mxu0 %v1428
      %1575 = vmatprep.subr.mxu0 %v1431
      %1576 = vmatpush1.xpose.msra.mxu0 %v1430
      %1577 = vmatprep.subr.mxu0 %v1433
      %1578 = vmatpush1.xpose.msra.mxu0 %v1432
      %1579 = vmatprep.subr.mxu0 %v1435
      %1580 = vmatpush1.xpose.msra.mxu0 %v1434
      %1581 = vmatprep.subr.mxu0 0.0
      %1582 = vmatpush1.xpose.msra.mxu0 0.0
      %1583 = vmatprep.subr.mxu0 0.0
      %1584 = vmatpush1.xpose.msra.mxu0 0.0
      %1585 = vmatprep.subr.mxu0 0.0
      %1586 = vmatpush1.xpose.msra.mxu0 0.0
      %1587 = vmatprep.subr.mxu0 0.0
      %1588 = vmatpush1.xpose.msra.mxu0 0.0
      %1589 = vmatprep.subr.mxu0 0.0
      %1590 = vmatpush1.xpose.msra.mxu0 0.0
      %1591 = vmatprep.subr.mxu0 0.0
      %1592 = vmatpush1.xpose.msra.mxu0 0.0
      %1593 = vmatprep.subr.mxu0 0.0
      %1594 = vmatpush1.xpose.msra.mxu0 0.0
      %1595 = vmatprep.subr.mxu0 0.0
      %1596 = vmatpush1.xpose.msra.mxu0 0.0
      %1597 = vmatprep.subr.mxu0 0.0
      %1598 = vmatpush1.xpose.msra.mxu0 0.0
      %1599 = vmatprep.subr.mxu0 0.0
      %1600 = vmatpush1.xpose.msra.mxu0 0.0
      %1601 = vmatprep.subr.mxu0 0.0
      %1602 = vmatpush1.xpose.msra.mxu0 0.0
      %1603 = vmatprep.subr.mxu0 0.0
      %1604 = vmatpush1.xpose.msra.mxu0 0.0
      %1605 = vmatprep.subr.mxu0 0.0
      %1606 = vmatpush1.xpose.msra.mxu0 0.0
      %1607 = vmatprep.subr.mxu0 0.0
      %1608 = vmatpush1.xpose.msra.mxu0 0.0
      %1609 = vmatprep.subr.mxu0 0.0
      %1610 = vmatpush1.xpose.msra.mxu0 0.0
      %1611 = vmatprep.subr.mxu0 0.0
      %1612 = vmatpush1.xpose.msra.mxu0 0.0
      %1613 = vmatprep.mubr.f32.mxu0 %v988
      %1614 = vmatmul.mubr.f32.gmra.mrb[0].mxu0 %v987
      %v1615 = vpop.f32.mrb[0].mxu0
      %v1616 = vadd.f32 0.0, %v1615
      %v1617 = vpop.f32.mrb[0].mxu0
      %1618 = vmatprep.mubr.f32.mxu0 %v990
      %1619 = vmatmul.mubr.f32.gmra.mrb[0].mxu0 %v989
      %v1620 = vpop.f32.mrb[0].mxu0
      %v1621 = vadd.f32 0.0, %v1620
      %v1622 = vpop.f32.mrb[0].mxu0
      %1623 = vmatprep.mubr.f32.mxu0 %v992
      %1624 = vmatmul.mubr.f32.gmra.mrb[0].mxu0 %v991
      %v1625 = vpop.f32.mrb[0].mxu0
      %v1626 = vadd.f32 0.0, %v1625
      %v1627 = vpop.f32.mrb[0].mxu0
      %1628 = vmatprep.mubr.f32.mxu0 %v994
      %1629 = vmatmul.mubr.f32.gmra.mrb[0].mxu0 %v993
      %v1630 = vpop.f32.mrb[0].mxu0
      %v1631 = vadd.f32 0.0, %v1630
      %v1632 = vpop.f32.mrb[0].mxu0
      %1633 = vmatprep.mubr.f32.mxu0 1.0
      %1634 = vmatmul.mubr.f32.gmra.mrb[0].mxu0 1.0
      %v1635 = vpop.f32.mrb[0].mxu0
      %v1636 = vadd.f32 0.0, %v1635
      %v1637 = vpop.f32.mrb[0].mxu0
      %1638 = vdwg.mxu0
      %1639 = vmatprep.subr.mxu0 %v839
      %1640 = vmatpush1.xpose.msra.mxu0 %v838
      %1641 = vmatprep.subr.mxu0 %v841
      %1642 = vmatpush1.xpose.msra.mxu0 %v840
      %1643 = vmatprep.subr.mxu0 %v843
      %1644 = vmatpush1.xpose.msra.mxu0 %v842
      %1645 = vmatprep.subr.mxu0 %v845
      %1646 = vmatpush1.xpose.msra.mxu0 %v844
      %1647 = vmatprep.subr.mxu0 %v847
      %1648 = vmatpush1.xpose.msra.mxu0 %v846
      %1649 = vmatprep.subr.mxu0 %v849
      %1650 = vmatpush1.xpose.msra.mxu0 %v848
      %1651 = vmatprep.subr.mxu0 %v851
      %1652 = vmatpush1.xpose.msra.mxu0 %v850
      %1653 = vmatprep.subr.mxu0 %v853
      %1654 = vmatpush1.xpose.msra.mxu0 %v852
      %1655 = vmatprep.subr.mxu0 %v855
      %1656 = vmatpush1.xpose.msra.mxu0 %v854
      %1657 = vmatprep.subr.mxu0 %v857
      %1658 = vmatpush1.xpose.msra.mxu0 %v856
      %1659 = vmatprep.subr.mxu0 %v859
      %1660 = vmatpush1.xpose.msra.mxu0 %v858
      %1661 = vmatprep.subr.mxu0 %v861
      %1662 = vmatpush1.xpose.msra.mxu0 %v860
      %1663 = vmatprep.subr.mxu0 %v863
      %1664 = vmatpush1.xpose.msra.mxu0 %v862
      %1665 = vmatprep.subr.mxu0 %v865
      %1666 = vmatpush1.xpose.msra.mxu0 %v864
      %1667 = vmatprep.subr.mxu0 %v867
      %1668 = vmatpush1.xpose.msra.mxu0 %v866
      %1669 = vmatprep.subr.mxu0 %v869
      %1670 = vmatpush1.xpose.msra.mxu0 %v868
      %1671 = vmatprep.subr.mxu0 0.0
      %1672 = vmatpush1.xpose.msra.mxu0 0.0
      %1673 = vmatprep.subr.mxu0 0.0
      %1674 = vmatpush1.xpose.msra.mxu0 0.0
      %1675 = vmatprep.subr.mxu0 0.0
      %1676 = vmatpush1.xpose.msra.mxu0 0.0
      %1677 = vmatprep.subr.mxu0 0.0
      %1678 = vmatpush1.xpose.msra.mxu0 0.0
      %1679 = vmatprep.subr.mxu0 0.0
      %1680 = vmatpush1.xpose.msra.mxu0 0.0
      %1681 = vmatprep.subr.mxu0 0.0
      %1682 = vmatpush1.xpose.msra.mxu0 0.0
      %1683 = vmatprep.subr.mxu0 0.0
      %1684 = vmatpush1.xpose.msra.mxu0 0.0
      %1685 = vmatprep.subr.mxu0 0.0
      %1686 = vmatpush1.xpose.msra.mxu0 0.0
      %1687 = vmatprep.subr.mxu0 0.0
      %1688 = vmatpush1.xpose.msra.mxu0 0.0
      %1689 = vmatprep.subr.mxu0 0.0
      %1690 = vmatpush1.xpose.msra.mxu0 0.0
      %1691 = vmatprep.subr.mxu0 0.0
      %1692 = vmatpush1.xpose.msra.mxu0 0.0
      %1693 = vmatprep.subr.mxu0 0.0
      %1694 = vmatpush1.xpose.msra.mxu0 0.0
      %1695 = vmatprep.subr.mxu0 0.0
      %1696 = vmatpush1.xpose.msra.mxu0 0.0
      %1697 = vmatprep.subr.mxu0 0.0
      %1698 = vmatpush1.xpose.msra.mxu0 0.0
      %1699 = vmatprep.subr.mxu0 0.0
      %1700 = vmatpush1.xpose.msra.mxu0 0.0
      %1701 = vmatprep.subr.mxu0 0.0
      %1702 = vmatpush1.xpose.msra.mxu0 0.0
      %1703 = vmatprep.mubr.f32.mxu0 %v337
      %1704 = vmatmul.mubr.f32.gmra.mrb[0].mxu0 %v336
      %v1705 = vpop.f32.mrb[0].mxu0
      %v1706 = vadd.f32 %v1616, %v1705
      %v1707 = vpop.f32.mrb[0].mxu0
      %1708 = vmatprep.mubr.f32.mxu0 %v339
      %1709 = vmatmul.mubr.f32.gmra.mrb[0].mxu0 %v338
      %v1710 = vpop.f32.mrb[0].mxu0
      %v1711 = vadd.f32 %v1621, %v1710
      %v1712 = vpop.f32.mrb[0].mxu0
      %1713 = vmatprep.mubr.f32.mxu0 %v341
      %1714 = vmatmul.mubr.f32.gmra.mrb[0].mxu0 %v340
      %v1715 = vpop.f32.mrb[0].mxu0
      %v1716 = vadd.f32 %v1626, %v1715
      %v1717 = vpop.f32.mrb[0].mxu0
      %1718 = vmatprep.mubr.f32.mxu0 %v343
      %1719 = vmatmul.mubr.f32.gmra.mrb[0].mxu0 %v342
      %v1720 = vpop.f32.mrb[0].mxu0
      %v1721 = vadd.f32 %v1631, %v1720
      %v1722 = vpop.f32.mrb[0].mxu0
      %1723 = vmatprep.mubr.f32.mxu0 1.0
      %1724 = vmatmul.mubr.f32.gmra.mrb[0].mxu0 1.0
      %v1725 = vpop.f32.mrb[0].mxu0
      %v1726 = vadd.f32 %v1636, %v1725
      %v1727 = vpop.f32.mrb[0].mxu0
      %1728 = vdwg.mxu0
      %v1729 = vld [vmem:[%s270 + $0x20] sm:$0xff]
      %v1730 = vld [vmem:[%s270 + $0x28] sm:$0xff]
      %v1731 = vld [vmem:[%s270 + $0x60] sm:$0xff]
      %v1732 = vld [vmem:[%s270 + $0x68] sm:$0xff]
      %v1733 = vld [vmem:[%s270 + $0xa0] sm:$0xff]
      %v1734 = vld [vmem:[%s270 + $0xa8] sm:$0xff]
      %v1735 = vld [vmem:[%s270 + $0xe0] sm:$0xff]
      %v1736 = vld [vmem:[%s270 + $0xe8] sm:$0xff]
      %1737 = vmatprep.subr.mxu0 %v1730
      %1738 = vmatpush1.msra.mxu0 %v1729
      %1739 = vmatprep.subr.mxu0 %v1732
      %1740 = vmatpush1.msra.mxu0 %v1731
      %1741 = vmatprep.subr.mxu0 %v1734
      %1742 = vmatpush1.msra.mxu0 %v1733
      %1743 = vmatprep.subr.mxu0 %v1736
      %1744 = vmatpush1.msra.mxu0 %v1735
      %1745 = vmatprep.subr.mxu0 %v427
      %1746 = vmatpush1.msra.mxu0 %v427
      %1747 = vmatprep.subr.mxu0 0.0
      %1748 = vmatpush1.msra.mxu0 0.0
      %1749 = vmatprep.subr.mxu0 0.0
      %1750 = vmatpush1.msra.mxu0 0.0
      %1751 = vmatprep.subr.mxu0 0.0
      %1752 = vmatpush1.msra.mxu0 0.0
      %1753 = vmatprep.subr.mxu0 0.0
      %1754 = vmatpush1.msra.mxu0 0.0
      %1755 = vmatprep.subr.mxu0 0.0
      %1756 = vmatpush1.msra.mxu0 0.0
      %1757 = vmatprep.subr.mxu0 0.0
      %1758 = vmatpush1.msra.mxu0 0.0
      %1759 = vmatprep.subr.mxu0 0.0
      %1760 = vmatpush1.msra.mxu0 0.0
      %1761 = vmatprep.subr.mxu0 0.0
      %1762 = vmatpush1.msra.mxu0 0.0
      %1763 = vmatprep.subr.mxu0 0.0
      %1764 = vmatpush1.msra.mxu0 0.0
      %1765 = vmatprep.subr.mxu0 0.0
      %1766 = vmatpush1.msra.mxu0 0.0
      %1767 = vmatprep.subr.mxu0 0.0
      %1768 = vmatpush1.msra.mxu0 0.0
      %1769 = vmatprep.subr.mxu0 0.0
      %1770 = vmatpush1.msra.mxu0 0.0
      %1771 = vmatprep.subr.mxu0 0.0
      %1772 = vmatpush1.msra.mxu0 0.0
      %1773 = vmatprep.subr.mxu0 0.0
      %1774 = vmatpush1.msra.mxu0 0.0
      %1775 = vmatprep.subr.mxu0 0.0
      %1776 = vmatpush1.msra.mxu0 0.0
      %1777 = vmatprep.subr.mxu0 0.0
      %1778 = vmatpush1.msra.mxu0 0.0
      %1779 = vmatprep.subr.mxu0 0.0
      %1780 = vmatpush1.msra.mxu0 0.0
      %1781 = vmatprep.subr.mxu0 0.0
      %1782 = vmatpush1.msra.mxu0 0.0
      %1783 = vmatprep.subr.mxu0 0.0
      %1784 = vmatpush1.msra.mxu0 0.0
      %1785 = vmatprep.subr.mxu0 0.0
      %1786 = vmatpush1.msra.mxu0 0.0
      %1787 = vmatprep.subr.mxu0 0.0
      %1788 = vmatpush1.msra.mxu0 0.0
      %1789 = vmatprep.subr.mxu0 0.0
      %1790 = vmatpush1.msra.mxu0 0.0
      %1791 = vmatprep.subr.mxu0 0.0
      %1792 = vmatpush1.msra.mxu0 0.0
      %1793 = vmatprep.subr.mxu0 0.0
      %1794 = vmatpush1.msra.mxu0 0.0
      %1795 = vmatprep.subr.mxu0 0.0
      %1796 = vmatpush1.msra.mxu0 0.0
      %1797 = vmatprep.subr.mxu0 0.0
      %1798 = vmatpush1.msra.mxu0 0.0
      %1799 = vmatprep.subr.mxu0 0.0
      %1800 = vmatpush1.msra.mxu0 0.0
      %1801 = vmatprep.mubr.f32.mxu0 0.0
      %1802 = vmatmul.mubr.f32.gmra.mrb[0].mxu0 %v378
      %v1803 = vpop.f32.mrb[0].mxu0
      %v1804 = vadd.f32 0.0, %v1803
      %v1805 = vpop.f32.mrb[0].mxu0
      %v1806 = vadd.f32 0.0, %v1805
      %1807 = vmatprep.mubr.f32.mxu0 0.0
      %1808 = vmatmul.mubr.f32.gmra.mrb[0].mxu0 %v381
      %v1809 = vpop.f32.mrb[0].mxu0
      %v1810 = vadd.f32 0.0, %v1809
      %v1811 = vpop.f32.mrb[0].mxu0
      %v1812 = vadd.f32 0.0, %v1811
      %1813 = vmatprep.mubr.f32.mxu0 0.0
      %1814 = vmatmul.mubr.f32.gmra.mrb[0].mxu0 %v384
      %v1815 = vpop.f32.mrb[0].mxu0
      %v1816 = vadd.f32 0.0, %v1815
      %v1817 = vpop.f32.mrb[0].mxu0
      %v1818 = vadd.f32 0.0, %v1817
      %1819 = vmatprep.mubr.f32.mxu0 0.0
      %1820 = vmatmul.mubr.f32.gmra.mrb[0].mxu0 %v387
      %v1821 = vpop.f32.mrb[0].mxu0
      %v1822 = vadd.f32 0.0, %v1821
      %v1823 = vpop.f32.mrb[0].mxu0
      %v1824 = vadd.f32 0.0, %v1823
      %1825 = vmatprep.mubr.f32.mxu0 0.0
      %1826 = vmatmul.mubr.f32.gmra.mrb[0].mxu0 %v390
      %v1827 = vpop.f32.mrb[0].mxu0
      %v1828 = vadd.f32 0.0, %v1827
      %v1829 = vpop.f32.mrb[0].mxu0
      %v1830 = vadd.f32 0.0, %v1829
      %1831 = vmatprep.mubr.f32.mxu0 0.0
      %1832 = vmatmul.mubr.f32.gmra.mrb[0].mxu0 %v393
      %v1833 = vpop.f32.mrb[0].mxu0
      %v1834 = vadd.f32 0.0, %v1833
      %v1835 = vpop.f32.mrb[0].mxu0
      %v1836 = vadd.f32 0.0, %v1835
      %1837 = vmatprep.mubr.f32.mxu0 0.0
      %1838 = vmatmul.mubr.f32.gmra.mrb[0].mxu0 %v396
      %v1839 = vpop.f32.mrb[0].mxu0
      %v1840 = vadd.f32 0.0, %v1839
      %v1841 = vpop.f32.mrb[0].mxu0
      %v1842 = vadd.f32 0.0, %v1841
      %1843 = vmatprep.mubr.f32.mxu0 0.0
      %1844 = vmatmul.mubr.f32.gmra.mrb[0].mxu0 %v399
      %v1845 = vpop.f32.mrb[0].mxu0
      %v1846 = vadd.f32 0.0, %v1845
      %v1847 = vpop.f32.mrb[0].mxu0
      %v1848 = vadd.f32 0.0, %v1847
      %1849 = vmatprep.mubr.f32.mxu0 0.0
      %1850 = vmatmul.mubr.f32.gmra.mrb[0].mxu0 %v402
      %v1851 = vpop.f32.mrb[0].mxu0
      %v1852 = vadd.f32 0.0, %v1851
      %v1853 = vpop.f32.mrb[0].mxu0
      %v1854 = vadd.f32 0.0, %v1853
      %1855 = vmatprep.mubr.f32.mxu0 0.0
      %1856 = vmatmul.mubr.f32.gmra.mrb[0].mxu0 %v405
      %v1857 = vpop.f32.mrb[0].mxu0
      %v1858 = vadd.f32 0.0, %v1857
      %v1859 = vpop.f32.mrb[0].mxu0
      %v1860 = vadd.f32 0.0, %v1859
      %1861 = vmatprep.mubr.f32.mxu0 0.0
      %1862 = vmatmul.mubr.f32.gmra.mrb[0].mxu0 %v408
      %v1863 = vpop.f32.mrb[0].mxu0
      %v1864 = vadd.f32 0.0, %v1863
      %v1865 = vpop.f32.mrb[0].mxu0
      %v1866 = vadd.f32 0.0, %v1865
      %1867 = vmatprep.mubr.f32.mxu0 0.0
      %1868 = vmatmul.mubr.f32.gmra.mrb[0].mxu0 %v411
      %v1869 = vpop.f32.mrb[0].mxu0
      %v1870 = vadd.f32 0.0, %v1869
      %v1871 = vpop.f32.mrb[0].mxu0
      %v1872 = vadd.f32 0.0, %v1871
      %1873 = vmatprep.mubr.f32.mxu0 0.0
      %1874 = vmatmul.mubr.f32.gmra.mrb[0].mxu0 %v414
      %v1875 = vpop.f32.mrb[0].mxu0
      %v1876 = vadd.f32 0.0, %v1875
      %v1877 = vpop.f32.mrb[0].mxu0
      %v1878 = vadd.f32 0.0, %v1877
      %1879 = vmatprep.mubr.f32.mxu0 0.0
      %1880 = vmatmul.mubr.f32.gmra.mrb[0].mxu0 %v417
      %v1881 = vpop.f32.mrb[0].mxu0
      %v1882 = vadd.f32 0.0, %v1881
      %v1883 = vpop.f32.mrb[0].mxu0
      %v1884 = vadd.f32 0.0, %v1883
      %1885 = vmatprep.mubr.f32.mxu0 0.0
      %1886 = vmatmul.mubr.f32.gmra.mrb[0].mxu0 %v420
      %v1887 = vpop.f32.mrb[0].mxu0
      %v1888 = vadd.f32 0.0, %v1887
      %v1889 = vpop.f32.mrb[0].mxu0
      %v1890 = vadd.f32 0.0, %v1889
      %1891 = vmatprep.mubr.f32.mxu0 0.0
      %1892 = vmatmul.mubr.f32.gmra.mrb[0].mxu0 %v423
      %v1893 = vpop.f32.mrb[0].mxu0
      %v1894 = vadd.f32 0.0, %v1893
      %v1895 = vpop.f32.mrb[0].mxu0
      %v1896 = vadd.f32 0.0, %v1895
      %1897 = vdwg.mxu0
      %v1898 = vmax.f32 %v1804, %v1816
      %v1899 = vmax.f32 %v1810, %v1822
      %v1900 = vmax.f32 %v1898, %v1828
      %v1901 = vmax.f32 %v1899, %v1834
      %v1902 = vmax.f32 %v1900, %v1840
      %v1903 = vmax.f32 %v1901, %v1846
      %v1904 = vmax.f32 %v1902, %v1852
      %v1905 = vmax.f32 %v1903, %v1858
      %v1906 = vmax.f32 %v1904, %v1864
      %v1907 = vmax.f32 %v1905, %v1870
      %v1908 = vmax.f32 %v1906, %v1876
      %v1909 = vmax.f32 %v1907, %v1882
      %v1910 = vmax.f32 %v1908, %v1888
      %v1911 = vmax.f32 %v1909, %v1894
      %v1912 = vmax.f32 %v1910, %v1911
      %v1913 = vrot.slane %v1912, 4
      %v1914 = vmax.f32 %v1912, %v1913
      %v1915 = vrot.slane %v1914, 2
      %v1916 = vmax.f32 %v1914, %v1915
      %v1917 = vrot.slane %v1916, 1
      %v1918 = vmax.f32 %v1916, %v1917
      %v1919 = vmax.f32 %v1806, %v1818
      %v1920 = vmax.f32 %v1812, %v1824
      %v1921 = vmax.f32 %v1919, %v1830
      %v1922 = vmax.f32 %v1920, %v1836
      %v1923 = vmax.f32 %v1921, %v1842
      %v1924 = vmax.f32 %v1922, %v1848
      %v1925 = vmax.f32 %v1923, %v1854
      %v1926 = vmax.f32 %v1924, %v1860
      %v1927 = vmax.f32 %v1925, %v1866
      %v1928 = vmax.f32 %v1926, %v1872
      %v1929 = vmax.f32 %v1927, %v1878
      %v1930 = vmax.f32 %v1928, %v1884
      %v1931 = vmax.f32 %v1929, %v1890
      %v1932 = vmax.f32 %v1930, %v1896
      %v1933 = vmax.f32 %v1931, %v1932
      %v1934 = vrot.slane %v1933, 4
      %v1935 = vmax.f32 %v1933, %v1934
      %v1936 = vrot.slane %v1935, 2
      %v1937 = vmax.f32 %v1935, %v1936
      %v1938 = vrot.slane %v1937, 1
      %v1939 = vmax.f32 %v1937, %v1938
      %vm1940 = vcmp.ge.f32.partialorder %v1804, %v1918
      %vm1941 = vcmp.ge.f32.partialorder %v1806, %v1939
      %vm1942 = vcmp.ge.f32.partialorder %v1810, %v1918
      %vm1943 = vcmp.ge.f32.partialorder %v1812, %v1939
      %vm1944 = vcmp.ge.f32.partialorder %v1816, %v1918
      %vm1945 = vcmp.ge.f32.partialorder %v1818, %v1939
      %vm1946 = vcmp.ge.f32.partialorder %v1822, %v1918
      %vm1947 = vcmp.ge.f32.partialorder %v1824, %v1939
      %vm1948 = vcmp.ge.f32.partialorder %v1828, %v1918
      %vm1949 = vcmp.ge.f32.partialorder %v1830, %v1939
      %vm1950 = vcmp.ge.f32.partialorder %v1834, %v1918
      %vm1951 = vcmp.ge.f32.partialorder %v1836, %v1939
      %vm1952 = vcmp.ge.f32.partialorder %v1840, %v1918
      %vm1953 = vcmp.ge.f32.partialorder %v1842, %v1939
      %vm1954 = vcmp.ge.f32.partialorder %v1846, %v1918
      %vm1955 = vcmp.ge.f32.partialorder %v1848, %v1939
      %vm1956 = vcmp.ge.f32.partialorder %v1852, %v1918
      %vm1957 = vcmp.ge.f32.partialorder %v1854, %v1939
      %vm1958 = vcmp.ge.f32.partialorder %v1858, %v1918
      %vm1959 = vcmp.ge.f32.partialorder %v1860, %v1939
      %vm1960 = vcmp.ge.f32.partialorder %v1864, %v1918
      %vm1961 = vcmp.ge.f32.partialorder %v1866, %v1939
      %vm1962 = vcmp.ge.f32.partialorder %v1870, %v1918
      %vm1963 = vcmp.ge.f32.partialorder %v1872, %v1939
      %vm1964 = vcmp.ge.f32.partialorder %v1876, %v1918
      %vm1965 = vcmp.ge.f32.partialorder %v1878, %v1939
      %vm1966 = vcmp.ge.f32.partialorder %v1882, %v1918
      %vm1967 = vcmp.ge.f32.partialorder %v1884, %v1939
      %vm1968 = vcmp.ge.f32.partialorder %v1888, %v1918
      %vm1969 = vcmp.ge.f32.partialorder %v1890, %v1939
      %vm1970 = vcmp.ge.f32.partialorder %v1894, %v1918
      %vm1971 = vcmp.ge.f32.partialorder %v1896, %v1939
      %v1972 = vsel %vm1940, %v320, 128
      %v1973 = vsel %vm1941, %v320, 128
      %v1974 = vsel %vm1942, %v321, 128
      %v1975 = vsel %vm1943, %v321, 128
      %v1976 = vsel %vm1944, %v322, 128
      %v1977 = vsel %vm1945, %v322, 128
      %v1978 = vsel %vm1946, %v323, 128
      %v1979 = vsel %vm1947, %v323, 128
      %v1980 = vsel %vm1948, %v324, 128
      %v1981 = vsel %vm1949, %v324, 128
      %v1982 = vsel %vm1950, %v325, 128
      %v1983 = vsel %vm1951, %v325, 128
      %v1984 = vsel %vm1952, %v326, 128
      %v1985 = vsel %vm1953, %v326, 128
      %v1986 = vsel %vm1954, %v327, 128
      %v1987 = vsel %vm1955, %v327, 128
      %v1988 = vsel %vm1956, %v328, 128
      %v1989 = vsel %vm1957, %v328, 128
      %v1990 = vsel %vm1958, %v329, 128
      %v1991 = vsel %vm1959, %v329, 128
      %v1992 = vsel %vm1960, %v330, 128
      %v1993 = vsel %vm1961, %v330, 128
      %v1994 = vsel %vm1962, %v331, 128
      %v1995 = vsel %vm1963, %v331, 128
      %v1996 = vsel %vm1964, %v332, 128
      %v1997 = vsel %vm1965, %v332, 128
      %v1998 = vsel %vm1966, %v333, 128
      %v1999 = vsel %vm1967, %v333, 128
      %v2000 = vsel %vm1968, %v334, 128
      %v2001 = vsel %vm1969, %v334, 128
      %v2002 = vsel %vm1970, %v335, 128
      %v2003 = vsel %vm1971, %v335, 128
      %vm2004 = vcmp.lt.s32.totalorder %v1972, %v1976
      %v2005 = vsel %vm2004, %v1972, %v1976
      %vm2006 = vcmp.lt.s32.totalorder %v1974, %v1978
      %v2007 = vsel %vm2006, %v1974, %v1978
      %vm2008 = vcmp.lt.s32.totalorder %v2005, %v1980
      %v2009 = vsel %vm2008, %v2005, %v1980
      %vm2010 = vcmp.lt.s32.totalorder %v2007, %v1982
      %v2011 = vsel %vm2010, %v2007, %v1982
      %vm2012 = vcmp.lt.s32.totalorder %v2009, %v1984
      %v2013 = vsel %vm2012, %v2009, %v1984
      %vm2014 = vcmp.lt.s32.totalorder %v2011, %v1986
      %v2015 = vsel %vm2014, %v2011, %v1986
      %vm2016 = vcmp.lt.s32.totalorder %v2013, %v1988
      %v2017 = vsel %vm2016, %v2013, %v1988
      %vm2018 = vcmp.lt.s32.totalorder %v2015, %v1990
      %v2019 = vsel %vm2018, %v2015, %v1990
      %vm2020 = vcmp.lt.s32.totalorder %v2017, %v1992
      %v2021 = vsel %vm2020, %v2017, %v1992
      %vm2022 = vcmp.lt.s32.totalorder %v2019, %v1994
      %v2023 = vsel %vm2022, %v2019, %v1994
      %vm2024 = vcmp.lt.s32.totalorder %v2021, %v1996
      %v2025 = vsel %vm2024, %v2021, %v1996
      %vm2026 = vcmp.lt.s32.totalorder %v2023, %v1998
      %v2027 = vsel %vm2026, %v2023, %v1998
      %vm2028 = vcmp.lt.s32.totalorder %v2025, %v2000
      %v2029 = vsel %vm2028, %v2025, %v2000
      %vm2030 = vcmp.lt.s32.totalorder %v2027, %v2002
      %v2031 = vsel %vm2030, %v2027, %v2002
      %vm2032 = vcmp.lt.s32.totalorder %v2029, %v2031
      %v2033 = vsel %vm2032, %v2029, %v2031
      %v2034 = vrot.slane %v2033, 4
      %vm2035 = vcmp.lt.s32.totalorder %v2033, %v2034
      %v2036 = vsel %vm2035, %v2033, %v2034
      %v2037 = vrot.slane %v2036, 2
      %vm2038 = vcmp.lt.s32.totalorder %v2036, %v2037
      %v2039 = vsel %vm2038, %v2036, %v2037
      %v2040 = vrot.slane %v2039, 1
      %vm2041 = vcmp.lt.s32.totalorder %v2039, %v2040
      %v2042 = vsel %vm2041, %v2039, %v2040
      %vm2043 = vcmp.lt.s32.totalorder %v1973, %v1977
      %v2044 = vsel %vm2043, %v1973, %v1977
      %vm2045 = vcmp.lt.s32.totalorder %v1975, %v1979
      %v2046 = vsel %vm2045, %v1975, %v1979
      %vm2047 = vcmp.lt.s32.totalorder %v2044, %v1981
      %v2048 = vsel %vm2047, %v2044, %v1981
      %vm2049 = vcmp.lt.s32.totalorder %v2046, %v1983
      %v2050 = vsel %vm2049, %v2046, %v1983
      %vm2051 = vcmp.lt.s32.totalorder %v2048, %v1985
      %v2052 = vsel %vm2051, %v2048, %v1985
      %vm2053 = vcmp.lt.s32.totalorder %v2050, %v1987
      %v2054 = vsel %vm2053, %v2050, %v1987
      %vm2055 = vcmp.lt.s32.totalorder %v2052, %v1989
      %v2056 = vsel %vm2055, %v2052, %v1989
      %vm2057 = vcmp.lt.s32.totalorder %v2054, %v1991
      %v2058 = vsel %vm2057, %v2054, %v1991
      %vm2059 = vcmp.lt.s32.totalorder %v2056, %v1993
      %v2060 = vsel %vm2059, %v2056, %v1993
      %vm2061 = vcmp.lt.s32.totalorder %v2058, %v1995
      %v2062 = vsel %vm2061, %v2058, %v1995
      %vm2063 = vcmp.lt.s32.totalorder %v2060, %v1997
      %v2064 = vsel %vm2063, %v2060, %v1997
      %vm2065 = vcmp.lt.s32.totalorder %v2062, %v1999
      %v2066 = vsel %vm2065, %v2062, %v1999
      %vm2067 = vcmp.lt.s32.totalorder %v2064, %v2001
      %v2068 = vsel %vm2067, %v2064, %v2001
      %vm2069 = vcmp.lt.s32.totalorder %v2066, %v2003
      %v2070 = vsel %vm2069, %v2066, %v2003
      %vm2071 = vcmp.lt.s32.totalorder %v2068, %v2070
      %v2072 = vsel %vm2071, %v2068, %v2070
      %v2073 = vrot.slane %v2072, 4
      %vm2074 = vcmp.lt.s32.totalorder %v2072, %v2073
      %v2075 = vsel %vm2074, %v2072, %v2073
      %v2076 = vrot.slane %v2075, 2
      %vm2077 = vcmp.lt.s32.totalorder %v2075, %v2076
      %v2078 = vsel %vm2077, %v2075, %v2076
      %v2079 = vrot.slane %v2078, 1
      %vm2080 = vcmp.lt.s32.totalorder %v2078, %v2079
      %v2081 = vsel %vm2080, %v2078, %v2079
      %vm2082 = vcmp.eq.s32.totalorder %v320, %v2042
      %vm2083 = vcmp.eq.s32.totalorder %v320, %v2081
      %vm2084 = vcmp.eq.s32.totalorder %v321, %v2042
      %vm2085 = vcmp.eq.s32.totalorder %v321, %v2081
      %vm2086 = vcmp.eq.s32.totalorder %v322, %v2042
      %vm2087 = vcmp.eq.s32.totalorder %v322, %v2081
      %vm2088 = vcmp.eq.s32.totalorder %v323, %v2042
      %vm2089 = vcmp.eq.s32.totalorder %v323, %v2081
      %vm2090 = vcmp.eq.s32.totalorder %v324, %v2042
      %vm2091 = vcmp.eq.s32.totalorder %v324, %v2081
      %vm2092 = vcmp.eq.s32.totalorder %v325, %v2042
      %vm2093 = vcmp.eq.s32.totalorder %v325, %v2081
      %vm2094 = vcmp.eq.s32.totalorder %v326, %v2042
      %vm2095 = vcmp.eq.s32.totalorder %v326, %v2081
      %vm2096 = vcmp.eq.s32.totalorder %v327, %v2042
      %vm2097 = vcmp.eq.s32.totalorder %v327, %v2081
      %vm2098 = vcmp.eq.s32.totalorder %v328, %v2042
      %vm2099 = vcmp.eq.s32.totalorder %v328, %v2081
      %vm2100 = vcmp.eq.s32.totalorder %v329, %v2042
      %vm2101 = vcmp.eq.s32.totalorder %v329, %v2081
      %vm2102 = vcmp.eq.s32.totalorder %v330, %v2042
      %vm2103 = vcmp.eq.s32.totalorder %v330, %v2081
      %vm2104 = vcmp.eq.s32.totalorder %v331, %v2042
      %vm2105 = vcmp.eq.s32.totalorder %v331, %v2081
      %vm2106 = vcmp.eq.s32.totalorder %v332, %v2042
      %vm2107 = vcmp.eq.s32.totalorder %v332, %v2081
      %vm2108 = vcmp.eq.s32.totalorder %v333, %v2042
      %vm2109 = vcmp.eq.s32.totalorder %v333, %v2081
      %vm2110 = vcmp.eq.s32.totalorder %v334, %v2042
      %vm2111 = vcmp.eq.s32.totalorder %v334, %v2081
      %vm2112 = vcmp.eq.s32.totalorder %v335, %v2042
      %vm2113 = vcmp.eq.s32.totalorder %v335, %v2081
      %v2114 = vsel %vm2082, 1, 0
      %v2115 = vsel %vm2083, 1, 0
      %v2116 = vsel %vm2084, 1, 0
      %v2117 = vsel %vm2085, 1, 0
      %v2118 = vsel %vm2086, 1, 0
      %v2119 = vsel %vm2087, 1, 0
      %v2120 = vsel %vm2088, 1, 0
      %v2121 = vsel %vm2089, 1, 0
      %v2122 = vsel %vm2090, 1, 0
      %v2123 = vsel %vm2091, 1, 0
      %v2124 = vsel %vm2092, 1, 0
      %v2125 = vsel %vm2093, 1, 0
      %v2126 = vsel %vm2094, 1, 0
      %v2127 = vsel %vm2095, 1, 0
      %v2128 = vsel %vm2096, 1, 0
      %v2129 = vsel %vm2097, 1, 0
      %v2130 = vsel %vm2098, 1, 0
      %v2131 = vsel %vm2099, 1, 0
      %v2132 = vsel %vm2100, 1, 0
      %v2133 = vsel %vm2101, 1, 0
      %v2134 = vsel %vm2102, 1, 0
      %v2135 = vsel %vm2103, 1, 0
      %v2136 = vsel %vm2104, 1, 0
      %v2137 = vsel %vm2105, 1, 0
      %v2138 = vsel %vm2106, 1, 0
      %v2139 = vsel %vm2107, 1, 0
      %v2140 = vsel %vm2108, 1, 0
      %v2141 = vsel %vm2109, 1, 0
      %v2142 = vsel %vm2110, 1, 0
      %v2143 = vsel %vm2111, 1, 0
      %v2144 = vsel %vm2112, 1, 0
      %v2145 = vsel %vm2113, 1, 0
      %v2146 = vcvt.s32.f32 %v2114
      %v2147 = vcvt.s32.f32 %v2115
      %v2148 = vcvt.s32.f32 %v2116
      %v2149 = vcvt.s32.f32 %v2117
      %v2150 = vcvt.s32.f32 %v2118
      %v2151 = vcvt.s32.f32 %v2119
      %v2152 = vcvt.s32.f32 %v2120
      %v2153 = vcvt.s32.f32 %v2121
      %v2154 = vcvt.s32.f32 %v2122
      %v2155 = vcvt.s32.f32 %v2123
      %v2156 = vcvt.s32.f32 %v2124
      %v2157 = vcvt.s32.f32 %v2125
      %v2158 = vcvt.s32.f32 %v2126
      %v2159 = vcvt.s32.f32 %v2127
      %v2160 = vcvt.s32.f32 %v2128
      %v2161 = vcvt.s32.f32 %v2129
      %v2162 = vcvt.s32.f32 %v2130
      %v2163 = vcvt.s32.f32 %v2131
      %v2164 = vcvt.s32.f32 %v2132
      %v2165 = vcvt.s32.f32 %v2133
      %v2166 = vcvt.s32.f32 %v2134
      %v2167 = vcvt.s32.f32 %v2135
      %v2168 = vcvt.s32.f32 %v2136
      %v2169 = vcvt.s32.f32 %v2137
      %v2170 = vcvt.s32.f32 %v2138
      %v2171 = vcvt.s32.f32 %v2139
      %v2172 = vcvt.s32.f32 %v2140
      %v2173 = vcvt.s32.f32 %v2141
      %v2174 = vcvt.s32.f32 %v2142
      %v2175 = vcvt.s32.f32 %v2143
      %v2176 = vcvt.s32.f32 %v2144
      %v2177 = vcvt.s32.f32 %v2145
      %2178 = vmatprep.subr.mxu0 %v2147
      %2179 = vmatpush1.msra.mxu0 %v2146
      %2180 = vmatprep.subr.mxu0 %v2149
      %2181 = vmatpush1.msra.mxu0 %v2148
      %2182 = vmatprep.subr.mxu0 %v2151
      %2183 = vmatpush1.msra.mxu0 %v2150
      %2184 = vmatprep.subr.mxu0 %v2153
      %2185 = vmatpush1.msra.mxu0 %v2152
      %2186 = vmatprep.subr.mxu0 %v2155
      %2187 = vmatpush1.msra.mxu0 %v2154
      %2188 = vmatprep.subr.mxu0 %v2157
      %2189 = vmatpush1.msra.mxu0 %v2156
      %2190 = vmatprep.subr.mxu0 %v2159
      %2191 = vmatpush1.msra.mxu0 %v2158
      %2192 = vmatprep.subr.mxu0 %v2161
      %2193 = vmatpush1.msra.mxu0 %v2160
      %2194 = vmatprep.subr.mxu0 %v2163
      %2195 = vmatpush1.msra.mxu0 %v2162
      %2196 = vmatprep.subr.mxu0 %v2165
      %2197 = vmatpush1.msra.mxu0 %v2164
      %2198 = vmatprep.subr.mxu0 %v2167
      %2199 = vmatpush1.msra.mxu0 %v2166
      %2200 = vmatprep.subr.mxu0 %v2169
      %2201 = vmatpush1.msra.mxu0 %v2168
      %2202 = vmatprep.subr.mxu0 %v2171
      %2203 = vmatpush1.msra.mxu0 %v2170
      %2204 = vmatprep.subr.mxu0 %v2173
      %2205 = vmatpush1.msra.mxu0 %v2172
      %2206 = vmatprep.subr.mxu0 %v2175
      %2207 = vmatpush1.msra.mxu0 %v2174
      %2208 = vmatprep.subr.mxu0 %v2177
      %2209 = vmatpush1.msra.mxu0 %v2176
      %2210 = vmatprep.subr.mxu0 0.0
      %2211 = vmatpush1.msra.mxu0 0.0
      %2212 = vmatprep.subr.mxu0 0.0
      %2213 = vmatpush1.msra.mxu0 0.0
      %2214 = vmatprep.subr.mxu0 0.0
      %2215 = vmatpush1.msra.mxu0 0.0
      %2216 = vmatprep.subr.mxu0 0.0
      %2217 = vmatpush1.msra.mxu0 0.0
      %2218 = vmatprep.subr.mxu0 0.0
      %2219 = vmatpush1.msra.mxu0 0.0
      %2220 = vmatprep.subr.mxu0 0.0
      %2221 = vmatpush1.msra.mxu0 0.0
      %2222 = vmatprep.subr.mxu0 0.0
      %2223 = vmatpush1.msra.mxu0 0.0
      %2224 = vmatprep.subr.mxu0 0.0
      %2225 = vmatpush1.msra.mxu0 0.0
      %2226 = vmatprep.subr.mxu0 0.0
      %2227 = vmatpush1.msra.mxu0 0.0
      %2228 = vmatprep.subr.mxu0 0.0
      %2229 = vmatpush1.msra.mxu0 0.0
      %2230 = vmatprep.subr.mxu0 0.0
      %2231 = vmatpush1.msra.mxu0 0.0
      %2232 = vmatprep.subr.mxu0 0.0
      %2233 = vmatpush1.msra.mxu0 0.0
      %2234 = vmatprep.subr.mxu0 0.0
      %2235 = vmatpush1.msra.mxu0 0.0
      %2236 = vmatprep.subr.mxu0 0.0
      %2237 = vmatpush1.msra.mxu0 0.0
      %2238 = vmatprep.subr.mxu0 0.0
      %2239 = vmatpush1.msra.mxu0 0.0
      %2240 = vmatprep.subr.mxu0 0.0
      %2241 = vmatpush1.msra.mxu0 0.0
      %2242 = vmatprep.mubr.f32.mxu0 0.0
      %2243 = vmatmul.mubr.f32.gmra.mrb[0].mxu0 %v314
      %v2244 = vpop.f32.mrb[0].mxu0
      %v2245 = vadd.f32 0.0, %v2244
      %v2246 = vpop.f32.mrb[0].mxu0
      %v2247 = vadd.f32 0.0, %v2246
      %2248 = vmatprep.mubr.f32.mxu0 0.0
      %2249 = vmatmul.mubr.f32.gmra.mrb[0].mxu0 %v315
      %v2250 = vpop.f32.mrb[0].mxu0
      %v2251 = vadd.f32 0.0, %v2250
      %v2252 = vpop.f32.mrb[0].mxu0
      %v2253 = vadd.f32 0.0, %v2252
      %2254 = vmatprep.mubr.f32.mxu0 0.0
      %2255 = vmatmul.mubr.f32.gmra.mrb[0].mxu0 %v316
      %v2256 = vpop.f32.mrb[0].mxu0
      %v2257 = vadd.f32 0.0, %v2256
      %v2258 = vpop.f32.mrb[0].mxu0
      %v2259 = vadd.f32 0.0, %v2258
      %2260 = vmatprep.mubr.f32.mxu0 0.0
      %2261 = vmatmul.mubr.f32.gmra.mrb[0].mxu0 %v317
      %v2262 = vpop.f32.mrb[0].mxu0
      %v2263 = vadd.f32 0.0, %v2262
      %v2264 = vpop.f32.mrb[0].mxu0
      %v2265 = vadd.f32 0.0, %v2264
      %2266 = vdwg.mxu0
      %2267 = vst [vmem:[%s282 + $0x20] sm:$0xff] %v2245
      %2268 = vst [vmem:[%s282 + $0x28] sm:$0xff] %v2247
      %2269 = vst [vmem:[%s282 + $0x60] sm:$0xff] %v2251
      %2270 = vst [vmem:[%s282 + $0x68] sm:$0xff] %v2253
      %2271 = vst [vmem:[%s282 + $0xa0] sm:$0xff] %v2257
      %2272 = vst [vmem:[%s282 + $0xa8] sm:$0xff] %v2259
      %2273 = vst [vmem:[%s282 + $0xe0] sm:$0xff] %v2263
      %2274 = vst [vmem:[%s282 + $0xe8] sm:$0xff] %v2265
      %v2275 = vcombine.low %v2042, %v2081
      %v2277 = vunpack.c.l.s4 1966171168
      %v2278 = vunpack.c.0.s8 %v2277
      %v2279 = vlaneseq
      %v2280 = vshrl.u32 %v2279, 7
      %v2281 = vsub.s32 %v2278, %v2280
      %v2282 = vrot.slane %v2275, %v2281
      %v2284 = vunpack.c.l.s4 1966171168
      %v2285 = vunpack.c.0.s8 %v2284
      %v2286 = vlaneseq
      %v2287 = vshrl.u32 %v2286, 7
      %v2288 = vsub.s32 %v2285, %v2287
      %v2289 = vrot.slane %v2282, %v2288
      %2290 = vst.msk [vmem:[%s293 + $0x4] sm:$0x3] %vm985, %v2289
      %2291 = vmatprep.subr.mxu0 %v2147
      %2292 = vmatpush1.xpose.msra.mxu0 %v2146
      %2293 = vmatprep.subr.mxu0 %v2149
      %2294 = vmatpush1.xpose.msra.mxu0 %v2148
      %2295 = vmatprep.subr.mxu0 %v2151
      %2296 = vmatpush1.xpose.msra.mxu0 %v2150
      %2297 = vmatprep.subr.mxu0 %v2153
      %2298 = vmatpush1.xpose.msra.mxu0 %v2152
      %2299 = vmatprep.subr.mxu0 %v2155
      %2300 = vmatpush1.xpose.msra.mxu0 %v2154
      %2301 = vmatprep.subr.mxu0 %v2157
      %2302 = vmatpush1.xpose.msra.mxu0 %v2156
      %2303 = vmatprep.subr.mxu0 %v2159
      %2304 = vmatpush1.xpose.msra.mxu0 %v2158
      %2305 = vmatprep.subr.mxu0 %v2161
      %2306 = vmatpush1.xpose.msra.mxu0 %v2160
      %2307 = vmatprep.subr.mxu0 %v2163
      %2308 = vmatpush1.xpose.msra.mxu0 %v2162
      %2309 = vmatprep.subr.mxu0 %v2165
      %2310 = vmatpush1.xpose.msra.mxu0 %v2164
      %2311 = vmatprep.subr.mxu0 %v2167
      %2312 = vmatpush1.xpose.msra.mxu0 %v2166
      %2313 = vmatprep.subr.mxu0 %v2169
      %2314 = vmatpush1.xpose.msra.mxu0 %v2168
      %2315 = vmatprep.subr.mxu0 %v2171
      %2316 = vmatpush1.xpose.msra.mxu0 %v2170
      %2317 = vmatprep.subr.mxu0 %v2173
      %2318 = vmatpush1.xpose.msra.mxu0 %v2172
      %2319 = vmatprep.subr.mxu0 %v2175
      %2320 = vmatpush1.xpose.msra.mxu0 %v2174
      %2321 = vmatprep.subr.mxu0 %v2177
      %2322 = vmatpush1.xpose.msra.mxu0 %v2176
      %2323 = vmatprep.subr.mxu0 0.0
      %2324 = vmatpush1.xpose.msra.mxu0 0.0
      %2325 = vmatprep.subr.mxu0 0.0
      %2326 = vmatpush1.xpose.msra.mxu0 0.0
      %2327 = vmatprep.subr.mxu0 0.0
      %2328 = vmatpush1.xpose.msra.mxu0 0.0
      %2329 = vmatprep.subr.mxu0 0.0
      %2330 = vmatpush1.xpose.msra.mxu0 0.0
      %2331 = vmatprep.subr.mxu0 0.0
      %2332 = vmatpush1.xpose.msra.mxu0 0.0
      %2333 = vmatprep.subr.mxu0 0.0
      %2334 = vmatpush1.xpose.msra.mxu0 0.0
      %2335 = vmatprep.subr.mxu0 0.0
      %2336 = vmatpush1.xpose.msra.mxu0 0.0
      %2337 = vmatprep.subr.mxu0 0.0
      %2338 = vmatpush1.xpose.msra.mxu0 0.0
      %2339 = vmatprep.subr.mxu0 0.0
      %2340 = vmatpush1.xpose.msra.mxu0 0.0
      %2341 = vmatprep.subr.mxu0 0.0
      %2342 = vmatpush1.xpose.msra.mxu0 0.0
      %2343 = vmatprep.subr.mxu0 0.0
      %2344 = vmatpush1.xpose.msra.mxu0 0.0
      %2345 = vmatprep.subr.mxu0 0.0
      %2346 = vmatpush1.xpose.msra.mxu0 0.0
      %2347 = vmatprep.subr.mxu0 0.0
      %2348 = vmatpush1.xpose.msra.mxu0 0.0
      %2349 = vmatprep.subr.mxu0 0.0
      %2350 = vmatpush1.xpose.msra.mxu0 0.0
      %2351 = vmatprep.subr.mxu0 0.0
      %2352 = vmatpush1.xpose.msra.mxu0 0.0
      %2353 = vmatprep.subr.mxu0 0.0
      %2354 = vmatpush1.xpose.msra.mxu0 0.0
      %2355 = vmatprep.mubr.f32.mxu0 %v1730
      %2356 = vmatmul.mubr.f32.gmra.mrb[0].mxu0 %v1729
      %v2357 = vpop.f32.mrb[0].mxu0
      %v2358 = vadd.f32 0.0, %v2357
      %v2359 = vpop.f32.mrb[0].mxu0
      %2360 = vmatprep.mubr.f32.mxu0 %v1732
      %2361 = vmatmul.mubr.f32.gmra.mrb[0].mxu0 %v1731
      %v2362 = vpop.f32.mrb[0].mxu0
      %v2363 = vadd.f32 0.0, %v2362
      %v2364 = vpop.f32.mrb[0].mxu0
      %2365 = vmatprep.mubr.f32.mxu0 %v1734
      %2366 = vmatmul.mubr.f32.gmra.mrb[0].mxu0 %v1733
      %v2367 = vpop.f32.mrb[0].mxu0
      %v2368 = vadd.f32 0.0, %v2367
      %v2369 = vpop.f32.mrb[0].mxu0
      %2370 = vmatprep.mubr.f32.mxu0 %v1736
      %2371 = vmatmul.mubr.f32.gmra.mrb[0].mxu0 %v1735
      %v2372 = vpop.f32.mrb[0].mxu0
      %v2373 = vadd.f32 0.0, %v2372
      %v2374 = vpop.f32.mrb[0].mxu0
      %2375 = vmatprep.mubr.f32.mxu0 1.0
      %2376 = vmatmul.mubr.f32.gmra.mrb[0].mxu0 1.0
      %v2377 = vpop.f32.mrb[0].mxu0
      %v2378 = vadd.f32 0.0, %v2377
      %v2379 = vpop.f32.mrb[0].mxu0
      %2380 = vdwg.mxu0
      %v2381 = vadd.f32 %v1706, %v2358
      %v2382 = vadd.f32 %v1711, %v2363
      %v2383 = vadd.f32 %v1716, %v2368
      %v2384 = vadd.f32 %v1721, %v2373
      %v2385 = vadd.f32 %v1726, %v2378
      %v2386 = vld [vmem:[%s270 + $0x30] sm:$0xff]
      %v2387 = vld [vmem:[%s270 + $0x38] sm:$0xff]
      %v2388 = vld [vmem:[%s270 + $0x70] sm:$0xff]
      %v2389 = vld [vmem:[%s270 + $0x78] sm:$0xff]
      %v2390 = vld [vmem:[%s270 + $0xb0] sm:$0xff]
      %v2391 = vld [vmem:[%s270 + $0xb8] sm:$0xff]
      %v2392 = vld [vmem:[%s270 + $0xf0] sm:$0xff]
      %v2393 = vld [vmem:[%s270 + $0xf8] sm:$0xff]
      %2394 = vmatprep.subr.mxu0 %v2387
      %2395 = vmatpush1.msra.mxu0 %v2386
      %2396 = vmatprep.subr.mxu0 %v2389
      %2397 = vmatpush1.msra.mxu0 %v2388
      %2398 = vmatprep.subr.mxu0 %v2391
      %2399 = vmatpush1.msra.mxu0 %v2390
      %2400 = vmatprep.subr.mxu0 %v2393
      %2401 = vmatpush1.msra.mxu0 %v2392
      %2402 = vmatprep.subr.mxu0 %v427
      %2403 = vmatpush1.msra.mxu0 %v427
      %2404 = vmatprep.subr.mxu0 0.0
      %2405 = vmatpush1.msra.mxu0 0.0
      %2406 = vmatprep.subr.mxu0 0.0
      %2407 = vmatpush1.msra.mxu0 0.0
      %2408 = vmatprep.subr.mxu0 0.0
      %2409 = vmatpush1.msra.mxu0 0.0
      %2410 = vmatprep.subr.mxu0 0.0
      %2411 = vmatpush1.msra.mxu0 0.0
      %2412 = vmatprep.subr.mxu0 0.0
      %2413 = vmatpush1.msra.mxu0 0.0
      %2414 = vmatprep.subr.mxu0 0.0
      %2415 = vmatpush1.msra.mxu0 0.0
      %2416 = vmatprep.subr.mxu0 0.0
      %2417 = vmatpush1.msra.mxu0 0.0
      %2418 = vmatprep.subr.mxu0 0.0
      %2419 = vmatpush1.msra.mxu0 0.0
      %2420 = vmatprep.subr.mxu0 0.0
      %2421 = vmatpush1.msra.mxu0 0.0
      %2422 = vmatprep.subr.mxu0 0.0
      %2423 = vmatpush1.msra.mxu0 0.0
      %2424 = vmatprep.subr.mxu0 0.0
      %2425 = vmatpush1.msra.mxu0 0.0
      %2426 = vmatprep.subr.mxu0 0.0
      %2427 = vmatpush1.msra.mxu0 0.0
      %2428 = vmatprep.subr.mxu0 0.0
      %2429 = vmatpush1.msra.mxu0 0.0
      %2430 = vmatprep.subr.mxu0 0.0
      %2431 = vmatpush1.msra.mxu0 0.0
      %2432 = vmatprep.subr.mxu0 0.0
      %2433 = vmatpush1.msra.mxu0 0.0
      %2434 = vmatprep.subr.mxu0 0.0
      %2435 = vmatpush1.msra.mxu0 0.0
      %2436 = vmatprep.subr.mxu0 0.0
      %2437 = vmatpush1.msra.mxu0 0.0
      %2438 = vmatprep.subr.mxu0 0.0
      %2439 = vmatpush1.msra.mxu0 0.0
      %2440 = vmatprep.subr.mxu0 0.0
      %2441 = vmatpush1.msra.mxu0 0.0
      %2442 = vmatprep.subr.mxu0 0.0
      %2443 = vmatpush1.msra.mxu0 0.0
      %2444 = vmatprep.subr.mxu0 0.0
      %2445 = vmatpush1.msra.mxu0 0.0
      %2446 = vmatprep.subr.mxu0 0.0
      %2447 = vmatpush1.msra.mxu0 0.0
      %2448 = vmatprep.subr.mxu0 0.0
      %2449 = vmatpush1.msra.mxu0 0.0
      %2450 = vmatprep.subr.mxu0 0.0
      %2451 = vmatpush1.msra.mxu0 0.0
      %2452 = vmatprep.subr.mxu0 0.0
      %2453 = vmatpush1.msra.mxu0 0.0
      %2454 = vmatprep.subr.mxu0 0.0
      %2455 = vmatpush1.msra.mxu0 0.0
      %2456 = vmatprep.subr.mxu0 0.0
      %2457 = vmatpush1.msra.mxu0 0.0
      %2458 = vmatprep.mubr.f32.mxu0 0.0
      %2459 = vmatmul.mubr.f32.gmra.mrb[0].mxu0 %v378
      %v2460 = vpop.f32.mrb[0].mxu0
      %v2461 = vadd.f32 0.0, %v2460
      %v2462 = vpop.f32.mrb[0].mxu0
      %v2463 = vadd.f32 0.0, %v2462
      %2464 = vmatprep.mubr.f32.mxu0 0.0
      %2465 = vmatmul.mubr.f32.gmra.mrb[0].mxu0 %v381
      %v2466 = vpop.f32.mrb[0].mxu0
      %v2467 = vadd.f32 0.0, %v2466
      %v2468 = vpop.f32.mrb[0].mxu0
      %v2469 = vadd.f32 0.0, %v2468
      %2470 = vmatprep.mubr.f32.mxu0 0.0
      %2471 = vmatmul.mubr.f32.gmra.mrb[0].mxu0 %v384
      %v2472 = vpop.f32.mrb[0].mxu0
      %v2473 = vadd.f32 0.0, %v2472
      %v2474 = vpop.f32.mrb[0].mxu0
      %v2475 = vadd.f32 0.0, %v2474
      %2476 = vmatprep.mubr.f32.mxu0 0.0
      %2477 = vmatmul.mubr.f32.gmra.mrb[0].mxu0 %v387
      %v2478 = vpop.f32.mrb[0].mxu0
      %v2479 = vadd.f32 0.0, %v2478
      %v2480 = vpop.f32.mrb[0].mxu0
      %v2481 = vadd.f32 0.0, %v2480
      %2482 = vmatprep.mubr.f32.mxu0 0.0
      %2483 = vmatmul.mubr.f32.gmra.mrb[0].mxu0 %v390
      %v2484 = vpop.f32.mrb[0].mxu0
      %v2485 = vadd.f32 0.0, %v2484
      %v2486 = vpop.f32.mrb[0].mxu0
      %v2487 = vadd.f32 0.0, %v2486
      %2488 = vmatprep.mubr.f32.mxu0 0.0
      %2489 = vmatmul.mubr.f32.gmra.mrb[0].mxu0 %v393
      %v2490 = vpop.f32.mrb[0].mxu0
      %v2491 = vadd.f32 0.0, %v2490
      %v2492 = vpop.f32.mrb[0].mxu0
      %v2493 = vadd.f32 0.0, %v2492
      %2494 = vmatprep.mubr.f32.mxu0 0.0
      %2495 = vmatmul.mubr.f32.gmra.mrb[0].mxu0 %v396
      %v2496 = vpop.f32.mrb[0].mxu0
      %v2497 = vadd.f32 0.0, %v2496
      %v2498 = vpop.f32.mrb[0].mxu0
      %v2499 = vadd.f32 0.0, %v2498
      %2500 = vmatprep.mubr.f32.mxu0 0.0
      %2501 = vmatmul.mubr.f32.gmra.mrb[0].mxu0 %v399
      %v2502 = vpop.f32.mrb[0].mxu0
      %v2503 = vadd.f32 0.0, %v2502
      %v2504 = vpop.f32.mrb[0].mxu0
      %v2505 = vadd.f32 0.0, %v2504
      %2506 = vmatprep.mubr.f32.mxu0 0.0
      %2507 = vmatmul.mubr.f32.gmra.mrb[0].mxu0 %v402
      %v2508 = vpop.f32.mrb[0].mxu0
      %v2509 = vadd.f32 0.0, %v2508
      %v2510 = vpop.f32.mrb[0].mxu0
      %v2511 = vadd.f32 0.0, %v2510
      %2512 = vmatprep.mubr.f32.mxu0 0.0
      %2513 = vmatmul.mubr.f32.gmra.mrb[0].mxu0 %v405
      %v2514 = vpop.f32.mrb[0].mxu0
      %v2515 = vadd.f32 0.0, %v2514
      %v2516 = vpop.f32.mrb[0].mxu0
      %v2517 = vadd.f32 0.0, %v2516
      %2518 = vmatprep.mubr.f32.mxu0 0.0
      %2519 = vmatmul.mubr.f32.gmra.mrb[0].mxu0 %v408
      %v2520 = vpop.f32.mrb[0].mxu0
      %v2521 = vadd.f32 0.0, %v2520
      %v2522 = vpop.f32.mrb[0].mxu0
      %v2523 = vadd.f32 0.0, %v2522
      %2524 = vmatprep.mubr.f32.mxu0 0.0
      %2525 = vmatmul.mubr.f32.gmra.mrb[0].mxu0 %v411
      %v2526 = vpop.f32.mrb[0].mxu0
      %v2527 = vadd.f32 0.0, %v2526
      %v2528 = vpop.f32.mrb[0].mxu0
      %v2529 = vadd.f32 0.0, %v2528
      %2530 = vmatprep.mubr.f32.mxu0 0.0
      %2531 = vmatmul.mubr.f32.gmra.mrb[0].mxu0 %v414
      %v2532 = vpop.f32.mrb[0].mxu0
      %v2533 = vadd.f32 0.0, %v2532
      %v2534 = vpop.f32.mrb[0].mxu0
      %v2535 = vadd.f32 0.0, %v2534
      %2536 = vmatprep.mubr.f32.mxu0 0.0
      %2537 = vmatmul.mubr.f32.gmra.mrb[0].mxu0 %v417
      %v2538 = vpop.f32.mrb[0].mxu0
      %v2539 = vadd.f32 0.0, %v2538
      %v2540 = vpop.f32.mrb[0].mxu0
      %v2541 = vadd.f32 0.0, %v2540
      %2542 = vmatprep.mubr.f32.mxu0 0.0
      %2543 = vmatmul.mubr.f32.gmra.mrb[0].mxu0 %v420
      %v2544 = vpop.f32.mrb[0].mxu0
      %v2545 = vadd.f32 0.0, %v2544
      %v2546 = vpop.f32.mrb[0].mxu0
      %v2547 = vadd.f32 0.0, %v2546
      %2548 = vmatprep.mubr.f32.mxu0 0.0
      %2549 = vmatmul.mubr.f32.gmra.mrb[0].mxu0 %v423
      %v2550 = vpop.f32.mrb[0].mxu0
      %v2551 = vadd.f32 0.0, %v2550
      %v2552 = vpop.f32.mrb[0].mxu0
      %v2553 = vadd.f32 0.0, %v2552
      %2554 = vdwg.mxu0
      %v2555 = vmax.f32 %v2461, %v2473
      %v2556 = vmax.f32 %v2467, %v2479
      %v2557 = vmax.f32 %v2555, %v2485
      %v2558 = vmax.f32 %v2556, %v2491
      %v2559 = vmax.f32 %v2557, %v2497
      %v2560 = vmax.f32 %v2558, %v2503
      %v2561 = vmax.f32 %v2559, %v2509
      %v2562 = vmax.f32 %v2560, %v2515
      %v2563 = vmax.f32 %v2561, %v2521
      %v2564 = vmax.f32 %v2562, %v2527
      %v2565 = vmax.f32 %v2563, %v2533
      %v2566 = vmax.f32 %v2564, %v2539
      %v2567 = vmax.f32 %v2565, %v2545
      %v2568 = vmax.f32 %v2566, %v2551
      %v2569 = vmax.f32 %v2567, %v2568
      %v2570 = vrot.slane %v2569, 4
      %v2571 = vmax.f32 %v2569, %v2570
      %v2572 = vrot.slane %v2571, 2
      %v2573 = vmax.f32 %v2571, %v2572
      %v2574 = vrot.slane %v2573, 1
      %v2575 = vmax.f32 %v2573, %v2574
      %v2576 = vmax.f32 %v2463, %v2475
      %v2577 = vmax.f32 %v2469, %v2481
      %v2578 = vmax.f32 %v2576, %v2487
      %v2579 = vmax.f32 %v2577, %v2493
      %v2580 = vmax.f32 %v2578, %v2499
      %v2581 = vmax.f32 %v2579, %v2505
      %v2582 = vmax.f32 %v2580, %v2511
      %v2583 = vmax.f32 %v2581, %v2517
      %v2584 = vmax.f32 %v2582, %v2523
      %v2585 = vmax.f32 %v2583, %v2529
      %v2586 = vmax.f32 %v2584, %v2535
      %v2587 = vmax.f32 %v2585, %v2541
      %v2588 = vmax.f32 %v2586, %v2547
      %v2589 = vmax.f32 %v2587, %v2553
      %v2590 = vmax.f32 %v2588, %v2589
      %v2591 = vrot.slane %v2590, 4
      %v2592 = vmax.f32 %v2590, %v2591
      %v2593 = vrot.slane %v2592, 2
      %v2594 = vmax.f32 %v2592, %v2593
      %v2595 = vrot.slane %v2594, 1
      %v2596 = vmax.f32 %v2594, %v2595
      %vm2597 = vcmp.ge.f32.partialorder %v2461, %v2575
      %vm2598 = vcmp.ge.f32.partialorder %v2463, %v2596
      %vm2599 = vcmp.ge.f32.partialorder %v2467, %v2575
      %vm2600 = vcmp.ge.f32.partialorder %v2469, %v2596
      %vm2601 = vcmp.ge.f32.partialorder %v2473, %v2575
      %vm2602 = vcmp.ge.f32.partialorder %v2475, %v2596
      %vm2603 = vcmp.ge.f32.partialorder %v2479, %v2575
      %vm2604 = vcmp.ge.f32.partialorder %v2481, %v2596
      %vm2605 = vcmp.ge.f32.partialorder %v2485, %v2575
      %vm2606 = vcmp.ge.f32.partialorder %v2487, %v2596
      %vm2607 = vcmp.ge.f32.partialorder %v2491, %v2575
      %vm2608 = vcmp.ge.f32.partialorder %v2493, %v2596
      %vm2609 = vcmp.ge.f32.partialorder %v2497, %v2575
      %vm2610 = vcmp.ge.f32.partialorder %v2499, %v2596
      %vm2611 = vcmp.ge.f32.partialorder %v2503, %v2575
      %vm2612 = vcmp.ge.f32.partialorder %v2505, %v2596
      %vm2613 = vcmp.ge.f32.partialorder %v2509, %v2575
      %vm2614 = vcmp.ge.f32.partialorder %v2511, %v2596
      %vm2615 = vcmp.ge.f32.partialorder %v2515, %v2575
      %vm2616 = vcmp.ge.f32.partialorder %v2517, %v2596
      %vm2617 = vcmp.ge.f32.partialorder %v2521, %v2575
      %vm2618 = vcmp.ge.f32.partialorder %v2523, %v2596
      %vm2619 = vcmp.ge.f32.partialorder %v2527, %v2575
      %vm2620 = vcmp.ge.f32.partialorder %v2529, %v2596
      %vm2621 = vcmp.ge.f32.partialorder %v2533, %v2575
      %vm2622 = vcmp.ge.f32.partialorder %v2535, %v2596
      %vm2623 = vcmp.ge.f32.partialorder %v2539, %v2575
      %vm2624 = vcmp.ge.f32.partialorder %v2541, %v2596
      %vm2625 = vcmp.ge.f32.partialorder %v2545, %v2575
      %vm2626 = vcmp.ge.f32.partialorder %v2547, %v2596
      %vm2627 = vcmp.ge.f32.partialorder %v2551, %v2575
      %vm2628 = vcmp.ge.f32.partialorder %v2553, %v2596
      %v2629 = vsel %vm2597, %v320, 128
      %v2630 = vsel %vm2598, %v320, 128
      %v2631 = vsel %vm2599, %v321, 128
      %v2632 = vsel %vm2600, %v321, 128
      %v2633 = vsel %vm2601, %v322, 128
      %v2634 = vsel %vm2602, %v322, 128
      %v2635 = vsel %vm2603, %v323, 128
      %v2636 = vsel %vm2604, %v323, 128
      %v2637 = vsel %vm2605, %v324, 128
      %v2638 = vsel %vm2606, %v324, 128
      %v2639 = vsel %vm2607, %v325, 128
      %v2640 = vsel %vm2608, %v325, 128
      %v2641 = vsel %vm2609, %v326, 128
      %v2642 = vsel %vm2610, %v326, 128
      %v2643 = vsel %vm2611, %v327, 128
      %v2644 = vsel %vm2612, %v327, 128
      %v2645 = vsel %vm2613, %v328, 128
      %v2646 = vsel %vm2614, %v328, 128
      %v2647 = vsel %vm2615, %v329, 128
      %v2648 = vsel %vm2616, %v329, 128
      %v2649 = vsel %vm2617, %v330, 128
      %v2650 = vsel %vm2618, %v330, 128
      %v2651 = vsel %vm2619, %v331, 128
      %v2652 = vsel %vm2620, %v331, 128
      %v2653 = vsel %vm2621, %v332, 128
      %v2654 = vsel %vm2622, %v332, 128
      %v2655 = vsel %vm2623, %v333, 128
      %v2656 = vsel %vm2624, %v333, 128
      %v2657 = vsel %vm2625, %v334, 128
      %v2658 = vsel %vm2626, %v334, 128
      %v2659 = vsel %vm2627, %v335, 128
      %v2660 = vsel %vm2628, %v335, 128
      %vm2661 = vcmp.lt.s32.totalorder %v2629, %v2633
      %v2662 = vsel %vm2661, %v2629, %v2633
      %vm2663 = vcmp.lt.s32.totalorder %v2631, %v2635
      %v2664 = vsel %vm2663, %v2631, %v2635
      %vm2665 = vcmp.lt.s32.totalorder %v2662, %v2637
      %v2666 = vsel %vm2665, %v2662, %v2637
      %vm2667 = vcmp.lt.s32.totalorder %v2664, %v2639
      %v2668 = vsel %vm2667, %v2664, %v2639
      %vm2669 = vcmp.lt.s32.totalorder %v2666, %v2641
      %v2670 = vsel %vm2669, %v2666, %v2641
      %vm2671 = vcmp.lt.s32.totalorder %v2668, %v2643
      %v2672 = vsel %vm2671, %v2668, %v2643
      %vm2673 = vcmp.lt.s32.totalorder %v2670, %v2645
      %v2674 = vsel %vm2673, %v2670, %v2645
      %vm2675 = vcmp.lt.s32.totalorder %v2672, %v2647
      %v2676 = vsel %vm2675, %v2672, %v2647
      %vm2677 = vcmp.lt.s32.totalorder %v2674, %v2649
      %v2678 = vsel %vm2677, %v2674, %v2649
      %vm2679 = vcmp.lt.s32.totalorder %v2676, %v2651
      %v2680 = vsel %vm2679, %v2676, %v2651
      %vm2681 = vcmp.lt.s32.totalorder %v2678, %v2653
      %v2682 = vsel %vm2681, %v2678, %v2653
      %vm2683 = vcmp.lt.s32.totalorder %v2680, %v2655
      %v2684 = vsel %vm2683, %v2680, %v2655
      %vm2685 = vcmp.lt.s32.totalorder %v2682, %v2657
      %v2686 = vsel %vm2685, %v2682, %v2657
      %vm2687 = vcmp.lt.s32.totalorder %v2684, %v2659
      %v2688 = vsel %vm2687, %v2684, %v2659
      %vm2689 = vcmp.lt.s32.totalorder %v2686, %v2688
      %v2690 = vsel %vm2689, %v2686, %v2688
      %v2691 = vrot.slane %v2690, 4
      %vm2692 = vcmp.lt.s32.totalorder %v2690, %v2691
      %v2693 = vsel %vm2692, %v2690, %v2691
      %v2694 = vrot.slane %v2693, 2
      %vm2695 = vcmp.lt.s32.totalorder %v2693, %v2694
      %v2696 = vsel %vm2695, %v2693, %v2694
      %v2697 = vrot.slane %v2696, 1
      %vm2698 = vcmp.lt.s32.totalorder %v2696, %v2697
      %v2699 = vsel %vm2698, %v2696, %v2697
      %vm2700 = vcmp.lt.s32.totalorder %v2630, %v2634
      %v2701 = vsel %vm2700, %v2630, %v2634
      %vm2702 = vcmp.lt.s32.totalorder %v2632, %v2636
      %v2703 = vsel %vm2702, %v2632, %v2636
      %vm2704 = vcmp.lt.s32.totalorder %v2701, %v2638
      %v2705 = vsel %vm2704, %v2701, %v2638
      %vm2706 = vcmp.lt.s32.totalorder %v2703, %v2640
      %v2707 = vsel %vm2706, %v2703, %v2640
      %vm2708 = vcmp.lt.s32.totalorder %v2705, %v2642
      %v2709 = vsel %vm2708, %v2705, %v2642
      %vm2710 = vcmp.lt.s32.totalorder %v2707, %v2644
      %v2711 = vsel %vm2710, %v2707, %v2644
      %vm2712 = vcmp.lt.s32.totalorder %v2709, %v2646
      %v2713 = vsel %vm2712, %v2709, %v2646
      %vm2714 = vcmp.lt.s32.totalorder %v2711, %v2648
      %v2715 = vsel %vm2714, %v2711, %v2648
      %vm2716 = vcmp.lt.s32.totalorder %v2713, %v2650
      %v2717 = vsel %vm2716, %v2713, %v2650
      %vm2718 = vcmp.lt.s32.totalorder %v2715, %v2652
      %v2719 = vsel %vm2718, %v2715, %v2652
      %vm2720 = vcmp.lt.s32.totalorder %v2717, %v2654
      %v2721 = vsel %vm2720, %v2717, %v2654
      %vm2722 = vcmp.lt.s32.totalorder %v2719, %v2656
      %v2723 = vsel %vm2722, %v2719, %v2656
      %vm2724 = vcmp.lt.s32.totalorder %v2721, %v2658
      %v2725 = vsel %vm2724, %v2721, %v2658
      %vm2726 = vcmp.lt.s32.totalorder %v2723, %v2660
      %v2727 = vsel %vm2726, %v2723, %v2660
      %vm2728 = vcmp.lt.s32.totalorder %v2725, %v2727
      %v2729 = vsel %vm2728, %v2725, %v2727
      %v2730 = vrot.slane %v2729, 4
      %vm2731 = vcmp.lt.s32.totalorder %v2729, %v2730
      %v2732 = vsel %vm2731, %v2729, %v2730
      %v2733 = vrot.slane %v2732, 2
      %vm2734 = vcmp.lt.s32.totalorder %v2732, %v2733
      %v2735 = vsel %vm2734, %v2732, %v2733
      %v2736 = vrot.slane %v2735, 1
      %vm2737 = vcmp.lt.s32.totalorder %v2735, %v2736
      %v2738 = vsel %vm2737, %v2735, %v2736
      %vm2739 = vcmp.eq.s32.totalorder %v320, %v2699
      %vm2740 = vcmp.eq.s32.totalorder %v320, %v2738
      %vm2741 = vcmp.eq.s32.totalorder %v321, %v2699
      %vm2742 = vcmp.eq.s32.totalorder %v321, %v2738
      %vm2743 = vcmp.eq.s32.totalorder %v322, %v2699
      %vm2744 = vcmp.eq.s32.totalorder %v322, %v2738
      %vm2745 = vcmp.eq.s32.totalorder %v323, %v2699
      %vm2746 = vcmp.eq.s32.totalorder %v323, %v2738
      %vm2747 = vcmp.eq.s32.totalorder %v324, %v2699
      %vm2748 = vcmp.eq.s32.totalorder %v324, %v2738
      %vm2749 = vcmp.eq.s32.totalorder %v325, %v2699
      %vm2750 = vcmp.eq.s32.totalorder %v325, %v2738
      %vm2751 = vcmp.eq.s32.totalorder %v326, %v2699
      %vm2752 = vcmp.eq.s32.totalorder %v326, %v2738
      %vm2753 = vcmp.eq.s32.totalorder %v327, %v2699
      %vm2754 = vcmp.eq.s32.totalorder %v327, %v2738
      %vm2755 = vcmp.eq.s32.totalorder %v328, %v2699
      %vm2756 = vcmp.eq.s32.totalorder %v328, %v2738
      %vm2757 = vcmp.eq.s32.totalorder %v329, %v2699
      %vm2758 = vcmp.eq.s32.totalorder %v329, %v2738
      %vm2759 = vcmp.eq.s32.totalorder %v330, %v2699
      %vm2760 = vcmp.eq.s32.totalorder %v330, %v2738
      %vm2761 = vcmp.eq.s32.totalorder %v331, %v2699
      %vm2762 = vcmp.eq.s32.totalorder %v331, %v2738
      %vm2763 = vcmp.eq.s32.totalorder %v332, %v2699
      %vm2764 = vcmp.eq.s32.totalorder %v332, %v2738
      %vm2765 = vcmp.eq.s32.totalorder %v333, %v2699
      %vm2766 = vcmp.eq.s32.totalorder %v333, %v2738
      %vm2767 = vcmp.eq.s32.totalorder %v334, %v2699
      %vm2768 = vcmp.eq.s32.totalorder %v334, %v2738
      %vm2769 = vcmp.eq.s32.totalorder %v335, %v2699
      %vm2770 = vcmp.eq.s32.totalorder %v335, %v2738
      %v2771 = vsel %vm2739, 1, 0
      %v2772 = vsel %vm2740, 1, 0
      %v2773 = vsel %vm2741, 1, 0
      %v2774 = vsel %vm2742, 1, 0
      %v2775 = vsel %vm2743, 1, 0
      %v2776 = vsel %vm2744, 1, 0
      %v2777 = vsel %vm2745, 1, 0
      %v2778 = vsel %vm2746, 1, 0
      %v2779 = vsel %vm2747, 1, 0
      %v2780 = vsel %vm2748, 1, 0
      %v2781 = vsel %vm2749, 1, 0
      %v2782 = vsel %vm2750, 1, 0
      %v2783 = vsel %vm2751, 1, 0
      %v2784 = vsel %vm2752, 1, 0
      %v2785 = vsel %vm2753, 1, 0
      %v2786 = vsel %vm2754, 1, 0
      %v2787 = vsel %vm2755, 1, 0
      %v2788 = vsel %vm2756, 1, 0
      %v2789 = vsel %vm2757, 1, 0
      %v2790 = vsel %vm2758, 1, 0
      %v2791 = vsel %vm2759, 1, 0
      %v2792 = vsel %vm2760, 1, 0
      %v2793 = vsel %vm2761, 1, 0
      %v2794 = vsel %vm2762, 1, 0
      %v2795 = vsel %vm2763, 1, 0
      %v2796 = vsel %vm2764, 1, 0
      %v2797 = vsel %vm2765, 1, 0
      %v2798 = vsel %vm2766, 1, 0
      %v2799 = vsel %vm2767, 1, 0
      %v2800 = vsel %vm2768, 1, 0
      %v2801 = vsel %vm2769, 1, 0
      %v2802 = vsel %vm2770, 1, 0
      %v2803 = vcvt.s32.f32 %v2771
      %v2804 = vcvt.s32.f32 %v2772
      %v2805 = vcvt.s32.f32 %v2773
      %v2806 = vcvt.s32.f32 %v2774
      %v2807 = vcvt.s32.f32 %v2775
      %v2808 = vcvt.s32.f32 %v2776
      %v2809 = vcvt.s32.f32 %v2777
      %v2810 = vcvt.s32.f32 %v2778
      %v2811 = vcvt.s32.f32 %v2779
      %v2812 = vcvt.s32.f32 %v2780
      %v2813 = vcvt.s32.f32 %v2781
      %v2814 = vcvt.s32.f32 %v2782
      %v2815 = vcvt.s32.f32 %v2783
      %v2816 = vcvt.s32.f32 %v2784
      %v2817 = vcvt.s32.f32 %v2785
      %v2818 = vcvt.s32.f32 %v2786
      %v2819 = vcvt.s32.f32 %v2787
      %v2820 = vcvt.s32.f32 %v2788
      %v2821 = vcvt.s32.f32 %v2789
      %v2822 = vcvt.s32.f32 %v2790
      %v2823 = vcvt.s32.f32 %v2791
      %v2824 = vcvt.s32.f32 %v2792
      %v2825 = vcvt.s32.f32 %v2793
      %v2826 = vcvt.s32.f32 %v2794
      %v2827 = vcvt.s32.f32 %v2795
      %v2828 = vcvt.s32.f32 %v2796
      %v2829 = vcvt.s32.f32 %v2797
      %v2830 = vcvt.s32.f32 %v2798
      %v2831 = vcvt.s32.f32 %v2799
      %v2832 = vcvt.s32.f32 %v2800
      %v2833 = vcvt.s32.f32 %v2801
      %v2834 = vcvt.s32.f32 %v2802
      %2835 = vmatprep.subr.mxu0 %v2804
      %2836 = vmatpush1.msra.mxu0 %v2803
      %2837 = vmatprep.subr.mxu0 %v2806
      %2838 = vmatpush1.msra.mxu0 %v2805
      %2839 = vmatprep.subr.mxu0 %v2808
      %2840 = vmatpush1.msra.mxu0 %v2807
      %2841 = vmatprep.subr.mxu0 %v2810
      %2842 = vmatpush1.msra.mxu0 %v2809
      %2843 = vmatprep.subr.mxu0 %v2812
      %2844 = vmatpush1.msra.mxu0 %v2811
      %2845 = vmatprep.subr.mxu0 %v2814
      %2846 = vmatpush1.msra.mxu0 %v2813
      %2847 = vmatprep.subr.mxu0 %v2816
      %2848 = vmatpush1.msra.mxu0 %v2815
      %2849 = vmatprep.subr.mxu0 %v2818
      %2850 = vmatpush1.msra.mxu0 %v2817
      %2851 = vmatprep.subr.mxu0 %v2820
      %2852 = vmatpush1.msra.mxu0 %v2819
      %2853 = vmatprep.subr.mxu0 %v2822
      %2854 = vmatpush1.msra.mxu0 %v2821
      %2855 = vmatprep.subr.mxu0 %v2824
      %2856 = vmatpush1.msra.mxu0 %v2823
      %2857 = vmatprep.subr.mxu0 %v2826
      %2858 = vmatpush1.msra.mxu0 %v2825
      %2859 = vmatprep.subr.mxu0 %v2828
      %2860 = vmatpush1.msra.mxu0 %v2827
      %2861 = vmatprep.subr.mxu0 %v2830
      %2862 = vmatpush1.msra.mxu0 %v2829
      %2863 = vmatprep.subr.mxu0 %v2832
      %2864 = vmatpush1.msra.mxu0 %v2831
      %2865 = vmatprep.subr.mxu0 %v2834
      %2866 = vmatpush1.msra.mxu0 %v2833
      %2867 = vmatprep.subr.mxu0 0.0
      %2868 = vmatpush1.msra.mxu0 0.0
      %2869 = vmatprep.subr.mxu0 0.0
      %2870 = vmatpush1.msra.mxu0 0.0
      %2871 = vmatprep.subr.mxu0 0.0
      %2872 = vmatpush1.msra.mxu0 0.0
      %2873 = vmatprep.subr.mxu0 0.0
      %2874 = vmatpush1.msra.mxu0 0.0
      %2875 = vmatprep.subr.mxu0 0.0
      %2876 = vmatpush1.msra.mxu0 0.0
      %2877 = vmatprep.subr.mxu0 0.0
      %2878 = vmatpush1.msra.mxu0 0.0
      %2879 = vmatprep.subr.mxu0 0.0
      %2880 = vmatpush1.msra.mxu0 0.0
      %2881 = vmatprep.subr.mxu0 0.0
      %2882 = vmatpush1.msra.mxu0 0.0
      %2883 = vmatprep.subr.mxu0 0.0
      %2884 = vmatpush1.msra.mxu0 0.0
      %2885 = vmatprep.subr.mxu0 0.0
      %2886 = vmatpush1.msra.mxu0 0.0
      %2887 = vmatprep.subr.mxu0 0.0
      %2888 = vmatpush1.msra.mxu0 0.0
      %2889 = vmatprep.subr.mxu0 0.0
      %2890 = vmatpush1.msra.mxu0 0.0
      %2891 = vmatprep.subr.mxu0 0.0
      %2892 = vmatpush1.msra.mxu0 0.0
      %2893 = vmatprep.subr.mxu0 0.0
      %2894 = vmatpush1.msra.mxu0 0.0
      %2895 = vmatprep.subr.mxu0 0.0
      %2896 = vmatpush1.msra.mxu0 0.0
      %2897 = vmatprep.subr.mxu0 0.0
      %2898 = vmatpush1.msra.mxu0 0.0
      %2899 = vmatprep.mubr.f32.mxu0 0.0
      %2900 = vmatmul.mubr.f32.gmra.mrb[0].mxu0 %v314
      %v2901 = vpop.f32.mrb[0].mxu0
      %v2902 = vadd.f32 0.0, %v2901
      %v2903 = vpop.f32.mrb[0].mxu0
      %v2904 = vadd.f32 0.0, %v2903
      %2905 = vmatprep.mubr.f32.mxu0 0.0
      %2906 = vmatmul.mubr.f32.gmra.mrb[0].mxu0 %v315
      %v2907 = vpop.f32.mrb[0].mxu0
      %v2908 = vadd.f32 0.0, %v2907
      %v2909 = vpop.f32.mrb[0].mxu0
      %v2910 = vadd.f32 0.0, %v2909
      %2911 = vmatprep.mubr.f32.mxu0 0.0
      %2912 = vmatmul.mubr.f32.gmra.mrb[0].mxu0 %v316
      %v2913 = vpop.f32.mrb[0].mxu0
      %v2914 = vadd.f32 0.0, %v2913
      %v2915 = vpop.f32.mrb[0].mxu0
      %v2916 = vadd.f32 0.0, %v2915
      %2917 = vmatprep.mubr.f32.mxu0 0.0
      %2918 = vmatmul.mubr.f32.gmra.mrb[0].mxu0 %v317
      %v2919 = vpop.f32.mrb[0].mxu0
      %v2920 = vadd.f32 0.0, %v2919
      %v2921 = vpop.f32.mrb[0].mxu0
      %v2922 = vadd.f32 0.0, %v2921
      %2923 = vdwg.mxu0
      %2924 = vst [vmem:[%s282 + $0x30] sm:$0xff] %v2902
      %2925 = vst [vmem:[%s282 + $0x38] sm:$0xff] %v2904
      %2926 = vst [vmem:[%s282 + $0x70] sm:$0xff] %v2908
      %2927 = vst [vmem:[%s282 + $0x78] sm:$0xff] %v2910
      %2928 = vst [vmem:[%s282 + $0xb0] sm:$0xff] %v2914
      %2929 = vst [vmem:[%s282 + $0xb8] sm:$0xff] %v2916
      %2930 = vst [vmem:[%s282 + $0xf0] sm:$0xff] %v2920
      %2931 = vst [vmem:[%s282 + $0xf8] sm:$0xff] %v2922
      %v2932 = vcombine.low %v2699, %v2738
      %v2934 = vunpack.c.l.s4 1966171168
      %v2935 = vunpack.c.0.s8 %v2934
      %v2936 = vlaneseq
      %v2937 = vshrl.u32 %v2936, 7
      %v2938 = vsub.s32 %v2935, %v2937
      %v2939 = vrot.slane %v2932, %v2938
      %v2941 = vunpack.c.l.s4 1966171168
      %v2942 = vunpack.c.0.s8 %v2941
      %v2943 = vlaneseq
      %v2944 = vshrl.u32 %v2943, 7
      %v2945 = vsub.s32 %v2942, %v2944
      %v2946 = vrot.slane %v2939, %v2945
      %2947 = vst.msk [vmem:[%s293 + $0x6] sm:$0x3] %vm985, %v2946
      %2948 = vmatprep.subr.mxu0 %v2804
      %2949 = vmatpush1.xpose.msra.mxu0 %v2803
      %2950 = vmatprep.subr.mxu0 %v2806
      %2951 = vmatpush1.xpose.msra.mxu0 %v2805
      %2952 = vmatprep.subr.mxu0 %v2808
      %2953 = vmatpush1.xpose.msra.mxu0 %v2807
      %2954 = vmatprep.subr.mxu0 %v2810
      %2955 = vmatpush1.xpose.msra.mxu0 %v2809
      %2956 = vmatprep.subr.mxu0 %v2812
      %2957 = vmatpush1.xpose.msra.mxu0 %v2811
      %2958 = vmatprep.subr.mxu0 %v2814
      %2959 = vmatpush1.xpose.msra.mxu0 %v2813
      %2960 = vmatprep.subr.mxu0 %v2816
      %2961 = vmatpush1.xpose.msra.mxu0 %v2815
      %2962 = vmatprep.subr.mxu0 %v2818
      %2963 = vmatpush1.xpose.msra.mxu0 %v2817
      %2964 = vmatprep.subr.mxu0 %v2820
      %2965 = vmatpush1.xpose.msra.mxu0 %v2819
      %2966 = vmatprep.subr.mxu0 %v2822
      %2967 = vmatpush1.xpose.msra.mxu0 %v2821
      %2968 = vmatprep.subr.mxu0 %v2824
      %2969 = vmatpush1.xpose.msra.mxu0 %v2823
      %2970 = vmatprep.subr.mxu0 %v2826
      %2971 = vmatpush1.xpose.msra.mxu0 %v2825
      %2972 = vmatprep.subr.mxu0 %v2828
      %2973 = vmatpush1.xpose.msra.mxu0 %v2827
      %2974 = vmatprep.subr.mxu0 %v2830
      %2975 = vmatpush1.xpose.msra.mxu0 %v2829
      %2976 = vmatprep.subr.mxu0 %v2832
      %2977 = vmatpush1.xpose.msra.mxu0 %v2831
      %2978 = vmatprep.subr.mxu0 %v2834
      %2979 = vmatpush1.xpose.msra.mxu0 %v2833
      %2980 = vmatprep.subr.mxu0 0.0
      %2981 = vmatpush1.xpose.msra.mxu0 0.0
      %2982 = vmatprep.subr.mxu0 0.0
      %2983 = vmatpush1.xpose.msra.mxu0 0.0
      %2984 = vmatprep.subr.mxu0 0.0
      %2985 = vmatpush1.xpose.msra.mxu0 0.0
      %2986 = vmatprep.subr.mxu0 0.0
      %2987 = vmatpush1.xpose.msra.mxu0 0.0
      %2988 = vmatprep.subr.mxu0 0.0
      %2989 = vmatpush1.xpose.msra.mxu0 0.0
      %2990 = vmatprep.subr.mxu0 0.0
      %2991 = vmatpush1.xpose.msra.mxu0 0.0
      %2992 = vmatprep.subr.mxu0 0.0
      %2993 = vmatpush1.xpose.msra.mxu0 0.0
      %2994 = vmatprep.subr.mxu0 0.0
      %2995 = vmatpush1.xpose.msra.mxu0 0.0
      %2996 = vmatprep.subr.mxu0 0.0
      %2997 = vmatpush1.xpose.msra.mxu0 0.0
      %2998 = vmatprep.subr.mxu0 0.0
      %2999 = vmatpush1.xpose.msra.mxu0 0.0
      %3000 = vmatprep.subr.mxu0 0.0
      %3001 = vmatpush1.xpose.msra.mxu0 0.0
      %3002 = vmatprep.subr.mxu0 0.0
      %3003 = vmatpush1.xpose.msra.mxu0 0.0
      %3004 = vmatprep.subr.mxu0 0.0
      %3005 = vmatpush1.xpose.msra.mxu0 0.0
      %3006 = vmatprep.subr.mxu0 0.0
      %3007 = vmatpush1.xpose.msra.mxu0 0.0
      %3008 = vmatprep.subr.mxu0 0.0
      %3009 = vmatpush1.xpose.msra.mxu0 0.0
      %3010 = vmatprep.subr.mxu0 0.0
      %3011 = vmatpush1.xpose.msra.mxu0 0.0
      %3012 = vmatprep.mubr.f32.mxu0 %v2387
      %3013 = vmatmul.mubr.f32.gmra.mrb[0].mxu0 %v2386
      %v3014 = vpop.f32.mrb[0].mxu0
      %v3015 = vadd.f32 0.0, %v3014
      %v3016 = vpop.f32.mrb[0].mxu0
      %3017 = vmatprep.mubr.f32.mxu0 %v2389
      %3018 = vmatmul.mubr.f32.gmra.mrb[0].mxu0 %v2388
      %v3019 = vpop.f32.mrb[0].mxu0
      %v3020 = vadd.f32 0.0, %v3019
      %v3021 = vpop.f32.mrb[0].mxu0
      %3022 = vmatprep.mubr.f32.mxu0 %v2391
      %3023 = vmatmul.mubr.f32.gmra.mrb[0].mxu0 %v2390
      %v3024 = vpop.f32.mrb[0].mxu0
      %v3025 = vadd.f32 0.0, %v3024
      %v3026 = vpop.f32.mrb[0].mxu0
      %3027 = vmatprep.mubr.f32.mxu0 %v2393
      %3028 = vmatmul.mubr.f32.gmra.mrb[0].mxu0 %v2392
      %v3029 = vpop.f32.mrb[0].mxu0
      %v3030 = vadd.f32 0.0, %v3029
      %v3031 = vpop.f32.mrb[0].mxu0
      %3032 = vmatprep.mubr.f32.mxu0 1.0
      %3033 = vmatmul.mubr.f32.gmra.mrb[0].mxu0 1.0
      %v3034 = vpop.f32.mrb[0].mxu0
      %v3035 = vadd.f32 0.0, %v3034
      %v3036 = vpop.f32.mrb[0].mxu0
      %3037 = vdwg.mxu0
      %v3038 = vadd.f32 %v2381, %v3015
      %v3039 = vadd.f32 %v2382, %v3020
      %v3040 = vadd.f32 %v2383, %v3025
      %v3041 = vadd.f32 %v2384, %v3030
      %v3042 = vadd.f32 %v2385, %v3035
      %v3043 = vld [vmem:[%s304] sm:$0xff]
      %v3044 = vld [vmem:[%s304 + $0x8] sm:$0xff]
      %v3045 = vld [vmem:[%s304 + $0x10] sm:$0xff]
      %v3046 = vld [vmem:[%s304 + $0x18] sm:$0xff]
      %v3047 = vld [vmem:[%s304 + $0x20] sm:$0x1]
      %v3048 = vadd.f32 %v3043, %v3038
      %v3049 = vadd.f32 %v3044, %v3039
      %v3050 = vadd.f32 %v3045, %v3040
      %v3051 = vadd.f32 %v3046, %v3041
      %v3052 = vadd.f32 %v3047, %v3042
      %3053 = vst [vmem:[%s304] sm:$0xff] %v3048
      %3054 = vst [vmem:[%s304 + $0x8] sm:$0xff] %v3049
      %3055 = vst [vmem:[%s304 + $0x10] sm:$0xff] %v3050
      %3056 = vst [vmem:[%s304 + $0x18] sm:$0xff] %v3051
      %3057 = vst [vmem:[%s304 + $0x20] sm:$0x1] %v3052
      %s3058 = sadd.s32 %s22, %s23
      %s3059 = smul.u32 8, %s3058
      %p3060 = scmp.lt.s32.totalorder %s21, 1
      %s3061 = scalar_select %p3060, %s21, 1
      %p3062 = scmp.lt.s32.totalorder %s3059, 7
      %s3063 = scalar_select %p3062, %s3059, 7
      %s3064 = smul.addr %s3061, 32
      %s3065 = sadd.s32 %s3063, %s3064
      %s3066 = smul.addr %s3065, 8
      %s3067 = scalar_lea.vmem %s2, %s3066
      %s3068 = sadd.s32 %s22, %s23
      %s3069 = smul.u32 8, %s3068
      %p3070 = scmp.lt.s32.totalorder %s21, 1
      %s3071 = scalar_select %p3070, %s21, 1
      %p3072 = scmp.lt.s32.totalorder %s3069, 7
      %s3073 = scalar_select %p3072, %s3069, 7
      %s3074 = smul.addr %s3071, 8
      %s3075 = sadd.s32 %s3073, %s3074
      %s3076 = scalar_lea.vmem %s3, %s3075
      %p3077 = scmp.lt.s32.totalorder %s21, 1
      %s3078 = scalar_select %p3077, %s21, 1
      %p3079 = scmp.lt.s32.totalorder %s22, 0
      %s3080 = scalar_select %p3079, %s22, 0
      %s3081 = smul.addr %s3080, 5
      %s3082 = smul.addr %s3078, 5
      %s3083 = sadd.s32 %s3081, %s3082
      %s3084 = smul.addr %s3083, 8
      %s3085 = scalar_lea.vmem %s4, %s3084
      // Predicated region
      $region33: #{quantize_ema_forward.1} parent=27 // pred_check
        %p3086 = pneg %p108
      $region34: #{quantize_ema_forward.1} parent=27 // pred_check_branch
        %3088 = sbr.rel (%p3086) target = $region36
      $region35: #{quantize_ema_forward.1} parent=27 // pred_region
        %s3089 = sadd.s32 %s22, %s23
        %s3090 = smul.u32 8, %s3089
      $region36: #{quantize_ema_forward.1} parent=27 // pred_fallthru
        _
      // Predicated region
      $region37: #{quantize_ema_forward.1} parent=27 // pred_check
        %p3091 = pneg %p138
      $region38: #{quantize_ema_forward.1} parent=27 // pred_check_branch
        %3093 = sbr.rel (%p3091) target = $region40
      $region39: #{quantize_ema_forward.1} parent=27 // pred_region
        %s3094 = sadd.s32 %s22, %s23
        %s3095 = smul.u32 8, %s3094
      $region40: #{quantize_ema_forward.1} parent=27 // pred_fallthru
        _
      // Predicated region
      $region41: #{quantize_ema_forward.1} parent=27 // pred_check
        %p3096 = pneg %p166
      $region42: #{quantize_ema_forward.1} parent=27 // pred_check_branch
        %3098 = sbr.rel (%p3096) target = $region44
      $region43: #{quantize_ema_forward.1} parent=27 // pred_region
        _
      $region44: #{quantize_ema_forward.1} parent=27 // pred_fallthru
        _
    $region28: #{quantize_ema_forward.1} parent=5 // pred_fallthru
      _
    %p3099 = scmp.le.s32.totalorder 2, %s11
    // Predicated region
    $region45: #{quantize_ema_forward.1} parent=5 // pred_check
      %p3100 = pneg %p3099
    $region46: #{quantize_ema_forward.1} parent=5 // pred_check_branch
      %3102 = sbr.rel (%p3100) target = $region48
    $region47: #{quantize_ema_forward.1} parent=5 // pred_region
      %s3103 = ssub.s32 %s11, 2
      // Predicated region
      $region49: #{quantize_ema_forward.1} parent=47 // pred_check
        %p3104 = pneg %p114
      $region50: #{quantize_ema_forward.1} parent=47 // pred_check_branch
        %3106 = sbr.rel (%p3104) target = $region52
      $region51: #{quantize_ema_forward.1} parent=47 // pred_region
        %s3107 = sadd.s32 %s25, %s26
        %s3108 = smul.u32 8, %s3107
        %p3109 = scmp.lt.s32.totalorder %s24, 1
        %s3110 = scalar_select %p3109, %s24, 1
        %p3111 = scmp.lt.s32.totalorder %s3108, 7
        %s3112 = scalar_select %p3111, %s3108, 7
        %s3113 = smul.addr %s3110, 32
        %s3114 = sadd.s32 %s3112, %s3113
        %s3115 = smul.addr %s3114, 8
        %s3116 = scalar_lea.vmem %s2, %s3115
      $region52: #{quantize_ema_forward.1} parent=47 // pred_fallthru
        _
      // Predicated region
      $region53: #{quantize_ema_forward.1} parent=47 // pred_check
        %p3117 = pneg %p144
      $region54: #{quantize_ema_forward.1} parent=47 // pred_check_branch
        %3119 = sbr.rel (%p3117) target = $region56
      $region55: #{quantize_ema_forward.1} parent=47 // pred_region
        %s3120 = sadd.s32 %s25, %s26
        %s3121 = smul.u32 8, %s3120
        %p3122 = scmp.lt.s32.totalorder %s24, 1
        %s3123 = scalar_select %p3122, %s24, 1
        %p3124 = scmp.lt.s32.totalorder %s3121, 7
        %s3125 = scalar_select %p3124, %s3121, 7
        %s3126 = smul.addr %s3123, 8
        %s3127 = sadd.s32 %s3125, %s3126
        %s3128 = scalar_lea.vmem %s3, %s3127
      $region56: #{quantize_ema_forward.1} parent=47 // pred_fallthru
        _
      // Predicated region
      $region57: #{quantize_ema_forward.1} parent=47 // pred_check
        %p3129 = pneg %p172
      $region58: #{quantize_ema_forward.1} parent=47 // pred_check_branch
        %3131 = sbr.rel (%p3129) target = $region60
      $region59: #{quantize_ema_forward.1} parent=47 // pred_region
        %p3132 = scmp.lt.s32.totalorder %s24, 1
        %s3133 = scalar_select %p3132, %s24, 1
        %p3134 = scmp.lt.s32.totalorder %s25, 0
        %s3135 = scalar_select %p3134, %s25, 0
        %s3136 = smul.addr %s3135, 5
        %s3137 = smul.addr %s3133, 5
        %s3138 = sadd.s32 %s3136, %s3137
        %s3139 = smul.addr %s3138, 8
        %s3140 = scalar_lea.vmem %s4, %s3139
      $region60: #{quantize_ema_forward.1} parent=47 // pred_fallthru
        _
    $region48: #{quantize_ema_forward.1} parent=5 // pred_fallthru
      _
  $region6: #{quantize_ema_forward.1} parent=0 // loop_footer
    %s15 = sadd.s32 1, %s11
  $region7: #{quantize_ema_forward.1} parent=0 // loop_footer_branch
    %10 = sbr.rel target = $region3
  $region8: #{quantize_ema_forward.1} parent=0 // loop_exit
    _

</llo_original>
